<compile_context>
chip_gen: v7x
topology: tpu7x:2x2x1
jax: 0.10.0
libtpu: 0.0.40
codegen_flags: <defaults>
</compile_context>

<pallas_src>
import numpy as np
import jax
import jax.numpy as jnp
from jax import lax
from jax.experimental import pallas as pl
from jax.experimental.pallas import tpu as pltpu

# ----------------------------- configuration -------------------------------
GRID_SIZE = 8          # settings.grid_size
C = 64                 # d_model
FEAT_DIM = 55          # real feature length
FEAT_PAD = 64          # padded (aligned) feature length
MLP_HIDDEN = 128
NHEAD = 4              # settings.attention_heads
HEAD_DIM = C // NHEAD
FFN_DIM = 2048         # nn.TransformerEncoderLayer default dim_feedforward
NUM_LAYERS = 2         # settings.transformer_layers
LN_EPS = 1e-5
SEQ = 5                # real tokens: current + 4 hypotheticals
SEQ_PAD = 8            # padded to a full 8-sublane tile
NEG_INF = -1e30        # attention key-padding mask value


# ------------------------------ kernel helpers ------------------------------
def _erf(x):
    # Abramowitz & Stegun 7.1.26 rational approximation, |err| <= 1.5e-7
    # (matches PyTorch's exact-erf GELU to f32 precision).
    a1, a2, a3, a4, a5 = 0.254829592, -0.284496736, 1.421413741, -1.453152027, 1.061405429
    p = 0.3275911
    s = jnp.where(x >= 0.0, 1.0, -1.0)
    ax = jnp.abs(x)
    t = 1.0 / (1.0 + p * ax)
    poly = ((((a5 * t + a4) * t + a3) * t + a2) * t + a1) * t
    return s * (1.0 - poly * jnp.exp(-ax * ax))


def _gelu_exact(x):
    return 0.5 * x * (1.0 + _erf(x * 0.7071067811865476))


def _layer_norm(x, w, b):
    mu = jnp.mean(x, axis=-1, keepdims=True)
    var = jnp.mean((x - mu) ** 2, axis=-1, keepdims=True)  # biased, like torch LN
    return (x - mu) * lax.rsqrt(var + LN_EPS) * w + b


def _bf16(x):
    return x.astype(jnp.bfloat16)


# ------------------------------- fused kernel -------------------------------
def fused_encoder_kernel(x_ref, mw1_ref, mb1_ref, mw2_ref, mb2_ref,
                         wqkv_ref, bqkv_ref, wo_ref, bo_ref,
                         ln1w_ref, ln1b_ref, wf1_ref, bf1_ref, wf2_ref, bf2_ref,
                         ln2w_ref, ln2b_ref,
                         o_ref):
    l = pl.program_id(0)

    # ------- grid step 0 only: feat MLP (64pad -> 128 -> GELU -> 64) -------
    @pl.when(l == 0)
    def _():
        x = _bf16(x_ref[...])                                   # (SEQ_PAD, FEAT_PAD)
        h = jnp.dot(x, mw1_ref[...],
                    preferred_element_type=jnp.float32) + mb1_ref[...]
        h = _gelu_exact(h)
        o_ref[...] = (jnp.dot(_bf16(h), mw2_ref[...],
                              preferred_element_type=jnp.float32)
                      + mb2_ref[...])                            # (SEQ_PAD, C) f32

    x = o_ref[...]                                               # (SEQ_PAD, C) f32

    # ------- multi-head self-attention (all heads in one contraction) -------
    qkv = (jnp.dot(_bf16(x), wqkv_ref[...],
                   preferred_element_type=jnp.float32)
           + bqkv_ref[...])                                      # (SEQ_PAD, 3C) f32
    q = qkv[:, 0:C].reshape(SEQ_PAD, NHEAD, HEAD_DIM)
    k = qkv[:, C:2 * C].reshape(SEQ_PAD, NHEAD, HEAD_DIM)
    v = qkv[:, 2 * C:3 * C].reshape(SEQ_PAD, NHEAD, HEAD_DIM)

    # 1/sqrt(HEAD_DIM) is folded into W_q / b_q at init time (no scale here).
    s = jnp.einsum('qhd,khd->hqk', _bf16(q), _bf16(k),
                   preferred_element_type=jnp.float32)           # (H, SEQ_PAD, SEQ_PAD)
    # mask padded key positions (tokens 5..7 are padding; they are non-zero due
    # to biases, so real queries must not attend to them)
    kidx = lax.broadcasted_iota(jnp.int32, (NHEAD, SEQ_PAD, SEQ_PAD), 2)
    s = jnp.where(kidx < SEQ, s, NEG_INF)
    s = s - jnp.max(s, axis=-1, keepdims=True)
    p = jnp.exp(s)
    p = p * pl.reciprocal(jnp.sum(p, axis=-1, keepdims=True), approx=True)
    ctx = jnp.einsum('hqk,khd->qhd', _bf16(p), _bf16(v),
                     preferred_element_type=jnp.float32)         # (SEQ_PAD, H, D)
    attn = ctx.reshape(SEQ_PAD, C)
    attn = (jnp.dot(_bf16(attn), wo_ref[...],
                    preferred_element_type=jnp.float32) + bo_ref[...])

    # residual + LayerNorm 1 (post-norm, PyTorch default)
    y = _layer_norm(x + attn, ln1w_ref[...], ln1b_ref[...])

    # ------- feed-forward (ReLU, dim_feedforward=2048) -------
    h1 = (jnp.dot(_bf16(y), wf1_ref[...],
                  preferred_element_type=jnp.float32) + bf1_ref[...])
    h1 = jnp.maximum(h1, 0.0)
    h2 = (jnp.dot(_bf16(h1), wf2_ref[...],
                  preferred_element_type=jnp.float32) + bf2_ref[...])

    # residual + LayerNorm 2; o_ref stays VMEM-resident across grid steps and is
    # written back to HBM once when the grid finishes.
    o_ref[...] = _layer_norm(y + h2, ln2w_ref[...], ln2b_ref[...])


# ------------------------------- wrapper -------------------------------------
def _const_spec(shape):
    # same block every grid step -> stays resident in VMEM, no re-DMA.
    nd = len(shape)
    return pl.BlockSpec(tuple(shape), lambda l, _nd=nd: (0,) * _nd)


def _layer_spec(shape):
    # arrays stacked as (NUM_LAYERS, a, b); kernel sees (a, b) for layer l.
    return pl.BlockSpec((pl.Squeezed(),) + tuple(shape[1:]), lambda l: (l, 0, 0))


@jax.jit
def encoder_device(feats, params):
    (mw1, mb1, mw2, mb2,
     wqkv, bqkv, wo, bo, ln1w, ln1b, wf1, bf1, wf2, bf2, ln2w, ln2b) = params
    args = (feats, mw1, mb1, mw2, mb2,
            wqkv, bqkv, wo, bo, ln1w, ln1b, wf1, bf1, wf2, bf2, ln2w, ln2b)
    in_specs = ([_const_spec(a.shape) for a in args[:5]] +
                [_layer_spec(a.shape) for a in args[5:]])
    out = pl.pallas_call(
        fused_encoder_kernel,
        out_shape=jax.ShapeDtypeStruct((SEQ_PAD, C), jnp.float32),
        grid=(NUM_LAYERS,),
        in_specs=in_specs,
        out_specs=pl.BlockSpec((SEQ_PAD, C), lambda l: (0, 0)),
        compiler_params=pltpu.CompilerParams(
            dimension_semantics=("arbitrary",)),   # layer axis carries a dep
    )(*args)
    return out[:SEQ]                               # drop padded token rows


# --------------------- host-side feature extraction (glue) -------------------
# TODO(synk): data-dependent scalar extraction (.nonzero().item(), python
# if/else) has no clean Pallas equivalent; reproduced faithfully in numpy.
def simulate_hypotheticals(obs):
    H = W = GRID_SIZE
    agent, goal, walls = obs[0], obs[1], obs[2]
    ai, aj = (int(v) for v in np.argwhere(agent == 1)[0])
    hypos = []
    for dy, dx in [(-1, 0), (1, 0), (0, -1), (0, 1)]:
        ni, nj = ai + dy, aj + dx
        new_agent = np.zeros_like(agent)
        if 0 <= ni < H and 0 <= nj < W:
            new_agent[ni, nj] = 1
        else:
            new_agent[ai, aj] = 1
        hypos.append(np.stack([new_agent, goal, walls], axis=0))
    return np.stack(hypos, axis=0)


def extract_features(state):
    agent_map, goal_map, wall_map = state
    H = W = GRID_SIZE
    ai, aj = (int(v) for v in np.argwhere(agent_map == 1)[0])
    gi, gj = (int(v) for v in np.argwhere(goal_map == 1)[0])
    ain, ajn = 2 * ai / (H - 1) - 1, 2 * aj / (W - 1) - 1
    gin, gjn = 2 * gi / (H - 1) - 1, 2 * gj / (W - 1) - 1
    dxg, dyg = gjn - ajn, gin - ain
    eps = 1e-8
    dg = np.sqrt(dxg * dxg + dyg * dyg + eps)
    sing, cosg = dyg / dg, dxg / dg
    goal_feats = [ain, ajn, gin, gjn, dxg, dyg, dg, sing, cosg]

    wall_locs = np.argwhere(wall_map == 1).astype(np.float32)
    agent_wall_feats, goal_wall_feats = [], []
    for i in range(min(3, wall_locs.shape[0])):
        wi, wj = wall_locs[i]
        win, wjn = 2 * wi / (H - 1) - 1, 2 * wj / (W - 1) - 1
        dxaw, dyaw = wjn - ajn, win - ain
        daw = np.sqrt(dxaw * dxaw + dyaw * dyaw + eps)
        agent_wall_feats += [win, wjn, dxaw, dyaw, daw, dyaw / daw, dxaw / daw]
        dxgw, dygw = wjn - gjn, win - gin
        dgw = np.sqrt(dxgw * dxgw + dygw * dygw + eps)
        goal_wall_feats += [win, wjn, dxgw, dygw, dgw, dygw / dgw, dxgw / dgw]
    pad = lambda lst, n: lst + [0.0] * (n - len(lst))
    agent_wall_feats = pad(agent_wall_feats, 21)
    goal_wall_feats = pad(goal_wall_feats, 21)

    walls = wall_map
    neighbors = [
        float(walls[ai - 1, aj]) if ai > 0 else 1.0,
        float(walls[ai + 1, aj]) if ai < H - 1 else 1.0,
        float(walls[ai, aj - 1]) if aj > 0 else 1.0,
        float(walls[ai, aj + 1]) if aj < W - 1 else 1.0,
    ]
    feats = np.array(goal_feats + agent_wall_feats + goal_wall_feats + neighbors,
                     dtype=np.float32)
    assert feats.shape == (FEAT_DIM,)
    return feats


# ------------------------------ parameter init -------------------------------
def _init_linear(key, in_dim, out_dim):
    k1, k2 = jax.random.split(key)
    scale = 1.0 / np.sqrt(in_dim)
    # weights stored pre-transposed as (in, out) so kernels compute x @ W
    w = jax.random.normal(k1, (in_dim, out_dim), jnp.float32) * scale
    b = jax.random.normal(k2, (1, out_dim), jnp.float32) * 0.02
    return w, b


def init_params(key):
    keys = jax.random.split(key, 2 + 4 * NUM_LAYERS)
    mw1, mb1 = _init_linear(keys[0], FEAT_DIM, MLP_HIDDEN)
    # zero-pad the input dim 55 -> 64 (padded feature columns are zero too)
    mw1 = jnp.concatenate(
        [mw1, jnp.zeros((FEAT_PAD - FEAT_DIM, MLP_HIDDEN), jnp.float32)], axis=0)
    mw2, mb2 = _init_linear(keys[1], MLP_HIDDEN, C)

    attn_scale = 1.0 / float(np.sqrt(HEAD_DIM))

    wqkv, bqkv, wo, bo = [], [], [], []
    wf1, bf1, wf2, bf2 = [], [], [], []
    ln1w, ln1b, ln2w, ln2b = [], [], [], []
    for l in range(NUM_LAYERS):
        k0, k1, k2, k3 = keys[2 + 4 * l: 2 + 4 * (l + 1)]
        w, b = _init_linear(k0, C, 3 * C)
        # fold 1/sqrt(HEAD_DIM) into the q projection (columns 0:C of (in,out))
        w = w.at[:, :C].multiply(attn_scale)
        b = b.at[:, :C].multiply(attn_scale)
        wqkv.append(w); bqkv.append(b)
        w, b = _init_linear(k1, C, C);       wo.append(w);  bo.append(b)
        w, b = _init_linear(k2, C, FFN_DIM); wf1.append(w); bf1.append(b)
        w, b = _init_linear(k3, FFN_DIM, C); wf2.append(w); bf2.append(b)
        ln1w.append(jnp.ones((1, C), jnp.float32))
        ln1b.append(jnp.zeros((1, C), jnp.float32))
        ln2w.append(jnp.ones((1, C), jnp.float32))
        ln2b.append(jnp.zeros((1, C), jnp.float32))

    stack = lambda xs: jnp.stack(xs, axis=0)
    bf16 = lambda x: x.astype(jnp.bfloat16)   # weights bf16 in HBM, f32 accum

    params = (bf16(mw1), mb1, bf16(mw2), mb2,
              bf16(stack(wqkv)), stack(bqkv),
              bf16(stack(wo)), stack(bo),
              stack(ln1w), stack(ln1b),
              bf16(stack(wf1)), stack(bf1),
              bf16(stack(wf2)), stack(bf2),
              stack(ln2w), stack(ln2b))
    return params


# ------------------------------ full forward ---------------------------------
def encoder_forward(obs_np, params):
    # host glue (numpy, data-dependent scalars)
    feats = [extract_features(obs_np)]
    for hypo in simulate_hypotheticals(obs_np):
        feats.append(extract_features(hypo))
    x = np.zeros((SEQ_PAD, FEAT_PAD), np.float32)     # pad rows 5..7, cols 55..63
    x[:SEQ, :FEAT_DIM] = np.stack(feats, axis=0)
    tokens = encoder_device(jnp.asarray(x), params)   # one fused pallas_call
    return tokens[None]                               # (1, SEQ, C)


# ---------------------------------- main --------------------------------------
if __name__ == "__main__":
    key = jax.random.PRNGKey(0)
    k_pos, k_wall, k_param = jax.random.split(key, 3)

    # deterministic synthetic observation (3, H, W): agent, goal, walls
    cells = jax.random.choice(k_pos, GRID_SIZE * GRID_SIZE, shape=(2,), replace=False)
    ai, aj = divmod(int(cells[0]), GRID_SIZE)
    gi, gj = divmod(int(cells[1]), GRID_SIZE)
    wall_mask = np.array(jax.random.uniform(k_wall, (GRID_SIZE, GRID_SIZE)) < 0.12,
                         dtype=np.float32)
    wall_mask[ai, aj] = 0.0
    wall_mask[gi, gj] = 0.0
    agent = np.zeros((GRID_SIZE, GRID_SIZE), np.float32)
    goal = np.zeros((GRID_SIZE, GRID_SIZE), np.float32)
    agent[ai, aj] = 1.0
    goal[gi, gj] = 1.0
    obs_np = np.stack([agent, goal, wall_mask], axis=0)       # (3, 8, 8)

    params = init_params(k_param)

    out = encoder_forward(obs_np, params)
    out = jax.block_until_ready(out)
    assert out.shape == (1, SEQ, C) and out.dtype == jnp.float32
    assert bool(jnp.all(jnp.isfinite(out)))
    print("KERNEL_OK")
</pallas_src>

<mosaic_0001>
module attributes {stable_mosaic.version = 11 : i64} {
  func.func @fused_encoder_kernel(%arg0: i32, %arg1: memref<8x64xf32, #tpu.memory_space<vmem>>, %arg2: memref<64x128xbf16, #tpu.memory_space<vmem>>, %arg3: memref<1x128xf32, #tpu.memory_space<vmem>>, %arg4: memref<128x64xbf16, #tpu.memory_space<vmem>>, %arg5: memref<1x64xf32, #tpu.memory_space<vmem>>, %arg6: memref<1x64x192xbf16, #tpu.memory_space<vmem>>, %arg7: memref<1x1x192xf32, #tpu.memory_space<vmem>>, %arg8: memref<1x64x64xbf16, #tpu.memory_space<vmem>>, %arg9: memref<1x1x64xf32, #tpu.memory_space<vmem>>, %arg10: memref<1x1x64xf32, #tpu.memory_space<vmem>>, %arg11: memref<1x1x64xf32, #tpu.memory_space<vmem>>, %arg12: memref<1x64x2048xbf16, #tpu.memory_space<vmem>>, %arg13: memref<1x1x2048xf32, #tpu.memory_space<vmem>>, %arg14: memref<1x2048x64xbf16, #tpu.memory_space<vmem>>, %arg15: memref<1x1x64xf32, #tpu.memory_space<vmem>>, %arg16: memref<1x1x64xf32, #tpu.memory_space<vmem>>, %arg17: memref<1x1x64xf32, #tpu.memory_space<vmem>>, %arg18: memref<8x64xf32, #tpu.memory_space<vmem>>) attributes {dimension_semantics = [#tpu.dimension_semantics<arbitrary>], iteration_bounds = array<i64: 2>, scalar_prefetch = 0 : i64, scratch_operands = 0 : i64, tpu.core_type = #tpu.core_type<tc>, window_params = [{pipeline_mode = #tpu.pipeline_mode<synchronous>, transform_indices = @transform_0, window_bounds = array<i64: 8, 64>}, {pipeline_mode = #tpu.pipeline_mode<synchronous>, transform_indices = @transform_1, window_bounds = array<i64: 64, 128>}, {pipeline_mode = #tpu.pipeline_mode<synchronous>, transform_indices = @transform_2, window_bounds = array<i64: 1, 128>}, {pipeline_mode = #tpu.pipeline_mode<synchronous>, transform_indices = @transform_3, window_bounds = array<i64: 128, 64>}, {pipeline_mode = #tpu.pipeline_mode<synchronous>, transform_indices = @transform_4, window_bounds = array<i64: 1, 64>}, {transform_indices = @transform_5, window_bounds = array<i64: 1, 64, 192>}, {transform_indices = @transform_6, window_bounds = array<i64: 1, 1, 192>}, {transform_indices = @transform_7, window_bounds = array<i64: 1, 64, 64>}, {transform_indices = @transform_8, window_bounds = array<i64: 1, 1, 64>}, {transform_indices = @transform_9, window_bounds = array<i64: 1, 1, 64>}, {transform_indices = @transform_10, window_bounds = array<i64: 1, 1, 64>}, {transform_indices = @transform_11, window_bounds = array<i64: 1, 64, 2048>}, {transform_indices = @transform_12, window_bounds = array<i64: 1, 1, 2048>}, {transform_indices = @transform_13, window_bounds = array<i64: 1, 2048, 64>}, {transform_indices = @transform_14, window_bounds = array<i64: 1, 1, 64>}, {transform_indices = @transform_15, window_bounds = array<i64: 1, 1, 64>}, {transform_indices = @transform_16, window_bounds = array<i64: 1, 1, 64>}, {pipeline_mode = #tpu.pipeline_mode<synchronous>, transform_indices = @transform_17, window_bounds = array<i64: 8, 64>}]} {
    %c0_i32 = arith.constant 0 : i32
    %0 = arith.cmpi eq, %arg0, %c0_i32 : i32
    %1 = arith.extui %0 : i1 to i32
    %c0_i32_0 = arith.constant 0 : i32
    %2 = arith.cmpi ne, %1, %c0_i32_0 : i32
    scf.if %2 {
      %c0_59 = arith.constant 0 : index
      %c0_60 = arith.constant 0 : index
      %122 = vector.load %arg1[%c0_59, %c0_60] : memref<8x64xf32, #tpu.memory_space<vmem>>, vector<8x64xf32>
      %123 = arith.truncf %122 : vector<8x64xf32> to vector<8x64xbf16>
      %c0_61 = arith.constant 0 : index
      %c0_62 = arith.constant 0 : index
      %124 = vector.load %arg2[%c0_61, %c0_62] : memref<64x128xbf16, #tpu.memory_space<vmem>>, vector<64x128xbf16>
      %cst_63 = arith.constant dense<0.000000e+00> : vector<8x128xf32>
      %125 = tpu.matmul %123, %124, %cst_63 {dimension_numbers = #tpu.dot_dimension_numbers<[1], [0], [0], [1], [0, 0, 1, 1], [], []>} : vector<8x64xbf16>, vector<64x128xbf16>, vector<8x128xf32> -> vector<8x128xf32>
      %c0_64 = arith.constant 0 : index
      %c0_65 = arith.constant 0 : index
      %126 = vector.load %arg3[%c0_64, %c0_65] : memref<1x128xf32, #tpu.memory_space<vmem>>, vector<1x128xf32>
      %127 = vector.broadcast %126 : vector<1x128xf32> to vector<8x128xf32>
      %128 = arith.addf %125, %127 : vector<8x128xf32>
      %cst_66 = arith.constant 5.000000e-01 : f32
      %129 = vector.broadcast %cst_66 : f32 to vector<8x128xf32>
      %130 = arith.mulf %129, %128 : vector<8x128xf32>
      %cst_67 = arith.constant 0.707106769 : f32
      %131 = vector.broadcast %cst_67 : f32 to vector<8x128xf32>
      %132 = arith.mulf %128, %131 : vector<8x128xf32>
      %cst_68 = arith.constant 0.000000e+00 : f32
      %133 = vector.broadcast %cst_68 : f32 to vector<8x128xf32>
      %134 = arith.cmpf oge, %132, %133 : vector<8x128xf32>
      %cst_69 = arith.constant 1.000000e+00 : f32
      %cst_70 = arith.constant -1.000000e+00 : f32
      %135 = vector.broadcast %cst_69 : f32 to vector<8x128xf32>
      %136 = vector.broadcast %cst_70 : f32 to vector<8x128xf32>
      %137 = arith.select %134, %135, %136 : vector<8x128xi1>, vector<8x128xf32>
      %138 = math.absf %132 : vector<8x128xf32>
      %cst_71 = arith.constant 0.327591091 : f32
      %139 = vector.broadcast %cst_71 : f32 to vector<8x128xf32>
      %140 = arith.mulf %139, %138 : vector<8x128xf32>
      %cst_72 = arith.constant 1.000000e+00 : f32
      %141 = vector.broadcast %cst_72 : f32 to vector<8x128xf32>
      %142 = arith.addf %141, %140 : vector<8x128xf32>
      %cst_73 = arith.constant 1.000000e+00 : f32
      %143 = vector.broadcast %cst_73 : f32 to vector<8x128xf32>
      %144 = arith.divf %143, %142 : vector<8x128xf32>
      %cst_74 = arith.constant 1.06140542 : f32
      %145 = vector.broadcast %cst_74 : f32 to vector<8x128xf32>
      %146 = arith.mulf %145, %144 : vector<8x128xf32>
      %cst_75 = arith.constant -1.45315206 : f32
      %147 = vector.broadcast %cst_75 : f32 to vector<8x128xf32>
      %148 = arith.addf %146, %147 : vector<8x128xf32>
      %149 = arith.mulf %148, %144 : vector<8x128xf32>
      %cst_76 = arith.constant 1.42141378 : f32
      %150 = vector.broadcast %cst_76 : f32 to vector<8x128xf32>
      %151 = arith.addf %149, %150 : vector<8x128xf32>
      %152 = arith.mulf %151, %144 : vector<8x128xf32>
      %cst_77 = arith.constant -0.284496725 : f32
      %153 = vector.broadcast %cst_77 : f32 to vector<8x128xf32>
      %154 = arith.addf %152, %153 : vector<8x128xf32>
      %155 = arith.mulf %154, %144 : vector<8x128xf32>
      %cst_78 = arith.constant 0.254829586 : f32
      %156 = vector.broadcast %cst_78 : f32 to vector<8x128xf32>
      %157 = arith.addf %155, %156 : vector<8x128xf32>
      %158 = arith.mulf %157, %144 : vector<8x128xf32>
      %cst_79 = arith.constant 0.000000e+00 : f32
      %159 = vector.broadcast %cst_79 : f32 to vector<8x128xf32>
      %160 = arith.subf %159, %138 : vector<8x128xf32>
      %161 = arith.mulf %160, %138 : vector<8x128xf32>
      %162 = math.exp %161 : vector<8x128xf32>
      %163 = arith.mulf %158, %162 : vector<8x128xf32>
      %cst_80 = arith.constant 1.000000e+00 : f32
      %164 = vector.broadcast %cst_80 : f32 to vector<8x128xf32>
      %165 = arith.subf %164, %163 : vector<8x128xf32>
      %166 = arith.mulf %137, %165 : vector<8x128xf32>
      %cst_81 = arith.constant 1.000000e+00 : f32
      %167 = vector.broadcast %cst_81 : f32 to vector<8x128xf32>
      %168 = arith.addf %167, %166 : vector<8x128xf32>
      %169 = arith.mulf %130, %168 : vector<8x128xf32>
      %170 = arith.truncf %169 : vector<8x128xf32> to vector<8x128xbf16>
      %c0_82 = arith.constant 0 : index
      %c0_83 = arith.constant 0 : index
      %171 = vector.load %arg4[%c0_82, %c0_83] : memref<128x64xbf16, #tpu.memory_space<vmem>>, vector<128x64xbf16>
      %cst_84 = arith.constant dense<0.000000e+00> : vector<8x64xf32>
      %172 = tpu.matmul %170, %171, %cst_84 {dimension_numbers = #tpu.dot_dimension_numbers<[1], [0], [0], [1], [0, 0, 1, 1], [], []>} : vector<8x128xbf16>, vector<128x64xbf16>, vector<8x64xf32> -> vector<8x64xf32>
      %c0_85 = arith.constant 0 : index
      %c0_86 = arith.constant 0 : index
      %173 = vector.load %arg5[%c0_85, %c0_86] : memref<1x64xf32, #tpu.memory_space<vmem>>, vector<1x64xf32>
      %174 = vector.broadcast %173 : vector<1x64xf32> to vector<8x64xf32>
      %175 = arith.addf %172, %174 : vector<8x64xf32>
      %c0_87 = arith.constant 0 : index
      %c0_88 = arith.constant 0 : index
      %176 = vector.load %arg18[%c0_87, %c0_88] : memref<8x64xf32, #tpu.memory_space<vmem>>, vector<8x64xf32>
      tpu.vector_store %arg18[%c0_87, %c0_88], %175 {strides = array<i32>} : memref<8x64xf32, #tpu.memory_space<vmem>>, vector<8x64xf32>,
    } else {
    }
    %c0 = arith.constant 0 : index
    %c0_1 = arith.constant 0 : index
    %3 = vector.load %arg18[%c0, %c0_1] : memref<8x64xf32, #tpu.memory_space<vmem>>, vector<8x64xf32>
    %4 = arith.truncf %3 : vector<8x64xf32> to vector<8x64xbf16>
    %c0_2 = arith.constant 0 : index
    %c0_3 = arith.constant 0 : index
    %c0_4 = arith.constant 0 : index
    %5 = vector.load %arg6[%c0_2, %c0_3, %c0_4] : memref<1x64x192xbf16, #tpu.memory_space<vmem>>, vector<1x64x192xbf16>
    %6 = vector.shape_cast %5 : vector<1x64x192xbf16> to vector<64x192xbf16>
    %cst = arith.constant dense<0.000000e+00> : vector<8x192xf32>
    %7 = tpu.matmul %4, %6, %cst {dimension_numbers = #tpu.dot_dimension_numbers<[1], [0], [0], [1], [0, 0, 1, 1], [], []>} : vector<8x64xbf16>, vector<64x192xbf16>, vector<8x192xf32> -> vector<8x192xf32>
    %c0_5 = arith.constant 0 : index
    %c0_6 = arith.constant 0 : index
    %c0_7 = arith.constant 0 : index
    %8 = vector.load %arg7[%c0_5, %c0_6, %c0_7] : memref<1x1x192xf32, #tpu.memory_space<vmem>>, vector<1x1x192xf32>
    %9 = vector.shape_cast %8 : vector<1x1x192xf32> to vector<1x192xf32>
    %10 = vector.broadcast %9 : vector<1x192xf32> to vector<8x192xf32>
    %11 = arith.addf %7, %10 : vector<8x192xf32>
    %12 = vector.extract_strided_slice %11 {offsets = [0, 0], sizes = [8, 64], strides = [1, 1]} : vector<8x192xf32> to vector<8x64xf32>
    %13 = vector.shape_cast %12 : vector<8x64xf32> to vector<8x4x16xf32>
    %14 = vector.extract_strided_slice %11 {offsets = [0, 64], sizes = [8, 64], strides = [1, 1]} : vector<8x192xf32> to vector<8x64xf32>
    %15 = vector.shape_cast %14 : vector<8x64xf32> to vector<8x4x16xf32>
    %16 = vector.extract_strided_slice %11 {offsets = [0, 128], sizes = [8, 64], strides = [1, 1]} : vector<8x192xf32> to vector<8x64xf32>
    %17 = vector.shape_cast %16 : vector<8x64xf32> to vector<8x4x16xf32>
    %18 = arith.truncf %13 : vector<8x4x16xf32> to vector<8x4x16xbf16>
    %19 = arith.truncf %15 : vector<8x4x16xf32> to vector<8x4x16xbf16>
    "tpu.trace_start"() <{level = 10 : i32, message = "qhd,khd->hqk"}> : () -> ()
    %cst_8 = arith.constant dense<0.000000e+00> : vector<4x8x8xf32>
    %20 = tpu.matmul %18, %19, %cst_8 {dimension_numbers = #tpu.dot_dimension_numbers<[2], [2], [0], [0], [0, 1, 0, 0, 1, 0], [1], [1]>} : vector<8x4x16xbf16>, vector<8x4x16xbf16>, vector<4x8x8xf32> -> vector<4x8x8xf32>
    "tpu.trace_stop"() : () -> ()
    %21 = tpu.iota {dimensions = array<i32: 2>} : vector<4x8x8xi32>
    %c5_i32 = arith.constant 5 : i32
    %22 = vector.broadcast %c5_i32 : i32 to vector<4x8x8xi32>
    %23 = arith.cmpi slt, %21, %22 : vector<4x8x8xi32>
    %cst_9 = arith.constant -1.000000e+30 : f32
    %24 = vector.broadcast %cst_9 : f32 to vector<4x8x8xf32>
    %25 = arith.select %23, %20, %24 : vector<4x8x8xi1>, vector<4x8x8xf32>
    %cst_10 = arith.constant dense<0xFF800000> : vector<4x8xf32>
    %26 = vector.multi_reduction <maximumf>, %25, %cst_10 [2] : vector<4x8x8xf32> to vector<4x8xf32>
    %27 = vector.shape_cast %26 : vector<4x8xf32> to vector<4x8x1xf32>
    %28 = vector.broadcast %27 : vector<4x8x1xf32> to vector<4x8x8xf32>
    %29 = arith.subf %25, %28 : vector<4x8x8xf32>
    %30 = math.exp %29 : vector<4x8x8xf32>
    %cst_11 = arith.constant dense<0.000000e+00> : vector<4x8xf32>
    %31 = vector.multi_reduction <add>, %30, %cst_11 [2] : vector<4x8x8xf32> to vector<4x8xf32>
    %32 = vector.shape_cast %31 : vector<4x8xf32> to vector<4x8x1xf32>
    %33 = tpu.reciprocal %32 {approx = true} : vector<4x8x1xf32> -> vector<4x8x1xf32>
    %34 = vector.broadcast %33 : vector<4x8x1xf32> to vector<4x8x8xf32>
    %35 = arith.mulf %30, %34 : vector<4x8x8xf32>
    %36 = arith.truncf %35 : vector<4x8x8xf32> to vector<4x8x8xbf16>
    %37 = arith.truncf %17 : vector<8x4x16xf32> to vector<8x4x16xbf16>
    "tpu.trace_start"() <{level = 10 : i32, message = "hqk,khd->qhd"}> : () -> ()
    %cst_12 = arith.constant dense<0.000000e+00> : vector<4x16x8xf32>
    %38 = tpu.matmul %37, %36, %cst_12 {dimension_numbers = #tpu.dot_dimension_numbers<[0], [2], [2], [1], [0, 1, 0, 2, 1, 1], [1], [0]>} : vector<8x4x16xbf16>, vector<4x8x8xbf16>, vector<4x16x8xf32> -> vector<4x16x8xf32>
    %39 = tpu.transpose %38, [2, 0, 1] : vector<4x16x8xf32> -> vector<8x4x16xf32>
    "tpu.trace_stop"() : () -> ()
    %40 = vector.shape_cast %39 : vector<8x4x16xf32> to vector<8x64xf32>
    %41 = arith.truncf %40 : vector<8x64xf32> to vector<8x64xbf16>
    %c0_13 = arith.constant 0 : index
    %c0_14 = arith.constant 0 : index
    %c0_15 = arith.constant 0 : index
    %42 = vector.load %arg8[%c0_13, %c0_14, %c0_15] : memref<1x64x64xbf16, #tpu.memory_space<vmem>>, vector<1x64x64xbf16>
    %43 = vector.shape_cast %42 : vector<1x64x64xbf16> to vector<64x64xbf16>
    %cst_16 = arith.constant dense<0.000000e+00> : vector<8x64xf32>
    %44 = tpu.matmul %41, %43, %cst_16 {dimension_numbers = #tpu.dot_dimension_numbers<[1], [0], [0], [1], [0, 0, 1, 1], [], []>} : vector<8x64xbf16>, vector<64x64xbf16>, vector<8x64xf32> -> vector<8x64xf32>
    %c0_17 = arith.constant 0 : index
    %c0_18 = arith.constant 0 : index
    %c0_19 = arith.constant 0 : index
    %45 = vector.load %arg9[%c0_17, %c0_18, %c0_19] : memref<1x1x64xf32, #tpu.memory_space<vmem>>, vector<1x1x64xf32>
    %46 = vector.shape_cast %45 : vector<1x1x64xf32> to vector<1x64xf32>
    %47 = vector.broadcast %46 : vector<1x64xf32> to vector<8x64xf32>
    %48 = arith.addf %44, %47 : vector<8x64xf32>
    %49 = arith.addf %3, %48 : vector<8x64xf32>
    %c0_20 = arith.constant 0 : index
    %c0_21 = arith.constant 0 : index
    %c0_22 = arith.constant 0 : index
    %50 = vector.load %arg10[%c0_20, %c0_21, %c0_22] : memref<1x1x64xf32, #tpu.memory_space<vmem>>, vector<1x1x64xf32>
    %51 = vector.shape_cast %50 : vector<1x1x64xf32> to vector<1x64xf32>
    %c0_23 = arith.constant 0 : index
    %c0_24 = arith.constant 0 : index
    %c0_25 = arith.constant 0 : index
    %52 = vector.load %arg11[%c0_23, %c0_24, %c0_25] : memref<1x1x64xf32, #tpu.memory_space<vmem>>, vector<1x1x64xf32>
    %53 = vector.shape_cast %52 : vector<1x1x64xf32> to vector<1x64xf32>
    %cst_26 = arith.constant dense<0.000000e+00> : vector<8xf32>
    %54 = vector.multi_reduction <add>, %49, %cst_26 [1] : vector<8x64xf32> to vector<8xf32>
    %55 = vector.shape_cast %54 : vector<8xf32> to vector<8x1xf32>
    %cst_27 = arith.constant 6.400000e+01 : f32
    %56 = vector.broadcast %cst_27 : f32 to vector<8x1xf32>
    %57 = arith.divf %55, %56 : vector<8x1xf32>
    %58 = vector.broadcast %57 : vector<8x1xf32> to vector<8x64xf32>
    %59 = arith.subf %49, %58 : vector<8x64xf32>
    %60 = arith.mulf %59, %59 : vector<8x64xf32>
    %cst_28 = arith.constant dense<0.000000e+00> : vector<8xf32>
    %61 = vector.multi_reduction <add>, %60, %cst_28 [1] : vector<8x64xf32> to vector<8xf32>
    %62 = vector.shape_cast %61 : vector<8xf32> to vector<8x1xf32>
    %cst_29 = arith.constant 6.400000e+01 : f32
    %63 = vector.broadcast %cst_29 : f32 to vector<8x1xf32>
    %64 = arith.divf %62, %63 : vector<8x1xf32>
    %65 = vector.broadcast %57 : vector<8x1xf32> to vector<8x64xf32>
    %66 = arith.subf %49, %65 : vector<8x64xf32>
    %cst_30 = arith.constant 9.99999974E-6 : f32
    %67 = vector.broadcast %cst_30 : f32 to vector<8x1xf32>
    %68 = arith.addf %64, %67 : vector<8x1xf32>
    %69 = math.rsqrt %68 : vector<8x1xf32>
    %70 = vector.broadcast %69 : vector<8x1xf32> to vector<8x64xf32>
    %71 = arith.mulf %66, %70 : vector<8x64xf32>
    %72 = vector.broadcast %51 : vector<1x64xf32> to vector<8x64xf32>
    %73 = arith.mulf %71, %72 : vector<8x64xf32>
    %74 = vector.broadcast %53 : vector<1x64xf32> to vector<8x64xf32>
    %75 = arith.addf %73, %74 : vector<8x64xf32>
    %76 = arith.truncf %75 : vector<8x64xf32> to vector<8x64xbf16>
    %c0_31 = arith.constant 0 : index
    %c0_32 = arith.constant 0 : index
    %c0_33 = arith.constant 0 : index
    %77 = vector.load %arg12[%c0_31, %c0_32, %c0_33] : memref<1x64x2048xbf16, #tpu.memory_space<vmem>>, vector<1x64x2048xbf16>
    %78 = vector.shape_cast %77 : vector<1x64x2048xbf16> to vector<64x2048xbf16>
    %cst_34 = arith.constant dense<0.000000e+00> : vector<8x2048xf32>
    %79 = tpu.matmul %76, %78, %cst_34 {dimension_numbers = #tpu.dot_dimension_numbers<[1], [0], [0], [1], [0, 0, 1, 1], [], []>} : vector<8x64xbf16>, vector<64x2048xbf16>, vector<8x2048xf32> -> vector<8x2048xf32>
    %c0_35 = arith.constant 0 : index
    %c0_36 = arith.constant 0 : index
    %c0_37 = arith.constant 0 : index
    %80 = vector.load %arg13[%c0_35, %c0_36, %c0_37] : memref<1x1x2048xf32, #tpu.memory_space<vmem>>, vector<1x1x2048xf32>
    %81 = vector.shape_cast %80 : vector<1x1x2048xf32> to vector<1x2048xf32>
    %82 = vector.broadcast %81 : vector<1x2048xf32> to vector<8x2048xf32>
    %83 = arith.addf %79, %82 : vector<8x2048xf32>
    %cst_38 = arith.constant 0.000000e+00 : f32
    %84 = vector.broadcast %cst_38 : f32 to vector<8x2048xf32>
    %85 = arith.maximumf %83, %84 : vector<8x2048xf32>
    %86 = arith.truncf %85 : vector<8x2048xf32> to vector<8x2048xbf16>
    %c0_39 = arith.constant 0 : index
    %c0_40 = arith.constant 0 : index
    %c0_41 = arith.constant 0 : index
    %87 = vector.load %arg14[%c0_39, %c0_40, %c0_41] : memref<1x2048x64xbf16, #tpu.memory_space<vmem>>, vector<1x2048x64xbf16>
    %88 = vector.shape_cast %87 : vector<1x2048x64xbf16> to vector<2048x64xbf16>
    %cst_42 = arith.constant dense<0.000000e+00> : vector<8x64xf32>
    %89 = tpu.matmul %86, %88, %cst_42 {dimension_numbers = #tpu.dot_dimension_numbers<[1], [0], [0], [1], [0, 0, 1, 1], [], []>} : vector<8x2048xbf16>, vector<2048x64xbf16>, vector<8x64xf32> -> vector<8x64xf32>
    %c0_43 = arith.constant 0 : index
    %c0_44 = arith.constant 0 : index
    %c0_45 = arith.constant 0 : index
    %90 = vector.load %arg15[%c0_43, %c0_44, %c0_45] : memref<1x1x64xf32, #tpu.memory_space<vmem>>, vector<1x1x64xf32>
    %91 = vector.shape_cast %90 : vector<1x1x64xf32> to vector<1x64xf32>
    %92 = vector.broadcast %91 : vector<1x64xf32> to vector<8x64xf32>
    %93 = arith.addf %89, %92 : vector<8x64xf32>
    %94 = arith.addf %75, %93 : vector<8x64xf32>
    %c0_46 = arith.constant 0 : index
    %c0_47 = arith.constant 0 : index
    %c0_48 = arith.constant 0 : index
    %95 = vector.load %arg16[%c0_46, %c0_47, %c0_48] : memref<1x1x64xf32, #tpu.memory_space<vmem>>, vector<1x1x64xf32>
    %96 = vector.shape_cast %95 : vector<1x1x64xf32> to vector<1x64xf32>
    %c0_49 = arith.constant 0 : index
    %c0_50 = arith.constant 0 : index
    %c0_51 = arith.constant 0 : index
    %97 = vector.load %arg17[%c0_49, %c0_50, %c0_51] : memref<1x1x64xf32, #tpu.memory_space<vmem>>, vector<1x1x64xf32>
    %98 = vector.shape_cast %97 : vector<1x1x64xf32> to vector<1x64xf32>
    %cst_52 = arith.constant dense<0.000000e+00> : vector<8xf32>
    %99 = vector.multi_reduction <add>, %94, %cst_52 [1] : vector<8x64xf32> to vector<8xf32>
    %100 = vector.shape_cast %99 : vector<8xf32> to vector<8x1xf32>
    %cst_53 = arith.constant 6.400000e+01 : f32
    %101 = vector.broadcast %cst_53 : f32 to vector<8x1xf32>
    %102 = arith.divf %100, %101 : vector<8x1xf32>
    %103 = vector.broadcast %102 : vector<8x1xf32> to vector<8x64xf32>
    %104 = arith.subf %94, %103 : vector<8x64xf32>
    %105 = arith.mulf %104, %104 : vector<8x64xf32>
    %cst_54 = arith.constant dense<0.000000e+00> : vector<8xf32>
    %106 = vector.multi_reduction <add>, %105, %cst_54 [1] : vector<8x64xf32> to vector<8xf32>
    %107 = vector.shape_cast %106 : vector<8xf32> to vector<8x1xf32>
    %cst_55 = arith.constant 6.400000e+01 : f32
    %108 = vector.broadcast %cst_55 : f32 to vector<8x1xf32>
    %109 = arith.divf %107, %108 : vector<8x1xf32>
    %110 = vector.broadcast %102 : vector<8x1xf32> to vector<8x64xf32>
    %111 = arith.subf %94, %110 : vector<8x64xf32>
    %cst_56 = arith.constant 9.99999974E-6 : f32
    %112 = vector.broadcast %cst_56 : f32 to vector<8x1xf32>
    %113 = arith.addf %109, %112 : vector<8x1xf32>
    %114 = math.rsqrt %113 : vector<8x1xf32>
    %115 = vector.broadcast %114 : vector<8x1xf32> to vector<8x64xf32>
    %116 = arith.mulf %111, %115 : vector<8x64xf32>
    %117 = vector.broadcast %96 : vector<1x64xf32> to vector<8x64xf32>
    %118 = arith.mulf %116, %117 : vector<8x64xf32>
    %119 = vector.broadcast %98 : vector<1x64xf32> to vector<8x64xf32>
    %120 = arith.addf %118, %119 : vector<8x64xf32>
    %c0_57 = arith.constant 0 : index
    %c0_58 = arith.constant 0 : index
    %121 = vector.load %arg18[%c0_57, %c0_58] : memref<8x64xf32, #tpu.memory_space<vmem>>, vector<8x64xf32>
    tpu.vector_store %arg18[%c0_57, %c0_58], %120 {strides = array<i32>} : memref<8x64xf32, #tpu.memory_space<vmem>>, vector<8x64xf32>,
    return
  }
  func.func @transform_0(%arg0: i32) -> (i32, i32) {
    %c0_i32 = arith.constant 0 : i32
    %c0_i32_0 = arith.constant 0 : i32
    %c0_i32_1 = arith.constant 0 : i32
    return %c0_i32, %c0_i32_0 : i32, i32
  }
  func.func @transform_1(%arg0: i32) -> (i32, i32) {
    %c0_i32 = arith.constant 0 : i32
    %c0_i32_0 = arith.constant 0 : i32
    %c0_i32_1 = arith.constant 0 : i32
    return %c0_i32, %c0_i32_0 : i32, i32
  }
  func.func @transform_2(%arg0: i32) -> (i32, i32) {
    %c0_i32 = arith.constant 0 : i32
    %c0_i32_0 = arith.constant 0 : i32
    %c0_i32_1 = arith.constant 0 : i32
    return %c0_i32, %c0_i32_0 : i32, i32
  }
  func.func @transform_3(%arg0: i32) -> (i32, i32) {
    %c0_i32 = arith.constant 0 : i32
    %c0_i32_0 = arith.constant 0 : i32
    %c0_i32_1 = arith.constant 0 : i32
    return %c0_i32, %c0_i32_0 : i32, i32
  }
  func.func @transform_4(%arg0: i32) -> (i32, i32) {
    %c0_i32 = arith.constant 0 : i32
    %c0_i32_0 = arith.constant 0 : i32
    %c0_i32_1 = arith.constant 0 : i32
    return %c0_i32, %c0_i32_0 : i32, i32
  }
  func.func @transform_5(%arg0: i32) -> (i32, i32, i32) {
    %c0_i32 = arith.constant 0 : i32
    %c0_i32_0 = arith.constant 0 : i32
    %c0_i32_1 = arith.constant 0 : i32
    return %arg0, %c0_i32, %c0_i32_0 : i32, i32, i32
  }
  func.func @transform_6(%arg0: i32) -> (i32, i32, i32) {
    %c0_i32 = arith.constant 0 : i32
    %c0_i32_0 = arith.constant 0 : i32
    %c0_i32_1 = arith.constant 0 : i32
    return %arg0, %c0_i32, %c0_i32_0 : i32, i32, i32
  }
  func.func @transform_7(%arg0: i32) -> (i32, i32, i32) {
    %c0_i32 = arith.constant 0 : i32
    %c0_i32_0 = arith.constant 0 : i32
    %c0_i32_1 = arith.constant 0 : i32
    return %arg0, %c0_i32, %c0_i32_0 : i32, i32, i32
  }
  func.func @transform_8(%arg0: i32) -> (i32, i32, i32) {
    %c0_i32 = arith.constant 0 : i32
    %c0_i32_0 = arith.constant 0 : i32
    %c0_i32_1 = arith.constant 0 : i32
    return %arg0, %c0_i32, %c0_i32_0 : i32, i32, i32
  }
  func.func @transform_9(%arg0: i32) -> (i32, i32, i32) {
    %c0_i32 = arith.constant 0 : i32
    %c0_i32_0 = arith.constant 0 : i32
    %c0_i32_1 = arith.constant 0 : i32
    return %arg0, %c0_i32, %c0_i32_0 : i32, i32, i32
  }
  func.func @transform_10(%arg0: i32) -> (i32, i32, i32) {
    %c0_i32 = arith.constant 0 : i32
    %c0_i32_0 = arith.constant 0 : i32
    %c0_i32_1 = arith.constant 0 : i32
    return %arg0, %c0_i32, %c0_i32_0 : i32, i32, i32
  }
  func.func @transform_11(%arg0: i32) -> (i32, i32, i32) {
    %c0_i32 = arith.constant 0 : i32
    %c0_i32_0 = arith.constant 0 : i32
    %c0_i32_1 = arith.constant 0 : i32
    return %arg0, %c0_i32, %c0_i32_0 : i32, i32, i32
  }
  func.func @transform_12(%arg0: i32) -> (i32, i32, i32) {
    %c0_i32 = arith.constant 0 : i32
    %c0_i32_0 = arith.constant 0 : i32
    %c0_i32_1 = arith.constant 0 : i32
    return %arg0, %c0_i32, %c0_i32_0 : i32, i32, i32
  }
  func.func @transform_13(%arg0: i32) -> (i32, i32, i32) {
    %c0_i32 = arith.constant 0 : i32
    %c0_i32_0 = arith.constant 0 : i32
    %c0_i32_1 = arith.constant 0 : i32
    return %arg0, %c0_i32, %c0_i32_0 : i32, i32, i32
  }
  func.func @transform_14(%arg0: i32) -> (i32, i32, i32) {
    %c0_i32 = arith.constant 0 : i32
    %c0_i32_0 = arith.constant 0 : i32
    %c0_i32_1 = arith.constant 0 : i32
    return %arg0, %c0_i32, %c0_i32_0 : i32, i32, i32
  }
  func.func @transform_15(%arg0: i32) -> (i32, i32, i32) {
    %c0_i32 = arith.constant 0 : i32
    %c0_i32_0 = arith.constant 0 : i32
    %c0_i32_1 = arith.constant 0 : i32
    return %arg0, %c0_i32, %c0_i32_0 : i32, i32, i32
  }
  func.func @transform_16(%arg0: i32) -> (i32, i32, i32) {
    %c0_i32 = arith.constant 0 : i32
    %c0_i32_0 = arith.constant 0 : i32
    %c0_i32_1 = arith.constant 0 : i32
    return %arg0, %c0_i32, %c0_i32_0 : i32, i32, i32
  }
  func.func @transform_17(%arg0: i32) -> (i32, i32) {
    %c0_i32 = arith.constant 0 : i32
    %c0_i32_0 = arith.constant 0 : i32
    %c0_i32_1 = arith.constant 0 : i32
    return %c0_i32, %c0_i32_0 : i32, i32
  }
}

</mosaic_0001>

<llo_original>
// kernel: encoder_device.1
$region0: #{encoder_device.1}
  #allocation0 [shape = 'u32[]', space=smem, size = 0x4, offset = 0x4, fixed_abs, tag = 'smem constant byte address 0x4 - core index']
  #allocation1 [shape = 'u32[144,128]{1,0:T(1,128)}', space=vmem, size = 0x12000, scoped, tag = 'internal scratch']
  %s0 = inlined_call_operand.vmem [shape: f32[8,64], index: 0, kind: input, shape index: {}]
  %s1 = inlined_call_operand.vmem [shape: bf16[64,128], index: 1, kind: input, shape index: {}]
  %s2 = inlined_call_operand.vmem [shape: f32[1,128], index: 2, kind: input, shape index: {}]
  %s3 = inlined_call_operand.vmem [shape: bf16[128,64], index: 3, kind: input, shape index: {}]
  %s4 = inlined_call_operand.vmem [shape: f32[1,64], index: 4, kind: input, shape index: {}]
  %s5 = inlined_call_operand.vmem [shape: bf16[2,64,192], index: 5, kind: input, shape index: {}]
  %s6 = inlined_call_operand.vmem [shape: f32[2,1,192], index: 6, kind: input, shape index: {}]
  %s7 = inlined_call_operand.vmem [shape: bf16[2,64,64], index: 7, kind: input, shape index: {}]
  %s8 = inlined_call_operand.vmem [shape: f32[2,1,64], index: 8, kind: input, shape index: {}]
  %s9 = inlined_call_operand.vmem [shape: f32[2,1,64], index: 9, kind: input, shape index: {}]
  %s10 = inlined_call_operand.vmem [shape: f32[2,1,64], index: 10, kind: input, shape index: {}]
  %s11 = inlined_call_operand.vmem [shape: bf16[2,64,2048], index: 11, kind: input, shape index: {}]
  %s12 = inlined_call_operand.vmem [shape: f32[2,1,2048], index: 12, kind: input, shape index: {}]
  %s13 = inlined_call_operand.vmem [shape: bf16[2,2048,64], index: 13, kind: input, shape index: {}]
  %s14 = inlined_call_operand.vmem [shape: f32[2,1,64], index: 14, kind: input, shape index: {}]
  %s15 = inlined_call_operand.vmem [shape: f32[2,1,64], index: 15, kind: input, shape index: {}]
  %s16 = inlined_call_operand.vmem [shape: f32[2,1,64], index: 16, kind: input, shape index: {}]
  %s17 = inlined_call_operand.hbm [shape: f32[8,64], index: 17, kind: output, shape index: {}]
  %s18 = sld [smem:[#allocation0]]
  $region105: #{encoder_device.1} parent=0
    _
  %s20 = ssub.s32 1, %s18
  %s21 = scalar_select 0, %s20, %s18
  $region1: #{encoder_device.1} parent=0
    #allocation2 [shape = 'u8[4096]{0}', space=vmem, size = 0x1000, scoped, tag = 'output window, operand 0, single buffered']
    #allocation3 [shape = 's32[2]{0}', space=sflag, size = 0x8, scoped, tag = 'scoped memory for encoder_device.1']
    %22 = vsyncpa [#allocation3], 0
    loop: start=0, step=1, limit=4
    $region2: #{encoder_device.1} parent=1 // loop_pre_header
      _
    $region3: #{encoder_device.1} parent=1 // loop_header
      %s24 = sphi 0, %s28
      %p25 = scmp.ge.s32.totalorder %s24, 4
      %s32 = sphi 0, %s32
      %s34 = sphi 0, %s32
      %s35 = sphi 0, %s34
      %s49 = sphi 0, %s35
      %s53 = sphi 0, %s53
      %s55 = sphi 0, %s53
      %s56 = sphi 0, %s55
      %s70 = sphi 0, %s56
      %s74 = sphi 0, %s74
      %s76 = sphi 0, %s74
      %s77 = sphi 0, %s76
      %s91 = sphi 0, %s77
      %s95 = sphi 0, %s95
      %s97 = sphi 0, %s95
      %s98 = sphi 0, %s97
      %s112 = sphi 0, %s98
      %s116 = sphi 0, %s116
      %s118 = sphi 0, %s116
      %s119 = sphi 0, %s118
      %s133 = sphi 0, %s119
      %s139 = sphi 0, %s141
      %s142 = sphi 0, %s139
      %s143 = sphi 0, %s142
      %s159 = sphi 0, %s143
      %s165 = sphi 0, %s167
      %s168 = sphi 0, %s165
      %s169 = sphi 0, %s168
      %s185 = sphi 0, %s169
      %s191 = sphi 0, %s193
      %s194 = sphi 0, %s191
      %s195 = sphi 0, %s194
      %s211 = sphi 0, %s195
      %s217 = sphi 0, %s219
      %s220 = sphi 0, %s217
      %s221 = sphi 0, %s220
      %s237 = sphi 0, %s221
      %s243 = sphi 0, %s245
      %s246 = sphi 0, %s243
      %s247 = sphi 0, %s246
      %s263 = sphi 0, %s247
      %s269 = sphi 0, %s271
      %s272 = sphi 0, %s269
      %s273 = sphi 0, %s272
      %s289 = sphi 0, %s273
      %s295 = sphi 0, %s297
      %s298 = sphi 0, %s295
      %s299 = sphi 0, %s298
      %s315 = sphi 0, %s299
      %s321 = sphi 0, %s323
      %s324 = sphi 0, %s321
      %s325 = sphi 0, %s324
      %s341 = sphi 0, %s325
      %s347 = sphi 0, %s349
      %s350 = sphi 0, %s347
      %s351 = sphi 0, %s350
      %s367 = sphi 0, %s351
      %s373 = sphi 0, %s375
      %s376 = sphi 0, %s373
      %s377 = sphi 0, %s376
      %s393 = sphi 0, %s377
      %s399 = sphi 0, %s401
      %s402 = sphi 0, %s399
      %s403 = sphi 0, %s402
      %s419 = sphi 0, %s403
      %s425 = sphi 0, %s427
      %s428 = sphi 0, %s425
      %s429 = sphi 0, %s428
      %s445 = sphi 0, %s429
      %s449 = sphi 0, %s449
      %s451 = sphi 0, %s449
      %s452 = sphi 0, %s451
      %s466 = sphi 0, %s452
    $region4: #{encoder_device.1} parent=1 // loop_header_branch
      %27 = sbr.rel (%p25) target = $region8
    $region5: #{encoder_device.1} parent=1 // loop_body
      %s29 = ssub.s32 %s24, 1
      %s30 = ssub.s32 %s24, 2
      %s31 = sadd.s32 %s24, 1
      %s33 = sadd.s32 %s32, 1
      %p36 = scmp.eq.s32.totalorder %s24, 1
      %p37 = scmp.ne.s32.totalorder %s32, %s34
      %p38 = scmp.eq.s32.totalorder %s24, 0
      %p39 = por %p37, %p38
      %p40 = scmp.ne.s32.totalorder %s32, %s34
      %p41 = scmp.eq.s32.totalorder %s29, 1
      %p42 = por %p40, %p41
      %p43 = scmp.ne.s32.totalorder %s34, %s35
      %p44 = scmp.eq.s32.totalorder %s29, 0
      %p45 = por %p43, %p44
      %p46 = scmp.ne.s32.totalorder %s34, %s35
      %p47 = scmp.eq.s32.totalorder %s30, 1
      %p48 = por %p46, %p47
      %p50 = scmp.ne.s32.totalorder %s35, %s49
      %p51 = scmp.eq.s32.totalorder %s30, 0
      %p52 = por %p50, %p51
      %s54 = sadd.s32 %s53, 1
      %p57 = scmp.eq.s32.totalorder %s24, 1
      %p58 = scmp.ne.s32.totalorder %s53, %s55
      %p59 = scmp.eq.s32.totalorder %s24, 0
      %p60 = por %p58, %p59
      %p61 = scmp.ne.s32.totalorder %s53, %s55
      %p62 = scmp.eq.s32.totalorder %s29, 1
      %p63 = por %p61, %p62
      %p64 = scmp.ne.s32.totalorder %s55, %s56
      %p65 = scmp.eq.s32.totalorder %s29, 0
      %p66 = por %p64, %p65
      %p67 = scmp.ne.s32.totalorder %s55, %s56
      %p68 = scmp.eq.s32.totalorder %s30, 1
      %p69 = por %p67, %p68
      %p71 = scmp.ne.s32.totalorder %s56, %s70
      %p72 = scmp.eq.s32.totalorder %s30, 0
      %p73 = por %p71, %p72
      %s75 = sadd.s32 %s74, 1
      %p78 = scmp.eq.s32.totalorder %s24, 1
      %p79 = scmp.ne.s32.totalorder %s74, %s76
      %p80 = scmp.eq.s32.totalorder %s24, 0
      %p81 = por %p79, %p80
      %p82 = scmp.ne.s32.totalorder %s74, %s76
      %p83 = scmp.eq.s32.totalorder %s29, 1
      %p84 = por %p82, %p83
      %p85 = scmp.ne.s32.totalorder %s76, %s77
      %p86 = scmp.eq.s32.totalorder %s29, 0
      %p87 = por %p85, %p86
      %p88 = scmp.ne.s32.totalorder %s76, %s77
      %p89 = scmp.eq.s32.totalorder %s30, 1
      %p90 = por %p88, %p89
      %p92 = scmp.ne.s32.totalorder %s77, %s91
      %p93 = scmp.eq.s32.totalorder %s30, 0
      %p94 = por %p92, %p93
      %s96 = sadd.s32 %s95, 1
      %p99 = scmp.eq.s32.totalorder %s24, 1
      %p100 = scmp.ne.s32.totalorder %s95, %s97
      %p101 = scmp.eq.s32.totalorder %s24, 0
      %p102 = por %p100, %p101
      %p103 = scmp.ne.s32.totalorder %s95, %s97
      %p104 = scmp.eq.s32.totalorder %s29, 1
      %p105 = por %p103, %p104
      %p106 = scmp.ne.s32.totalorder %s97, %s98
      %p107 = scmp.eq.s32.totalorder %s29, 0
      %p108 = por %p106, %p107
      %p109 = scmp.ne.s32.totalorder %s97, %s98
      %p110 = scmp.eq.s32.totalorder %s30, 1
      %p111 = por %p109, %p110
      %p113 = scmp.ne.s32.totalorder %s98, %s112
      %p114 = scmp.eq.s32.totalorder %s30, 0
      %p115 = por %p113, %p114
      %s117 = sadd.s32 %s116, 1
      %p120 = scmp.eq.s32.totalorder %s24, 1
      %p121 = scmp.ne.s32.totalorder %s116, %s118
      %p122 = scmp.eq.s32.totalorder %s24, 0
      %p123 = por %p121, %p122
      %p124 = scmp.ne.s32.totalorder %s116, %s118
      %p125 = scmp.eq.s32.totalorder %s29, 1
      %p126 = por %p124, %p125
      %p127 = scmp.ne.s32.totalorder %s118, %s119
      %p128 = scmp.eq.s32.totalorder %s29, 0
      %p129 = por %p127, %p128
      %p130 = scmp.ne.s32.totalorder %s118, %s119
      %p131 = scmp.eq.s32.totalorder %s30, 1
      %p132 = por %p130, %p131
      %p134 = scmp.ne.s32.totalorder %s119, %s133
      %p135 = scmp.eq.s32.totalorder %s30, 0
      %p136 = por %p134, %p135
      %s137 = ssub.s32 %s24, %s31
      %p138 = scmp.eq.s32.totalorder %s137, 0
      %s140 = sadd.s32 %s139, 1
      %s141 = scalar_select %p138, %s139, %s140
      %p144 = pneg %p138
      %p145 = scmp.eq.s32.totalorder %s24, 1
      %p146 = por %p144, %p145
      %p147 = scmp.ne.s32.totalorder %s139, %s142
      %p148 = scmp.eq.s32.totalorder %s24, 0
      %p149 = por %p147, %p148
      %p150 = scmp.ne.s32.totalorder %s139, %s142
      %p151 = scmp.eq.s32.totalorder %s29, 1
      %p152 = por %p150, %p151
      %p153 = scmp.ne.s32.totalorder %s142, %s143
      %p154 = scmp.eq.s32.totalorder %s29, 0
      %p155 = por %p153, %p154
      %p156 = scmp.ne.s32.totalorder %s142, %s143
      %p157 = scmp.eq.s32.totalorder %s30, 1
      %p158 = por %p156, %p157
      %p160 = scmp.ne.s32.totalorder %s143, %s159
      %p161 = scmp.eq.s32.totalorder %s30, 0
      %p162 = por %p160, %p161
      %s163 = ssub.s32 %s24, %s31
      %p164 = scmp.eq.s32.totalorder %s163, 0
      %s166 = sadd.s32 %s165, 1
      %s167 = scalar_select %p164, %s165, %s166
      %p170 = pneg %p164
      %p171 = scmp.eq.s32.totalorder %s24, 1
      %p172 = por %p170, %p171
      %p173 = scmp.ne.s32.totalorder %s165, %s168
      %p174 = scmp.eq.s32.totalorder %s24, 0
      %p175 = por %p173, %p174
      %p176 = scmp.ne.s32.totalorder %s165, %s168
      %p177 = scmp.eq.s32.totalorder %s29, 1
      %p178 = por %p176, %p177
      %p179 = scmp.ne.s32.totalorder %s168, %s169
      %p180 = scmp.eq.s32.totalorder %s29, 0
      %p181 = por %p179, %p180
      %p182 = scmp.ne.s32.totalorder %s168, %s169
      %p183 = scmp.eq.s32.totalorder %s30, 1
      %p184 = por %p182, %p183
      %p186 = scmp.ne.s32.totalorder %s169, %s185
      %p187 = scmp.eq.s32.totalorder %s30, 0
      %p188 = por %p186, %p187
      %s189 = ssub.s32 %s24, %s31
      %p190 = scmp.eq.s32.totalorder %s189, 0
      %s192 = sadd.s32 %s191, 1
      %s193 = scalar_select %p190, %s191, %s192
      %p196 = pneg %p190
      %p197 = scmp.eq.s32.totalorder %s24, 1
      %p198 = por %p196, %p197
      %p199 = scmp.ne.s32.totalorder %s191, %s194
      %p200 = scmp.eq.s32.totalorder %s24, 0
      %p201 = por %p199, %p200
      %p202 = scmp.ne.s32.totalorder %s191, %s194
      %p203 = scmp.eq.s32.totalorder %s29, 1
      %p204 = por %p202, %p203
      %p205 = scmp.ne.s32.totalorder %s194, %s195
      %p206 = scmp.eq.s32.totalorder %s29, 0
      %p207 = por %p205, %p206
      %p208 = scmp.ne.s32.totalorder %s194, %s195
      %p209 = scmp.eq.s32.totalorder %s30, 1
      %p210 = por %p208, %p209
      %p212 = scmp.ne.s32.totalorder %s195, %s211
      %p213 = scmp.eq.s32.totalorder %s30, 0
      %p214 = por %p212, %p213
      %s215 = ssub.s32 %s24, %s31
      %p216 = scmp.eq.s32.totalorder %s215, 0
      %s218 = sadd.s32 %s217, 1
      %s219 = scalar_select %p216, %s217, %s218
      %p222 = pneg %p216
      %p223 = scmp.eq.s32.totalorder %s24, 1
      %p224 = por %p222, %p223
      %p225 = scmp.ne.s32.totalorder %s217, %s220
      %p226 = scmp.eq.s32.totalorder %s24, 0
      %p227 = por %p225, %p226
      %p228 = scmp.ne.s32.totalorder %s217, %s220
      %p229 = scmp.eq.s32.totalorder %s29, 1
      %p230 = por %p228, %p229
      %p231 = scmp.ne.s32.totalorder %s220, %s221
      %p232 = scmp.eq.s32.totalorder %s29, 0
      %p233 = por %p231, %p232
      %p234 = scmp.ne.s32.totalorder %s220, %s221
      %p235 = scmp.eq.s32.totalorder %s30, 1
      %p236 = por %p234, %p235
      %p238 = scmp.ne.s32.totalorder %s221, %s237
      %p239 = scmp.eq.s32.totalorder %s30, 0
      %p240 = por %p238, %p239
      %s241 = ssub.s32 %s24, %s31
      %p242 = scmp.eq.s32.totalorder %s241, 0
      %s244 = sadd.s32 %s243, 1
      %s245 = scalar_select %p242, %s243, %s244
      %p248 = pneg %p242
      %p249 = scmp.eq.s32.totalorder %s24, 1
      %p250 = por %p248, %p249
      %p251 = scmp.ne.s32.totalorder %s243, %s246
      %p252 = scmp.eq.s32.totalorder %s24, 0
      %p253 = por %p251, %p252
      %p254 = scmp.ne.s32.totalorder %s243, %s246
      %p255 = scmp.eq.s32.totalorder %s29, 1
      %p256 = por %p254, %p255
      %p257 = scmp.ne.s32.totalorder %s246, %s247
      %p258 = scmp.eq.s32.totalorder %s29, 0
      %p259 = por %p257, %p258
      %p260 = scmp.ne.s32.totalorder %s246, %s247
      %p261 = scmp.eq.s32.totalorder %s30, 1
      %p262 = por %p260, %p261
      %p264 = scmp.ne.s32.totalorder %s247, %s263
      %p265 = scmp.eq.s32.totalorder %s30, 0
      %p266 = por %p264, %p265
      %s267 = ssub.s32 %s24, %s31
      %p268 = scmp.eq.s32.totalorder %s267, 0
      %s270 = sadd.s32 %s269, 1
      %s271 = scalar_select %p268, %s269, %s270
      %p274 = pneg %p268
      %p275 = scmp.eq.s32.totalorder %s24, 1
      %p276 = por %p274, %p275
      %p277 = scmp.ne.s32.totalorder %s269, %s272
      %p278 = scmp.eq.s32.totalorder %s24, 0
      %p279 = por %p277, %p278
      %p280 = scmp.ne.s32.totalorder %s269, %s272
      %p281 = scmp.eq.s32.totalorder %s29, 1
      %p282 = por %p280, %p281
      %p283 = scmp.ne.s32.totalorder %s272, %s273
      %p284 = scmp.eq.s32.totalorder %s29, 0
      %p285 = por %p283, %p284
      %p286 = scmp.ne.s32.totalorder %s272, %s273
      %p287 = scmp.eq.s32.totalorder %s30, 1
      %p288 = por %p286, %p287
      %p290 = scmp.ne.s32.totalorder %s273, %s289
      %p291 = scmp.eq.s32.totalorder %s30, 0
      %p292 = por %p290, %p291
      %s293 = ssub.s32 %s24, %s31
      %p294 = scmp.eq.s32.totalorder %s293, 0
      %s296 = sadd.s32 %s295, 1
      %s297 = scalar_select %p294, %s295, %s296
      %p300 = pneg %p294
      %p301 = scmp.eq.s32.totalorder %s24, 1
      %p302 = por %p300, %p301
      %p303 = scmp.ne.s32.totalorder %s295, %s298
      %p304 = scmp.eq.s32.totalorder %s24, 0
      %p305 = por %p303, %p304
      %p306 = scmp.ne.s32.totalorder %s295, %s298
      %p307 = scmp.eq.s32.totalorder %s29, 1
      %p308 = por %p306, %p307
      %p309 = scmp.ne.s32.totalorder %s298, %s299
      %p310 = scmp.eq.s32.totalorder %s29, 0
      %p311 = por %p309, %p310
      %p312 = scmp.ne.s32.totalorder %s298, %s299
      %p313 = scmp.eq.s32.totalorder %s30, 1
      %p314 = por %p312, %p313
      %p316 = scmp.ne.s32.totalorder %s299, %s315
      %p317 = scmp.eq.s32.totalorder %s30, 0
      %p318 = por %p316, %p317
      %s319 = ssub.s32 %s24, %s31
      %p320 = scmp.eq.s32.totalorder %s319, 0
      %s322 = sadd.s32 %s321, 1
      %s323 = scalar_select %p320, %s321, %s322
      %p326 = pneg %p320
      %p327 = scmp.eq.s32.totalorder %s24, 1
      %p328 = por %p326, %p327
      %p329 = scmp.ne.s32.totalorder %s321, %s324
      %p330 = scmp.eq.s32.totalorder %s24, 0
      %p331 = por %p329, %p330
      %p332 = scmp.ne.s32.totalorder %s321, %s324
      %p333 = scmp.eq.s32.totalorder %s29, 1
      %p334 = por %p332, %p333
      %p335 = scmp.ne.s32.totalorder %s324, %s325
      %p336 = scmp.eq.s32.totalorder %s29, 0
      %p337 = por %p335, %p336
      %p338 = scmp.ne.s32.totalorder %s324, %s325
      %p339 = scmp.eq.s32.totalorder %s30, 1
      %p340 = por %p338, %p339
      %p342 = scmp.ne.s32.totalorder %s325, %s341
      %p343 = scmp.eq.s32.totalorder %s30, 0
      %p344 = por %p342, %p343
      %s345 = ssub.s32 %s24, %s31
      %p346 = scmp.eq.s32.totalorder %s345, 0
      %s348 = sadd.s32 %s347, 1
      %s349 = scalar_select %p346, %s347, %s348
      %p352 = pneg %p346
      %p353 = scmp.eq.s32.totalorder %s24, 1
      %p354 = por %p352, %p353
      %p355 = scmp.ne.s32.totalorder %s347, %s350
      %p356 = scmp.eq.s32.totalorder %s24, 0
      %p357 = por %p355, %p356
      %p358 = scmp.ne.s32.totalorder %s347, %s350
      %p359 = scmp.eq.s32.totalorder %s29, 1
      %p360 = por %p358, %p359
      %p361 = scmp.ne.s32.totalorder %s350, %s351
      %p362 = scmp.eq.s32.totalorder %s29, 0
      %p363 = por %p361, %p362
      %p364 = scmp.ne.s32.totalorder %s350, %s351
      %p365 = scmp.eq.s32.totalorder %s30, 1
      %p366 = por %p364, %p365
      %p368 = scmp.ne.s32.totalorder %s351, %s367
      %p369 = scmp.eq.s32.totalorder %s30, 0
      %p370 = por %p368, %p369
      %s371 = ssub.s32 %s24, %s31
      %p372 = scmp.eq.s32.totalorder %s371, 0
      %s374 = sadd.s32 %s373, 1
      %s375 = scalar_select %p372, %s373, %s374
      %p378 = pneg %p372
      %p379 = scmp.eq.s32.totalorder %s24, 1
      %p380 = por %p378, %p379
      %p381 = scmp.ne.s32.totalorder %s373, %s376
      %p382 = scmp.eq.s32.totalorder %s24, 0
      %p383 = por %p381, %p382
      %p384 = scmp.ne.s32.totalorder %s373, %s376
      %p385 = scmp.eq.s32.totalorder %s29, 1
      %p386 = por %p384, %p385
      %p387 = scmp.ne.s32.totalorder %s376, %s377
      %p388 = scmp.eq.s32.totalorder %s29, 0
      %p389 = por %p387, %p388
      %p390 = scmp.ne.s32.totalorder %s376, %s377
      %p391 = scmp.eq.s32.totalorder %s30, 1
      %p392 = por %p390, %p391
      %p394 = scmp.ne.s32.totalorder %s377, %s393
      %p395 = scmp.eq.s32.totalorder %s30, 0
      %p396 = por %p394, %p395
      %s397 = ssub.s32 %s24, %s31
      %p398 = scmp.eq.s32.totalorder %s397, 0
      %s400 = sadd.s32 %s399, 1
      %s401 = scalar_select %p398, %s399, %s400
      %p404 = pneg %p398
      %p405 = scmp.eq.s32.totalorder %s24, 1
      %p406 = por %p404, %p405
      %p407 = scmp.ne.s32.totalorder %s399, %s402
      %p408 = scmp.eq.s32.totalorder %s24, 0
      %p409 = por %p407, %p408
      %p410 = scmp.ne.s32.totalorder %s399, %s402
      %p411 = scmp.eq.s32.totalorder %s29, 1
      %p412 = por %p410, %p411
      %p413 = scmp.ne.s32.totalorder %s402, %s403
      %p414 = scmp.eq.s32.totalorder %s29, 0
      %p415 = por %p413, %p414
      %p416 = scmp.ne.s32.totalorder %s402, %s403
      %p417 = scmp.eq.s32.totalorder %s30, 1
      %p418 = por %p416, %p417
      %p420 = scmp.ne.s32.totalorder %s403, %s419
      %p421 = scmp.eq.s32.totalorder %s30, 0
      %p422 = por %p420, %p421
      %s423 = ssub.s32 %s24, %s31
      %p424 = scmp.eq.s32.totalorder %s423, 0
      %s426 = sadd.s32 %s425, 1
      %s427 = scalar_select %p424, %s425, %s426
      %p430 = pneg %p424
      %p431 = scmp.eq.s32.totalorder %s24, 1
      %p432 = por %p430, %p431
      %p433 = scmp.ne.s32.totalorder %s425, %s428
      %p434 = scmp.eq.s32.totalorder %s24, 0
      %p435 = por %p433, %p434
      %p436 = scmp.ne.s32.totalorder %s425, %s428
      %p437 = scmp.eq.s32.totalorder %s29, 1
      %p438 = por %p436, %p437
      %p439 = scmp.ne.s32.totalorder %s428, %s429
      %p440 = scmp.eq.s32.totalorder %s29, 0
      %p441 = por %p439, %p440
      %p442 = scmp.ne.s32.totalorder %s428, %s429
      %p443 = scmp.eq.s32.totalorder %s30, 1
      %p444 = por %p442, %p443
      %p446 = scmp.ne.s32.totalorder %s429, %s445
      %p447 = scmp.eq.s32.totalorder %s30, 0
      %p448 = por %p446, %p447
      %s450 = sadd.s32 %s449, 1
      %p453 = scmp.eq.s32.totalorder %s24, 1
      %p454 = scmp.ne.s32.totalorder %s449, %s451
      %p455 = scmp.eq.s32.totalorder %s24, 0
      %p456 = por %p454, %p455
      %p457 = scmp.ne.s32.totalorder %s449, %s451
      %p458 = scmp.eq.s32.totalorder %s29, 1
      %p459 = por %p457, %p458
      %p460 = scmp.ne.s32.totalorder %s451, %s452
      %p461 = scmp.eq.s32.totalorder %s29, 0
      %p462 = por %p460, %p461
      %p463 = scmp.ne.s32.totalorder %s451, %s452
      %p464 = scmp.eq.s32.totalorder %s30, 1
      %p465 = por %p463, %p464
      %p467 = scmp.ne.s32.totalorder %s452, %s466
      %p468 = scmp.eq.s32.totalorder %s30, 0
      %p469 = por %p467, %p468
      %p470 = scmp.le.s32.totalorder 1, %s24
      %p471 = scmp.lt.s32.totalorder %s24, 3
      %p472 = pnand %p470, %p471
      %p473 = pneg %p472
      // Predicated region
      $region9: #{encoder_device.1} parent=5 // pred_check
        _
      $region10: #{encoder_device.1} parent=5 // pred_check_branch
        %475 = sbr.rel (%p472) target = $region12
      $region11: #{encoder_device.1} parent=5 // pred_region
        %s476 = ssub.s32 %s24, 1
        // Predicated region
        $region13: #{encoder_device.1} parent=11 // pred_check
          %p477 = pneg %p45
        $region14: #{encoder_device.1} parent=11 // pred_check_branch
          %479 = sbr.rel (%p477) target = $region16
        $region15: #{encoder_device.1} parent=11 // pred_region
          _
        $region16: #{encoder_device.1} parent=11 // pred_fallthru
          _
        // Predicated region
        $region17: #{encoder_device.1} parent=11 // pred_check
          %p480 = pneg %p66
        $region18: #{encoder_device.1} parent=11 // pred_check_branch
          %482 = sbr.rel (%p480) target = $region20
        $region19: #{encoder_device.1} parent=11 // pred_region
          _
        $region20: #{encoder_device.1} parent=11 // pred_fallthru
          _
        // Predicated region
        $region21: #{encoder_device.1} parent=11 // pred_check
          %p483 = pneg %p87
        $region22: #{encoder_device.1} parent=11 // pred_check_branch
          %485 = sbr.rel (%p483) target = $region24
        $region23: #{encoder_device.1} parent=11 // pred_region
          _
        $region24: #{encoder_device.1} parent=11 // pred_fallthru
          _
        // Predicated region
        $region25: #{encoder_device.1} parent=11 // pred_check
          %p486 = pneg %p108
        $region26: #{encoder_device.1} parent=11 // pred_check_branch
          %488 = sbr.rel (%p486) target = $region28
        $region27: #{encoder_device.1} parent=11 // pred_region
          _
        $region28: #{encoder_device.1} parent=11 // pred_fallthru
          _
        // Predicated region
        $region29: #{encoder_device.1} parent=11 // pred_check
          %p489 = pneg %p129
        $region30: #{encoder_device.1} parent=11 // pred_check_branch
          %491 = sbr.rel (%p489) target = $region32
        $region31: #{encoder_device.1} parent=11 // pred_region
          _
        $region32: #{encoder_device.1} parent=11 // pred_fallthru
          _
      $region12: #{encoder_device.1} parent=5 // pred_fallthru
        _
      %p492 = scmp.lt.s32.totalorder %s24, 2
      // Predicated region
      $region33: #{encoder_device.1} parent=5 // pred_check
        %p493 = pneg %p492
      $region34: #{encoder_device.1} parent=5 // pred_check_branch
        %495 = sbr.rel (%p493) target = $region36
      $region35: #{encoder_device.1} parent=5 // pred_region
        // Predicated region
        $region37: #{encoder_device.1} parent=35 // pred_check
          %p496 = pneg %p149
        $region38: #{encoder_device.1} parent=35 // pred_check_branch
          %498 = sbr.rel (%p496) target = $region40
        $region39: #{encoder_device.1} parent=35 // pred_region
          %p499 = scmp.lt.s32.totalorder %s24, 1
          %s500 = scalar_select %p499, %s24, 1
          %s501 = smul.addr %s500, 16
          %s502 = smul.addr %s501, 4
          %s503 = scalar_lea.vmem %s5, %s502
        $region40: #{encoder_device.1} parent=35 // pred_fallthru
          _
        // Predicated region
        $region41: #{encoder_device.1} parent=35 // pred_check
          %p504 = pneg %p175
        $region42: #{encoder_device.1} parent=35 // pred_check_branch
          %506 = sbr.rel (%p504) target = $region44
        $region43: #{encoder_device.1} parent=35 // pred_region
          %p507 = scmp.lt.s32.totalorder %s24, 1
          %s508 = scalar_select %p507, %s24, 1
          %s509 = smul.addr %s508, 2
          %s510 = scalar_lea.vmem %s6, %s509
        $region44: #{encoder_device.1} parent=35 // pred_fallthru
          _
        // Predicated region
        $region45: #{encoder_device.1} parent=35 // pred_check
          %p511 = pneg %p201
        $region46: #{encoder_device.1} parent=35 // pred_check_branch
          %513 = sbr.rel (%p511) target = $region48
        $region47: #{encoder_device.1} parent=35 // pred_region
          %p514 = scmp.lt.s32.totalorder %s24, 1
          %s515 = scalar_select %p514, %s24, 1
          %s516 = smul.addr %s515, 8
          %s517 = smul.addr %s516, 4
          %s518 = scalar_lea.vmem %s7, %s517
        $region48: #{encoder_device.1} parent=35 // pred_fallthru
          _
        // Predicated region
        $region49: #{encoder_device.1} parent=35 // pred_check
          %p519 = pneg %p227
        $region50: #{encoder_device.1} parent=35 // pred_check_branch
          %521 = sbr.rel (%p519) target = $region52
        $region51: #{encoder_device.1} parent=35 // pred_region
          %p522 = scmp.lt.s32.totalorder %s24, 1
          %s523 = scalar_select %p522, %s24, 1
          %s524 = scalar_lea.vmem %s8, %s523
        $region52: #{encoder_device.1} parent=35 // pred_fallthru
          _
        // Predicated region
        $region53: #{encoder_device.1} parent=35 // pred_check
          %p525 = pneg %p253
        $region54: #{encoder_device.1} parent=35 // pred_check_branch
          %527 = sbr.rel (%p525) target = $region56
        $region55: #{encoder_device.1} parent=35 // pred_region
          %p528 = scmp.lt.s32.totalorder %s24, 1
          %s529 = scalar_select %p528, %s24, 1
          %s530 = scalar_lea.vmem %s9, %s529
        $region56: #{encoder_device.1} parent=35 // pred_fallthru
          _
        // Predicated region
        $region57: #{encoder_device.1} parent=35 // pred_check
          %p531 = pneg %p279
        $region58: #{encoder_device.1} parent=35 // pred_check_branch
          %533 = sbr.rel (%p531) target = $region60
        $region59: #{encoder_device.1} parent=35 // pred_region
          %p534 = scmp.lt.s32.totalorder %s24, 1
          %s535 = scalar_select %p534, %s24, 1
          %s536 = scalar_lea.vmem %s10, %s535
        $region60: #{encoder_device.1} parent=35 // pred_fallthru
          _
        // Predicated region
        $region61: #{encoder_device.1} parent=35 // pred_check
          %p537 = pneg %p305
        $region62: #{encoder_device.1} parent=35 // pred_check_branch
          %539 = sbr.rel (%p537) target = $region64
        $region63: #{encoder_device.1} parent=35 // pred_region
          %p540 = scmp.lt.s32.totalorder %s24, 1
          %s541 = scalar_select %p540, %s24, 1
          %s542 = smul.addr %s541, 128
          %s543 = smul.addr %s542, 4
          %s544 = scalar_lea.vmem %s11, %s543
        $region64: #{encoder_device.1} parent=35 // pred_fallthru
          _
        // Predicated region
        $region65: #{encoder_device.1} parent=35 // pred_check
          %p545 = pneg %p331
        $region66: #{encoder_device.1} parent=35 // pred_check_branch
          %547 = sbr.rel (%p545) target = $region68
        $region67: #{encoder_device.1} parent=35 // pred_region
          %p548 = scmp.lt.s32.totalorder %s24, 1
          %s549 = scalar_select %p548, %s24, 1
          %s550 = smul.addr %s549, 16
          %s551 = scalar_lea.vmem %s12, %s550
        $region68: #{encoder_device.1} parent=35 // pred_fallthru
          _
        // Predicated region
        $region69: #{encoder_device.1} parent=35 // pred_check
          %p552 = pneg %p357
        $region70: #{encoder_device.1} parent=35 // pred_check_branch
          %554 = sbr.rel (%p552) target = $region72
        $region71: #{encoder_device.1} parent=35 // pred_region
          %p555 = scmp.lt.s32.totalorder %s24, 1
          %s556 = scalar_select %p555, %s24, 1
          %s557 = smul.addr %s556, 256
          %s558 = smul.addr %s557, 4
          %s559 = scalar_lea.vmem %s13, %s558
        $region72: #{encoder_device.1} parent=35 // pred_fallthru
          _
        // Predicated region
        $region73: #{encoder_device.1} parent=35 // pred_check
          %p560 = pneg %p383
        $region74: #{encoder_device.1} parent=35 // pred_check_branch
          %562 = sbr.rel (%p560) target = $region76
        $region75: #{encoder_device.1} parent=35 // pred_region
          %p563 = scmp.lt.s32.totalorder %s24, 1
          %s564 = scalar_select %p563, %s24, 1
          %s565 = scalar_lea.vmem %s14, %s564
        $region76: #{encoder_device.1} parent=35 // pred_fallthru
          _
        // Predicated region
        $region77: #{encoder_device.1} parent=35 // pred_check
          %p566 = pneg %p409
        $region78: #{encoder_device.1} parent=35 // pred_check_branch
          %568 = sbr.rel (%p566) target = $region80
        $region79: #{encoder_device.1} parent=35 // pred_region
          %p569 = scmp.lt.s32.totalorder %s24, 1
          %s570 = scalar_select %p569, %s24, 1
          %s571 = scalar_lea.vmem %s15, %s570
        $region80: #{encoder_device.1} parent=35 // pred_fallthru
          _
        // Predicated region
        $region81: #{encoder_device.1} parent=35 // pred_check
          %p572 = pneg %p435
        $region82: #{encoder_device.1} parent=35 // pred_check_branch
          %574 = sbr.rel (%p572) target = $region84
        $region83: #{encoder_device.1} parent=35 // pred_region
          %p575 = scmp.lt.s32.totalorder %s24, 1
          %s576 = scalar_select %p575, %s24, 1
          %s577 = scalar_lea.vmem %s16, %s576
        $region84: #{encoder_device.1} parent=35 // pred_fallthru
          _
      $region36: #{encoder_device.1} parent=5 // pred_fallthru
        _
      %p578 = scmp.le.s32.totalorder 1, %s24
      %p579 = scmp.lt.s32.totalorder %s24, 3
      %p580 = pnand %p578, %p579
      %p581 = pneg %p580
      // Predicated region
      $region85: #{encoder_device.1} parent=5 // pred_check
        _
      $region86: #{encoder_device.1} parent=5 // pred_check_branch
        %583 = sbr.rel (%p580) target = $region88
      $region87: #{encoder_device.1} parent=5 // pred_region
        %s584 = ssub.s32 %s24, 1
        %p585 = pneg %p45
        %p586 = pneg %p42
        %p587 = pneg %p66
        %p588 = pneg %p63
        %p589 = pneg %p87
        %p590 = pneg %p84
        %p591 = pneg %p108
        %p592 = pneg %p105
        %p593 = pneg %p129
        %p594 = pneg %p126
        %p595 = scmp.lt.s32.totalorder %s29, 1
        %s596 = scalar_select %p595, %s29, 1
        %s597 = smul.addr %s596, 16
        %s598 = smul.addr %s597, 4
        %s599 = scalar_lea.vmem %s5, %s598
        %p600 = pneg %p155
        %p601 = pneg %p152
        %p602 = scmp.lt.s32.totalorder %s29, 1
        %s603 = scalar_select %p602, %s29, 1
        %s604 = smul.addr %s603, 2
        %s605 = scalar_lea.vmem %s6, %s604
        %p606 = pneg %p181
        %p607 = pneg %p178
        %p608 = scmp.lt.s32.totalorder %s29, 1
        %s609 = scalar_select %p608, %s29, 1
        %s610 = smul.addr %s609, 8
        %s611 = smul.addr %s610, 4
        %s612 = scalar_lea.vmem %s7, %s611
        %p613 = pneg %p207
        %p614 = pneg %p204
        %p615 = scmp.lt.s32.totalorder %s29, 1
        %s616 = scalar_select %p615, %s29, 1
        %s617 = scalar_lea.vmem %s8, %s616
        %p618 = pneg %p233
        %p619 = pneg %p230
        %p620 = scmp.lt.s32.totalorder %s29, 1
        %s621 = scalar_select %p620, %s29, 1
        %s622 = scalar_lea.vmem %s9, %s621
        %p623 = pneg %p259
        %p624 = pneg %p256
        %p625 = scmp.lt.s32.totalorder %s29, 1
        %s626 = scalar_select %p625, %s29, 1
        %s627 = scalar_lea.vmem %s10, %s626
        %p628 = pneg %p285
        %p629 = pneg %p282
        %p630 = scmp.lt.s32.totalorder %s29, 1
        %s631 = scalar_select %p630, %s29, 1
        %s632 = smul.addr %s631, 128
        %s633 = smul.addr %s632, 4
        %s634 = scalar_lea.vmem %s11, %s633
        %p635 = pneg %p311
        %p636 = pneg %p308
        %p637 = scmp.lt.s32.totalorder %s29, 1
        %s638 = scalar_select %p637, %s29, 1
        %s639 = smul.addr %s638, 16
        %s640 = scalar_lea.vmem %s12, %s639
        %p641 = pneg %p337
        %p642 = pneg %p334
        %p643 = scmp.lt.s32.totalorder %s29, 1
        %s644 = scalar_select %p643, %s29, 1
        %s645 = smul.addr %s644, 256
        %s646 = smul.addr %s645, 4
        %s647 = scalar_lea.vmem %s13, %s646
        %p648 = pneg %p363
        %p649 = pneg %p360
        %p650 = scmp.lt.s32.totalorder %s29, 1
        %s651 = scalar_select %p650, %s29, 1
        %s652 = scalar_lea.vmem %s14, %s651
        %p653 = pneg %p389
        %p654 = pneg %p386
        %p655 = scmp.lt.s32.totalorder %s29, 1
        %s656 = scalar_select %p655, %s29, 1
        %s657 = scalar_lea.vmem %s15, %s656
        %p658 = pneg %p415
        %p659 = pneg %p412
        %p660 = scmp.lt.s32.totalorder %s29, 1
        %s661 = scalar_select %p660, %s29, 1
        %s662 = scalar_lea.vmem %s16, %s661
        %p663 = pneg %p441
        %p664 = pneg %p438
        %p665 = pneg %p462
        %p666 = pneg %p459
        %p667 = scmp.lt.s32.totalorder %s29, 1
        %s668 = scalar_select %p667, %s29, 1
        %s669 = smul.addr %s668, 16
        %s670 = smul.addr %s669, 4
        %s671 = scalar_lea.vmem %s5, %s670
        %p672 = scmp.lt.s32.totalorder %s29, 1
        %s673 = scalar_select %p672, %s29, 1
        %s674 = smul.addr %s673, 2
        %s675 = scalar_lea.vmem %s6, %s674
        %p676 = scmp.lt.s32.totalorder %s29, 1
        %s677 = scalar_select %p676, %s29, 1
        %s678 = smul.addr %s677, 8
        %s679 = smul.addr %s678, 4
        %s680 = scalar_lea.vmem %s7, %s679
        %p681 = scmp.lt.s32.totalorder %s29, 1
        %s682 = scalar_select %p681, %s29, 1
        %s683 = scalar_lea.vmem %s8, %s682
        %p684 = scmp.lt.s32.totalorder %s29, 1
        %s685 = scalar_select %p684, %s29, 1
        %s686 = scalar_lea.vmem %s9, %s685
        %p687 = scmp.lt.s32.totalorder %s29, 1
        %s688 = scalar_select %p687, %s29, 1
        %s689 = scalar_lea.vmem %s10, %s688
        %p690 = scmp.lt.s32.totalorder %s29, 1
        %s691 = scalar_select %p690, %s29, 1
        %s692 = smul.addr %s691, 128
        %s693 = smul.addr %s692, 4
        %s694 = scalar_lea.vmem %s11, %s693
        %p695 = scmp.lt.s32.totalorder %s29, 1
        %s696 = scalar_select %p695, %s29, 1
        %s697 = smul.addr %s696, 16
        %s698 = scalar_lea.vmem %s12, %s697
        %p699 = scmp.lt.s32.totalorder %s29, 1
        %s700 = scalar_select %p699, %s29, 1
        %s701 = smul.addr %s700, 256
        %s702 = smul.addr %s701, 4
        %s703 = scalar_lea.vmem %s13, %s702
        %p704 = scmp.lt.s32.totalorder %s29, 1
        %s705 = scalar_select %p704, %s29, 1
        %s706 = scalar_lea.vmem %s14, %s705
        %p707 = scmp.lt.s32.totalorder %s29, 1
        %s708 = scalar_select %p707, %s29, 1
        %s709 = scalar_lea.vmem %s15, %s708
        %p710 = scmp.lt.s32.totalorder %s29, 1
        %s711 = scalar_select %p710, %s29, 1
        %s712 = scalar_lea.vmem %s16, %s711
        %p714 = scmp.eq.s32.totalorder %s29, 0
        // Predicated region
        $region89: #{encoder_device.1} parent=87 // pred_check
          %p715 = pneg %p714
        $region90: #{encoder_device.1} parent=87 // pred_check_branch
          %717 = sbr.rel (%p715) target = $region92
        $region91: #{encoder_device.1} parent=87 // pred_region
          %v718 = vld [vmem:[%s0] sm:$0xff]
          %v719 = vpack.c.bf16 %v718, %v718
          %v720 = vld [vmem:[%s1] sm:$0xf]
          %v721 = vld [vmem:[%s1 + $0x4] sm:$0xf]
          %v722 = vld [vmem:[%s1 + $0x8] sm:$0xf]
          %v723 = vld [vmem:[%s1 + $0xc] sm:$0xf]
          %v724 = vld [vmem:[%s1 + $0x10] sm:$0xf]
          %v725 = vld [vmem:[%s1 + $0x14] sm:$0xf]
          %v726 = vld [vmem:[%s1 + $0x18] sm:$0xf]
          %v727 = vld [vmem:[%s1 + $0x1c] sm:$0xf]
          %v728 = vld [vmem:[%s2] sm:$0x1]
          %v730 = vlaneseq
          %v731 = vshrl.u32 %v730, 7
          %v732 = vsub.s32 0, %v731
          %v733 = vrot.slane %v728, %v732
          %v743 = vunpack.c.l.b16 %v720
          %v744 = vunpack.c.l.b16 %v721
          %v745 = vunpack.c.l.b16 %v722
          %v746 = vunpack.c.l.b16 %v723
          %v747 = vunpack.c.l.b16 %v724
          %v748 = vunpack.c.l.b16 %v725
          %v749 = vunpack.c.l.b16 %v726
          %v750 = vunpack.c.l.b16 %v727
          %v751 = vpack.c.b16 %v744, %v743
          %v752 = vpack.c.b16 %v746, %v745
          %v753 = vpack.c.b16 %v748, %v747
          %v754 = vpack.c.b16 %v750, %v749
          %vm759 = vcmask 523264
          %v761 = vsel %vm759, %v719, 0
          %763 = vmatprep.subr.bf16.mxu0 0
          %764 = vmatpush1.bf16.msra.mxu0 %v751
          %765 = vmatprep.subr.bf16.mxu0 0
          %766 = vmatpush1.bf16.msra.mxu0 %v752
          %767 = vmatprep.subr.bf16.mxu0 0
          %768 = vmatpush1.bf16.msra.mxu0 %v753
          %769 = vmatprep.subr.bf16.mxu0 0
          %770 = vmatpush1.bf16.msra.mxu0 %v754
          %771 = vmatprep.subr.bf16.mxu0 0
          %772 = vmatpush1.bf16.msra.mxu0 0
          %773 = vmatprep.subr.bf16.mxu0 0
          %774 = vmatpush1.bf16.msra.mxu0 0
          %775 = vmatprep.subr.bf16.mxu0 0
          %776 = vmatpush1.bf16.msra.mxu0 0
          %777 = vmatprep.subr.bf16.mxu0 0
          %778 = vmatpush1.bf16.msra.mxu0 0
          %779 = vmatprep.subr.bf16.mxu0 0
          %780 = vmatpush1.bf16.msra.mxu0 0
          %781 = vmatprep.subr.bf16.mxu0 0
          %782 = vmatpush1.bf16.msra.mxu0 0
          %783 = vmatprep.subr.bf16.mxu0 0
          %784 = vmatpush1.bf16.msra.mxu0 0
          %785 = vmatprep.subr.bf16.mxu0 0
          %786 = vmatpush1.bf16.msra.mxu0 0
          %787 = vmatprep.subr.bf16.mxu0 0
          %788 = vmatpush1.bf16.msra.mxu0 0
          %789 = vmatprep.subr.bf16.mxu0 0
          %790 = vmatpush1.bf16.msra.mxu0 0
          %791 = vmatprep.subr.bf16.mxu0 0
          %792 = vmatpush1.bf16.msra.mxu0 0
          %793 = vmatprep.subr.bf16.mxu0 0
          %794 = vmatpush1.bf16.msra.mxu0 0
          %795 = vmatprep.mubr.bf16.mxu0 0
          %796 = vmatmul.mubr.bf16.gmra.mrb[0].mxu0 %v761
          %v797 = vpop.f32.mrb[0].mxu0
          %v798 = vadd.f32 %v733, %v797
          %v799 = vpop.f32.mrb[0].mxu0
          %v800 = vpop.f32.mrb[0].mxu0
          %v801 = vpop.f32.mrb[0].mxu0
          %802 = vdwg.mxu0
          %v803 = vmul.f32 %v798, 0.5
          %v804 = vmul.f32 %v798, 0.70710677
          %vm805 = vcmp.ge.f32.partialorder %v804, 0.0
          %v806 = vsel %vm805, 1.0, -1.0
          %v807 = vand.u32 2147483647, %v804
          %v808 = vmul.f32 %v807, 0.3275911
          %v809 = vadd.f32 %v808, 1.0
          %v810 = vrcp.pop %v809
          %v811 = vmul.f32 1.0, %v810
          %v812 = vmul.f32 %v811, 1.0614054
          %v813 = vadd.f32 %v812, -1.4531521
          %v814 = vmul.f32 %v813, %v811
          %v815 = vadd.f32 %v814, 1.4214138
          %v816 = vmul.f32 %v815, %v811
          %v817 = vadd.f32 %v816, -0.28449672
          %v818 = vmul.f32 %v817, %v811
          %v819 = vadd.f32 %v818, 0.2548296
          %v820 = vmul.f32 %v819, %v811
          %v821 = vsub.f32 0.0, %v807
          %v822 = vmul.f32 %v821, %v807
          %v823 = vmul.f32 %v822, 1.442695
          %v824 = vpow.pop %v823
          %v825 = vmul.f32 %v820, %v824
          %v826 = vsub.f32 1.0, %v825
          %v827 = vmul.f32 %v806, %v826
          %v828 = vadd.f32 %v827, 1.0
          %v829 = vmul.f32 %v803, %v828
          %v830 = vpack.c.bf16 %v829, %v829
          %v831 = vld [vmem:[%s3] sm:$0xf]
          %v832 = vld [vmem:[%s3 + $0x4] sm:$0xf]
          %v833 = vld [vmem:[%s3 + $0x8] sm:$0xf]
          %v834 = vld [vmem:[%s3 + $0xc] sm:$0xf]
          %v835 = vld [vmem:[%s3 + $0x10] sm:$0xf]
          %v836 = vld [vmem:[%s3 + $0x14] sm:$0xf]
          %v837 = vld [vmem:[%s3 + $0x18] sm:$0xf]
          %v838 = vld [vmem:[%s3 + $0x1c] sm:$0xf]
          %v839 = vld [vmem:[%s3 + $0x20] sm:$0xf]
          %v840 = vld [vmem:[%s3 + $0x24] sm:$0xf]
          %v841 = vld [vmem:[%s3 + $0x28] sm:$0xf]
          %v842 = vld [vmem:[%s3 + $0x2c] sm:$0xf]
          %v843 = vld [vmem:[%s3 + $0x30] sm:$0xf]
          %v844 = vld [vmem:[%s3 + $0x34] sm:$0xf]
          %v845 = vld [vmem:[%s3 + $0x38] sm:$0xf]
          %v846 = vld [vmem:[%s3 + $0x3c] sm:$0xf]
          %v847 = vld [vmem:[%s4] sm:$0x1]
          %v849 = vlaneseq
          %v850 = vshrl.u32 %v849, 7
          %v851 = vsub.s32 0, %v850
          %v852 = vrot.slane %v847, %v851
          %v870 = vunpack.c.l.b16 %v831
          %v871 = vunpack.c.l.b16 %v832
          %v872 = vunpack.c.l.b16 %v833
          %v873 = vunpack.c.l.b16 %v834
          %v874 = vunpack.c.l.b16 %v835
          %v875 = vunpack.c.l.b16 %v836
          %v876 = vunpack.c.l.b16 %v837
          %v877 = vunpack.c.l.b16 %v838
          %v878 = vunpack.c.l.b16 %v839
          %v879 = vunpack.c.l.b16 %v840
          %v880 = vunpack.c.l.b16 %v841
          %v881 = vunpack.c.l.b16 %v842
          %v882 = vunpack.c.l.b16 %v843
          %v883 = vunpack.c.l.b16 %v844
          %v884 = vunpack.c.l.b16 %v845
          %v885 = vunpack.c.l.b16 %v846
          %v886 = vpack.c.b16 %v871, %v870
          %v887 = vpack.c.b16 %v873, %v872
          %v888 = vpack.c.b16 %v875, %v874
          %v889 = vpack.c.b16 %v877, %v876
          %v890 = vpack.c.b16 %v879, %v878
          %v891 = vpack.c.b16 %v881, %v880
          %v892 = vpack.c.b16 %v883, %v882
          %v893 = vpack.c.b16 %v885, %v884
          %902 = vmatprep.subr.bf16.mxu0 0
          %903 = vmatpush1.bf16.msra.mxu0 %v886
          %904 = vmatprep.subr.bf16.mxu0 0
          %905 = vmatpush1.bf16.msra.mxu0 %v887
          %906 = vmatprep.subr.bf16.mxu0 0
          %907 = vmatpush1.bf16.msra.mxu0 %v888
          %908 = vmatprep.subr.bf16.mxu0 0
          %909 = vmatpush1.bf16.msra.mxu0 %v889
          %910 = vmatprep.subr.bf16.mxu0 0
          %911 = vmatpush1.bf16.msra.mxu0 %v890
          %912 = vmatprep.subr.bf16.mxu0 0
          %913 = vmatpush1.bf16.msra.mxu0 %v891
          %914 = vmatprep.subr.bf16.mxu0 0
          %915 = vmatpush1.bf16.msra.mxu0 %v892
          %916 = vmatprep.subr.bf16.mxu0 0
          %917 = vmatpush1.bf16.msra.mxu0 %v893
          %918 = vmatprep.subr.bf16.mxu0 0
          %919 = vmatpush1.bf16.msra.mxu0 0
          %920 = vmatprep.subr.bf16.mxu0 0
          %921 = vmatpush1.bf16.msra.mxu0 0
          %922 = vmatprep.subr.bf16.mxu0 0
          %923 = vmatpush1.bf16.msra.mxu0 0
          %924 = vmatprep.subr.bf16.mxu0 0
          %925 = vmatpush1.bf16.msra.mxu0 0
          %926 = vmatprep.subr.bf16.mxu0 0
          %927 = vmatpush1.bf16.msra.mxu0 0
          %928 = vmatprep.subr.bf16.mxu0 0
          %929 = vmatpush1.bf16.msra.mxu0 0
          %930 = vmatprep.subr.bf16.mxu0 0
          %931 = vmatpush1.bf16.msra.mxu0 0
          %932 = vmatprep.subr.bf16.mxu0 0
          %933 = vmatpush1.bf16.msra.mxu0 0
          %934 = vmatprep.mubr.bf16.mxu0 0
          %935 = vmatmul.mubr.bf16.gmra.mrb[0].mxu0 %v830
          %v936 = vpop.f32.mrb[0].mxu0
          %v937 = vadd.f32 %v852, %v936
          %v938 = vpop.f32.mrb[0].mxu0
          %v939 = vpop.f32.mrb[0].mxu0
          %v940 = vpop.f32.mrb[0].mxu0
          %941 = vdwg.mxu0
          %942 = vst.msk [vmem:[#allocation2] sm:$0xff] %vm759, %v937
        $region92: #{encoder_device.1} parent=87 // pred_fallthru
          _
        %v943 = vld [vmem:[#allocation2] sm:$0xff]
        %v944 = vpack.c.bf16 %v943, %v943
        %v945 = vld [vmem:[%s671] sm:$0xff]
        %v946 = vld [vmem:[%s671 + $0x8] sm:$0xff]
        %v947 = vld [vmem:[%s671 + $0x10] sm:$0xff]
        %v948 = vld [vmem:[%s671 + $0x18] sm:$0xff]
        %v949 = vld [vmem:[%s671 + $0x20] sm:$0xff]
        %v950 = vld [vmem:[%s671 + $0x28] sm:$0xff]
        %v951 = vld [vmem:[%s671 + $0x30] sm:$0xff]
        %v952 = vld [vmem:[%s671 + $0x38] sm:$0xff]
        %v953 = vld [vmem:[%s675] sm:$0x3]
        %v955 = vlaneseq
        %v956 = vshrl.u32 %v955, 7
        %v957 = vsub.s32 0, %v956
        %v958 = vrot.slane %v953, %v957
        %v959 = vlaneseq
        %v960 = vshrl.u32 %v959, 7
        %v961 = vsub.s32 1, %v960
        %v962 = vrot.slane %v953, %v961
        %v973 = vunpack.c.l.b16 %v945
        %v974 = vunpack.c.h.b16 %v945
        %v975 = vunpack.c.l.b16 %v946
        %v976 = vunpack.c.h.b16 %v946
        %v977 = vunpack.c.l.b16 %v947
        %v978 = vunpack.c.h.b16 %v947
        %v979 = vunpack.c.l.b16 %v948
        %v980 = vunpack.c.h.b16 %v948
        %v981 = vunpack.c.l.b16 %v949
        %v982 = vunpack.c.h.b16 %v949
        %v983 = vunpack.c.l.b16 %v950
        %v984 = vunpack.c.h.b16 %v950
        %v985 = vunpack.c.l.b16 %v951
        %v986 = vunpack.c.h.b16 %v951
        %v987 = vunpack.c.l.b16 %v952
        %v988 = vunpack.c.h.b16 %v952
        %v989 = vpack.c.b16 %v975, %v973
        %v990 = vpack.c.b16 %v976, %v974
        %v991 = vpack.c.b16 %v979, %v977
        %v992 = vpack.c.b16 %v980, %v978
        %v993 = vpack.c.b16 %v983, %v981
        %v994 = vpack.c.b16 %v984, %v982
        %v995 = vpack.c.b16 %v987, %v985
        %v996 = vpack.c.b16 %v988, %v986
        %vm1005 = vcmask 523264
        %v1007 = vsel %vm1005, %v944, 0
        %1009 = vmatprep.subr.bf16.mxu0 %v990
        %1010 = vmatpush1.bf16.msra.mxu0 %v989
        %1011 = vmatprep.subr.bf16.mxu0 %v992
        %1012 = vmatpush1.bf16.msra.mxu0 %v991
        %1013 = vmatprep.subr.bf16.mxu0 %v994
        %1014 = vmatpush1.bf16.msra.mxu0 %v993
        %1015 = vmatprep.subr.bf16.mxu0 %v996
        %1016 = vmatpush1.bf16.msra.mxu0 %v995
        %1017 = vmatprep.subr.bf16.mxu0 0
        %1018 = vmatpush1.bf16.msra.mxu0 0
        %1019 = vmatprep.subr.bf16.mxu0 0
        %1020 = vmatpush1.bf16.msra.mxu0 0
        %1021 = vmatprep.subr.bf16.mxu0 0
        %1022 = vmatpush1.bf16.msra.mxu0 0
        %1023 = vmatprep.subr.bf16.mxu0 0
        %1024 = vmatpush1.bf16.msra.mxu0 0
        %1025 = vmatprep.subr.bf16.mxu0 0
        %1026 = vmatpush1.bf16.msra.mxu0 0
        %1027 = vmatprep.subr.bf16.mxu0 0
        %1028 = vmatpush1.bf16.msra.mxu0 0
        %1029 = vmatprep.subr.bf16.mxu0 0
        %1030 = vmatpush1.bf16.msra.mxu0 0
        %1031 = vmatprep.subr.bf16.mxu0 0
        %1032 = vmatpush1.bf16.msra.mxu0 0
        %1033 = vmatprep.subr.bf16.mxu0 0
        %1034 = vmatpush1.bf16.msra.mxu0 0
        %1035 = vmatprep.subr.bf16.mxu0 0
        %1036 = vmatpush1.bf16.msra.mxu0 0
        %1037 = vmatprep.subr.bf16.mxu0 0
        %1038 = vmatpush1.bf16.msra.mxu0 0
        %1039 = vmatprep.subr.bf16.mxu0 0
        %1040 = vmatpush1.bf16.msra.mxu0 0
        %1041 = vmatprep.mubr.bf16.mxu0 0
        %1042 = vmatmul.mubr.bf16.gmra.mrb[0].mxu0 %v1007
        %v1043 = vpop.f32.mrb[0].mxu0
        %v1044 = vadd.f32 %v958, %v1043
        %v1045 = vpop.f32.mrb[0].mxu0
        %v1046 = vadd.f32 %v962, %v1045
        %v1047 = vpop.f32.mrb[0].mxu0
        %v1048 = vpop.f32.mrb[0].mxu0
        %1049 = vdwg.mxu0
        %1051 = vrot.lane.b32.xlu0 %v1044, 112
        %v1052 = vpop.permute.xlu0 %1051
        %1054 = vrot.lane.b32.xlu0 %v1044, 96
        %v1055 = vpop.permute.xlu0 %1054
        %1057 = vrot.lane.b32.xlu0 %v1044, 80
        %v1058 = vpop.permute.xlu0 %1057
        %v1060 = vcombine.low %v1044, %v1055
        %v1061 = vcombine.high %v1044, %v1055
        %v1063 = vunpack.c.l.s4 1983009808
        %v1064 = vunpack.c.0.s8 %v1063
        %v1065 = vlaneseq
        %v1066 = vshrl.u32 %v1065, 7
        %v1067 = vsub.s32 %v1064, %v1066
        %v1068 = vrot.slane %v1060, %v1067
        %v1070 = vunpack.c.l.s4 1983009808
        %v1071 = vunpack.c.0.s8 %v1070
        %v1072 = vlaneseq
        %v1073 = vshrl.u32 %v1072, 7
        %v1074 = vsub.s32 %v1071, %v1073
        %v1075 = vrot.slane %v1061, %v1074
        %v1076 = vcombine.low %v1052, %v1058
        %v1077 = vcombine.high %v1052, %v1058
        %v1079 = vunpack.c.l.s4 1983009808
        %v1080 = vunpack.c.0.s8 %v1079
        %v1081 = vlaneseq
        %v1082 = vshrl.u32 %v1081, 7
        %v1083 = vsub.s32 %v1080, %v1082
        %v1084 = vrot.slane %v1076, %v1083
        %v1086 = vunpack.c.l.s4 1983009808
        %v1087 = vunpack.c.0.s8 %v1086
        %v1088 = vlaneseq
        %v1089 = vshrl.u32 %v1088, 7
        %v1090 = vsub.s32 %v1087, %v1089
        %v1091 = vrot.slane %v1077, %v1090
        %v1092 = vcombine.low %v1068, %v1084
        %v1093 = vcombine.high %v1068, %v1084
        %v1095 = vunpack.c.l.s4 1934713408
        %v1096 = vunpack.c.0.s8 %v1095
        %v1097 = vlaneseq
        %v1098 = vshrl.u32 %v1097, 7
        %v1099 = vsub.s32 %v1096, %v1098
        %v1100 = vrot.slane %v1092, %v1099
        %v1102 = vunpack.c.l.s4 1934713408
        %v1103 = vunpack.c.0.s8 %v1102
        %v1104 = vlaneseq
        %v1105 = vshrl.u32 %v1104, 7
        %v1106 = vsub.s32 %v1103, %v1105
        %v1107 = vrot.slane %v1093, %v1106
        %v1108 = vcombine.low %v1075, %v1091
        %v1109 = vcombine.high %v1075, %v1091
        %v1111 = vunpack.c.l.s4 1934713408
        %v1112 = vunpack.c.0.s8 %v1111
        %v1113 = vlaneseq
        %v1114 = vshrl.u32 %v1113, 7
        %v1115 = vsub.s32 %v1112, %v1114
        %v1116 = vrot.slane %v1108, %v1115
        %v1118 = vunpack.c.l.s4 1934713408
        %v1119 = vunpack.c.0.s8 %v1118
        %v1120 = vlaneseq
        %v1121 = vshrl.u32 %v1120, 7
        %v1122 = vsub.s32 %v1119, %v1121
        %v1123 = vrot.slane %v1109, %v1122
        %v1124 = vcombine.high %v1100, 0.0
        %v1125 = vcombine.high %v1107, 0.0
        %v1126 = vcombine.high %v1116, 0.0
        %v1127 = vcombine.high %v1123, 0.0
        %1128 = vrot.lane.b32.xlu0 %v1044, 64
        %v1129 = vpop.permute.xlu0 %1128
        %1130 = vrot.lane.b32.xlu0 %v1052, 64
        %v1131 = vpop.permute.xlu0 %1130
        %1132 = vrot.lane.b32.xlu0 %v1055, 64
        %v1133 = vpop.permute.xlu0 %1132
        %1134 = vrot.lane.b32.xlu0 %v1058, 64
        %v1135 = vpop.permute.xlu0 %1134
        %v1140 = vcombine.low %v1129, %v1133
        %v1141 = vcombine.high %v1129, %v1133
        %v1143 = vunpack.c.l.s4 1983009808
        %v1144 = vunpack.c.0.s8 %v1143
        %v1145 = vlaneseq
        %v1146 = vshrl.u32 %v1145, 7
        %v1147 = vsub.s32 %v1144, %v1146
        %v1148 = vrot.slane %v1140, %v1147
        %v1150 = vunpack.c.l.s4 1983009808
        %v1151 = vunpack.c.0.s8 %v1150
        %v1152 = vlaneseq
        %v1153 = vshrl.u32 %v1152, 7
        %v1154 = vsub.s32 %v1151, %v1153
        %v1155 = vrot.slane %v1141, %v1154
        %v1156 = vcombine.low %v1131, %v1135
        %v1157 = vcombine.high %v1131, %v1135
        %v1159 = vunpack.c.l.s4 1983009808
        %v1160 = vunpack.c.0.s8 %v1159
        %v1161 = vlaneseq
        %v1162 = vshrl.u32 %v1161, 7
        %v1163 = vsub.s32 %v1160, %v1162
        %v1164 = vrot.slane %v1156, %v1163
        %v1166 = vunpack.c.l.s4 1983009808
        %v1167 = vunpack.c.0.s8 %v1166
        %v1168 = vlaneseq
        %v1169 = vshrl.u32 %v1168, 7
        %v1170 = vsub.s32 %v1167, %v1169
        %v1171 = vrot.slane %v1157, %v1170
        %v1172 = vcombine.low %v1148, %v1164
        %v1173 = vcombine.high %v1148, %v1164
        %v1175 = vunpack.c.l.s4 1934713408
        %v1176 = vunpack.c.0.s8 %v1175
        %v1177 = vlaneseq
        %v1178 = vshrl.u32 %v1177, 7
        %v1179 = vsub.s32 %v1176, %v1178
        %v1180 = vrot.slane %v1172, %v1179
        %v1182 = vunpack.c.l.s4 1934713408
        %v1183 = vunpack.c.0.s8 %v1182
        %v1184 = vlaneseq
        %v1185 = vshrl.u32 %v1184, 7
        %v1186 = vsub.s32 %v1183, %v1185
        %v1187 = vrot.slane %v1173, %v1186
        %v1188 = vcombine.low %v1155, %v1171
        %v1189 = vcombine.high %v1155, %v1171
        %v1191 = vunpack.c.l.s4 1934713408
        %v1192 = vunpack.c.0.s8 %v1191
        %v1193 = vlaneseq
        %v1194 = vshrl.u32 %v1193, 7
        %v1195 = vsub.s32 %v1192, %v1194
        %v1196 = vrot.slane %v1188, %v1195
        %v1198 = vunpack.c.l.s4 1934713408
        %v1199 = vunpack.c.0.s8 %v1198
        %v1200 = vlaneseq
        %v1201 = vshrl.u32 %v1200, 7
        %v1202 = vsub.s32 %v1199, %v1201
        %v1203 = vrot.slane %v1189, %v1202
        %v1204 = vcombine.high %v1180, 0.0
        %v1205 = vcombine.high %v1187, 0.0
        %v1206 = vcombine.high %v1196, 0.0
        %v1207 = vcombine.high %v1203, 0.0
        %1209 = vrot.lane.b32.xlu0 %v1046, 112
        %v1210 = vpop.permute.xlu0 %1209
        %1212 = vrot.lane.b32.xlu0 %v1046, 96
        %v1213 = vpop.permute.xlu0 %1212
        %1215 = vrot.lane.b32.xlu0 %v1046, 80
        %v1216 = vpop.permute.xlu0 %1215
        %v1218 = vcombine.low %v1046, %v1213
        %v1219 = vcombine.high %v1046, %v1213
        %v1221 = vunpack.c.l.s4 1983009808
        %v1222 = vunpack.c.0.s8 %v1221
        %v1223 = vlaneseq
        %v1224 = vshrl.u32 %v1223, 7
        %v1225 = vsub.s32 %v1222, %v1224
        %v1226 = vrot.slane %v1218, %v1225
        %v1228 = vunpack.c.l.s4 1983009808
        %v1229 = vunpack.c.0.s8 %v1228
        %v1230 = vlaneseq
        %v1231 = vshrl.u32 %v1230, 7
        %v1232 = vsub.s32 %v1229, %v1231
        %v1233 = vrot.slane %v1219, %v1232
        %v1234 = vcombine.low %v1210, %v1216
        %v1235 = vcombine.high %v1210, %v1216
        %v1237 = vunpack.c.l.s4 1983009808
        %v1238 = vunpack.c.0.s8 %v1237
        %v1239 = vlaneseq
        %v1240 = vshrl.u32 %v1239, 7
        %v1241 = vsub.s32 %v1238, %v1240
        %v1242 = vrot.slane %v1234, %v1241
        %v1244 = vunpack.c.l.s4 1983009808
        %v1245 = vunpack.c.0.s8 %v1244
        %v1246 = vlaneseq
        %v1247 = vshrl.u32 %v1246, 7
        %v1248 = vsub.s32 %v1245, %v1247
        %v1249 = vrot.slane %v1235, %v1248
        %v1250 = vcombine.low %v1226, %v1242
        %v1251 = vcombine.high %v1226, %v1242
        %v1253 = vunpack.c.l.s4 1934713408
        %v1254 = vunpack.c.0.s8 %v1253
        %v1255 = vlaneseq
        %v1256 = vshrl.u32 %v1255, 7
        %v1257 = vsub.s32 %v1254, %v1256
        %v1258 = vrot.slane %v1250, %v1257
        %v1260 = vunpack.c.l.s4 1934713408
        %v1261 = vunpack.c.0.s8 %v1260
        %v1262 = vlaneseq
        %v1263 = vshrl.u32 %v1262, 7
        %v1264 = vsub.s32 %v1261, %v1263
        %v1265 = vrot.slane %v1251, %v1264
        %v1266 = vcombine.low %v1233, %v1249
        %v1267 = vcombine.high %v1233, %v1249
        %v1269 = vunpack.c.l.s4 1934713408
        %v1270 = vunpack.c.0.s8 %v1269
        %v1271 = vlaneseq
        %v1272 = vshrl.u32 %v1271, 7
        %v1273 = vsub.s32 %v1270, %v1272
        %v1274 = vrot.slane %v1266, %v1273
        %v1276 = vunpack.c.l.s4 1934713408
        %v1277 = vunpack.c.0.s8 %v1276
        %v1278 = vlaneseq
        %v1279 = vshrl.u32 %v1278, 7
        %v1280 = vsub.s32 %v1277, %v1279
        %v1281 = vrot.slane %v1267, %v1280
        %v1282 = vcombine.high %v1258, 0.0
        %v1283 = vcombine.high %v1265, 0.0
        %v1284 = vcombine.high %v1274, 0.0
        %v1285 = vcombine.high %v1281, 0.0
        %v1286 = vpack.c.bf16 %v1100, %v1100
        %v1287 = vpack.c.bf16 %v1124, %v1124
        %v1288 = vpack.c.bf16 %v1107, %v1107
        %v1289 = vpack.c.bf16 %v1125, %v1125
        %v1290 = vpack.c.bf16 %v1116, %v1116
        %v1291 = vpack.c.bf16 %v1126, %v1126
        %v1292 = vpack.c.bf16 %v1123, %v1123
        %v1293 = vpack.c.bf16 %v1127, %v1127
        %v1294 = vpack.c.bf16 %v1180, %v1180
        %v1295 = vpack.c.bf16 %v1204, %v1204
        %v1296 = vpack.c.bf16 %v1187, %v1187
        %v1297 = vpack.c.bf16 %v1205, %v1205
        %v1298 = vpack.c.bf16 %v1196, %v1196
        %v1299 = vpack.c.bf16 %v1206, %v1206
        %v1300 = vpack.c.bf16 %v1203, %v1203
        %v1301 = vpack.c.bf16 %v1207, %v1207
        %v1302 = vcombine.low %v1286, %v1290
        %v1304 = vunpack.c.l.s4 1983009808
        %v1305 = vunpack.c.0.s8 %v1304
        %v1306 = vlaneseq
        %v1307 = vshrl.u32 %v1306, 7
        %v1308 = vsub.s32 %v1305, %v1307
        %v1309 = vrot.slane %v1302, %v1308
        %v1310 = vcombine.low %v1288, %v1292
        %v1312 = vunpack.c.l.s4 1983009808
        %v1313 = vunpack.c.0.s8 %v1312
        %v1314 = vlaneseq
        %v1315 = vshrl.u32 %v1314, 7
        %v1316 = vsub.s32 %v1313, %v1315
        %v1317 = vrot.slane %v1310, %v1316
        %v1318 = vcombine.low %v1309, %v1317
        %v1320 = vunpack.c.l.s4 1934713408
        %v1321 = vunpack.c.0.s8 %v1320
        %v1322 = vlaneseq
        %v1323 = vshrl.u32 %v1322, 7
        %v1324 = vsub.s32 %v1321, %v1323
        %v1325 = vrot.slane %v1318, %v1324
        %v1326 = vcombine.high %v1325, 0
        %v1327 = vcombine.low %v1287, %v1291
        %v1329 = vunpack.c.l.s4 1983009808
        %v1330 = vunpack.c.0.s8 %v1329
        %v1331 = vlaneseq
        %v1332 = vshrl.u32 %v1331, 7
        %v1333 = vsub.s32 %v1330, %v1332
        %v1334 = vrot.slane %v1327, %v1333
        %v1335 = vcombine.low %v1289, %v1293
        %v1337 = vunpack.c.l.s4 1983009808
        %v1338 = vunpack.c.0.s8 %v1337
        %v1339 = vlaneseq
        %v1340 = vshrl.u32 %v1339, 7
        %v1341 = vsub.s32 %v1338, %v1340
        %v1342 = vrot.slane %v1335, %v1341
        %v1343 = vcombine.low %v1334, %v1342
        %v1345 = vunpack.c.l.s4 1934713408
        %v1346 = vunpack.c.0.s8 %v1345
        %v1347 = vlaneseq
        %v1348 = vshrl.u32 %v1347, 7
        %v1349 = vsub.s32 %v1346, %v1348
        %v1350 = vrot.slane %v1343, %v1349
        %v1351 = vcombine.high %v1350, 0
        %v1354 = vpack.i.b16 %v1350, %v1325
        %v1355 = vshrl.u32 %v1325, 16
        %v1356 = vshrl.u32 %v1350, 16
        %v1357 = vpack.i.b16 %v1356, %v1355
        %v1360 = vpack.i.b16 %v1351, %v1326
        %v1361 = vshrl.u32 %v1326, 16
        %v1362 = vshrl.u32 %v1351, 16
        %v1363 = vpack.i.b16 %v1362, %v1361
        %1364 = vxpose.xlu0.c.b16.start [1/8] %v1294, 128
        %1365 = vxpose.xlu0.c.b16.cont [2/8] 0, 128
        %1366 = vxpose.xlu0.c.b16.cont [3/8] 0, 128
        %1367 = vxpose.xlu0.c.b16.cont [4/8] 0, 128
        %1368 = vxpose.xlu0.c.b16.cont [5/8] 0, 128
        %1369 = vxpose.xlu0.c.b16.cont [6/8] 0, 128
        %1370 = vxpose.xlu0.c.b16.cont [7/8] 0, 128
        %1371 = vxpose.xlu0.c.b16.end [8/8] 0, 128
        %v1372 = vpop.trf.xlu0
        %v1373 = vpop.trf.xlu0
        %v1374 = vpop.trf.xlu0
        %v1375 = vpop.trf.xlu0
        %v1376 = vpop.trf.xlu0
        %v1377 = vpop.trf.xlu0
        %v1378 = vpop.trf.xlu0
        %v1379 = vpop.trf.xlu0
        %1380 = vxpose.xlu0.c.b16.start [1/8] %v1295, 128
        %1381 = vxpose.xlu0.c.b16.cont [2/8] 0, 128
        %1382 = vxpose.xlu0.c.b16.cont [3/8] 0, 128
        %1383 = vxpose.xlu0.c.b16.cont [4/8] 0, 128
        %1384 = vxpose.xlu0.c.b16.cont [5/8] 0, 128
        %1385 = vxpose.xlu0.c.b16.cont [6/8] 0, 128
        %1386 = vxpose.xlu0.c.b16.cont [7/8] 0, 128
        %1387 = vxpose.xlu0.c.b16.end [8/8] 0, 128
        %v1388 = vpop.trf.xlu0
        %v1389 = vpop.trf.xlu0
        %v1390 = vpop.trf.xlu0
        %v1391 = vpop.trf.xlu0
        %v1392 = vpop.trf.xlu0
        %v1393 = vpop.trf.xlu0
        %v1394 = vpop.trf.xlu0
        %v1395 = vpop.trf.xlu0
        %1396 = vxpose.xlu0.c.b16.start [1/8] %v1296, 128
        %1397 = vxpose.xlu0.c.b16.cont [2/8] 0, 128
        %1398 = vxpose.xlu0.c.b16.cont [3/8] 0, 128
        %1399 = vxpose.xlu0.c.b16.cont [4/8] 0, 128
        %1400 = vxpose.xlu0.c.b16.cont [5/8] 0, 128
        %1401 = vxpose.xlu0.c.b16.cont [6/8] 0, 128
        %1402 = vxpose.xlu0.c.b16.cont [7/8] 0, 128
        %1403 = vxpose.xlu0.c.b16.end [8/8] 0, 128
        %v1404 = vpop.trf.xlu0
        %v1405 = vpop.trf.xlu0
        %v1406 = vpop.trf.xlu0
        %v1407 = vpop.trf.xlu0
        %v1408 = vpop.trf.xlu0
        %v1409 = vpop.trf.xlu0
        %v1410 = vpop.trf.xlu0
        %v1411 = vpop.trf.xlu0
        %1412 = vxpose.xlu0.c.b16.start [1/8] %v1297, 128
        %1413 = vxpose.xlu0.c.b16.cont [2/8] 0, 128
        %1414 = vxpose.xlu0.c.b16.cont [3/8] 0, 128
        %1415 = vxpose.xlu0.c.b16.cont [4/8] 0, 128
        %1416 = vxpose.xlu0.c.b16.cont [5/8] 0, 128
        %1417 = vxpose.xlu0.c.b16.cont [6/8] 0, 128
        %1418 = vxpose.xlu0.c.b16.cont [7/8] 0, 128
        %1419 = vxpose.xlu0.c.b16.end [8/8] 0, 128
        %v1420 = vpop.trf.xlu0
        %v1421 = vpop.trf.xlu0
        %v1422 = vpop.trf.xlu0
        %v1423 = vpop.trf.xlu0
        %v1424 = vpop.trf.xlu0
        %v1425 = vpop.trf.xlu0
        %v1426 = vpop.trf.xlu0
        %v1427 = vpop.trf.xlu0
        %1428 = vxpose.xlu0.c.b16.start [1/8] %v1298, 128
        %1429 = vxpose.xlu0.c.b16.cont [2/8] 0, 128
        %1430 = vxpose.xlu0.c.b16.cont [3/8] 0, 128
        %1431 = vxpose.xlu0.c.b16.cont [4/8] 0, 128
        %1432 = vxpose.xlu0.c.b16.cont [5/8] 0, 128
        %1433 = vxpose.xlu0.c.b16.cont [6/8] 0, 128
        %1434 = vxpose.xlu0.c.b16.cont [7/8] 0, 128
        %1435 = vxpose.xlu0.c.b16.end [8/8] 0, 128
        %v1436 = vpop.trf.xlu0
        %v1437 = vpop.trf.xlu0
        %v1438 = vpop.trf.xlu0
        %v1439 = vpop.trf.xlu0
        %v1440 = vpop.trf.xlu0
        %v1441 = vpop.trf.xlu0
        %v1442 = vpop.trf.xlu0
        %v1443 = vpop.trf.xlu0
        %1444 = vxpose.xlu0.c.b16.start [1/8] %v1299, 128
        %1445 = vxpose.xlu0.c.b16.cont [2/8] 0, 128
        %1446 = vxpose.xlu0.c.b16.cont [3/8] 0, 128
        %1447 = vxpose.xlu0.c.b16.cont [4/8] 0, 128
        %1448 = vxpose.xlu0.c.b16.cont [5/8] 0, 128
        %1449 = vxpose.xlu0.c.b16.cont [6/8] 0, 128
        %1450 = vxpose.xlu0.c.b16.cont [7/8] 0, 128
        %1451 = vxpose.xlu0.c.b16.end [8/8] 0, 128
        %v1452 = vpop.trf.xlu0
        %v1453 = vpop.trf.xlu0
        %v1454 = vpop.trf.xlu0
        %v1455 = vpop.trf.xlu0
        %v1456 = vpop.trf.xlu0
        %v1457 = vpop.trf.xlu0
        %v1458 = vpop.trf.xlu0
        %v1459 = vpop.trf.xlu0
        %1460 = vxpose.xlu0.c.b16.start [1/8] %v1300, 128
        %1461 = vxpose.xlu0.c.b16.cont [2/8] 0, 128
        %1462 = vxpose.xlu0.c.b16.cont [3/8] 0, 128
        %1463 = vxpose.xlu0.c.b16.cont [4/8] 0, 128
        %1464 = vxpose.xlu0.c.b16.cont [5/8] 0, 128
        %1465 = vxpose.xlu0.c.b16.cont [6/8] 0, 128
        %1466 = vxpose.xlu0.c.b16.cont [7/8] 0, 128
        %1467 = vxpose.xlu0.c.b16.end [8/8] 0, 128
        %v1468 = vpop.trf.xlu0
        %v1469 = vpop.trf.xlu0
        %v1470 = vpop.trf.xlu0
        %v1471 = vpop.trf.xlu0
        %v1472 = vpop.trf.xlu0
        %v1473 = vpop.trf.xlu0
        %v1474 = vpop.trf.xlu0
        %v1475 = vpop.trf.xlu0
        %1476 = vxpose.xlu0.c.b16.start [1/8] %v1301, 128
        %1477 = vxpose.xlu0.c.b16.cont [2/8] 0, 128
        %1478 = vxpose.xlu0.c.b16.cont [3/8] 0, 128
        %1479 = vxpose.xlu0.c.b16.cont [4/8] 0, 128
        %1480 = vxpose.xlu0.c.b16.cont [5/8] 0, 128
        %1481 = vxpose.xlu0.c.b16.cont [6/8] 0, 128
        %1482 = vxpose.xlu0.c.b16.cont [7/8] 0, 128
        %1483 = vxpose.xlu0.c.b16.end [8/8] 0, 128
        %v1484 = vpop.trf.xlu0
        %v1485 = vpop.trf.xlu0
        %v1486 = vpop.trf.xlu0
        %v1487 = vpop.trf.xlu0
        %v1488 = vpop.trf.xlu0
        %v1489 = vpop.trf.xlu0
        %v1490 = vpop.trf.xlu0
        %v1491 = vpop.trf.xlu0
        %v1494 = vpack.i.b16 %v1388, %v1372
        %v1496 = vshrl.u32 %v1372, 16
        %v1497 = vshrl.u32 %v1388, 16
        %v1498 = vpack.i.b16 %v1497, %v1496
        %v1502 = vpack.i.b16 %v1420, %v1404
        %v1504 = vshrl.u32 %v1404, 16
        %v1505 = vshrl.u32 %v1420, 16
        %v1506 = vpack.i.b16 %v1505, %v1504
        %v1510 = vpack.i.b16 %v1452, %v1436
        %v1512 = vshrl.u32 %v1436, 16
        %v1513 = vshrl.u32 %v1452, 16
        %v1514 = vpack.i.b16 %v1513, %v1512
        %v1518 = vpack.i.b16 %v1484, %v1468
        %v1520 = vshrl.u32 %v1468, 16
        %v1521 = vshrl.u32 %v1484, 16
        %v1522 = vpack.i.b16 %v1521, %v1520
        %v1524 = vcombine.low %v1494, %v1510
        %v1525 = vcombine.high %v1494, %v1510
        %v1527 = vunpack.c.l.s4 1983009808
        %v1528 = vunpack.c.0.s8 %v1527
        %v1529 = vlaneseq
        %v1530 = vshrl.u32 %v1529, 7
        %v1531 = vsub.s32 %v1528, %v1530
        %v1532 = vrot.slane %v1524, %v1531
        %v1534 = vunpack.c.l.s4 1983009808
        %v1535 = vunpack.c.0.s8 %v1534
        %v1536 = vlaneseq
        %v1537 = vshrl.u32 %v1536, 7
        %v1538 = vsub.s32 %v1535, %v1537
        %v1539 = vrot.slane %v1525, %v1538
        %v1540 = vcombine.low %v1502, %v1518
        %v1541 = vcombine.high %v1502, %v1518
        %v1543 = vunpack.c.l.s4 1983009808
        %v1544 = vunpack.c.0.s8 %v1543
        %v1545 = vlaneseq
        %v1546 = vshrl.u32 %v1545, 7
        %v1547 = vsub.s32 %v1544, %v1546
        %v1548 = vrot.slane %v1540, %v1547
        %v1550 = vunpack.c.l.s4 1983009808
        %v1551 = vunpack.c.0.s8 %v1550
        %v1552 = vlaneseq
        %v1553 = vshrl.u32 %v1552, 7
        %v1554 = vsub.s32 %v1551, %v1553
        %v1555 = vrot.slane %v1541, %v1554
        %v1556 = vcombine.low %v1532, %v1548
        %v1557 = vcombine.high %v1532, %v1548
        %v1559 = vunpack.c.l.s4 1934713408
        %v1560 = vunpack.c.0.s8 %v1559
        %v1561 = vlaneseq
        %v1562 = vshrl.u32 %v1561, 7
        %v1563 = vsub.s32 %v1560, %v1562
        %v1564 = vrot.slane %v1556, %v1563
        %v1566 = vunpack.c.l.s4 1934713408
        %v1567 = vunpack.c.0.s8 %v1566
        %v1568 = vlaneseq
        %v1569 = vshrl.u32 %v1568, 7
        %v1570 = vsub.s32 %v1567, %v1569
        %v1571 = vrot.slane %v1557, %v1570
        %v1572 = vcombine.low %v1539, %v1555
        %v1573 = vcombine.high %v1539, %v1555
        %v1575 = vunpack.c.l.s4 1934713408
        %v1576 = vunpack.c.0.s8 %v1575
        %v1577 = vlaneseq
        %v1578 = vshrl.u32 %v1577, 7
        %v1579 = vsub.s32 %v1576, %v1578
        %v1580 = vrot.slane %v1572, %v1579
        %v1582 = vunpack.c.l.s4 1934713408
        %v1583 = vunpack.c.0.s8 %v1582
        %v1584 = vlaneseq
        %v1585 = vshrl.u32 %v1584, 7
        %v1586 = vsub.s32 %v1583, %v1585
        %v1587 = vrot.slane %v1573, %v1586
        %v1588 = vcombine.high %v1564, 0
        %v1589 = vcombine.high %v1571, 0
        %v1590 = vcombine.high %v1580, 0
        %v1591 = vcombine.high %v1587, 0
        %v1592 = vcombine.low %v1498, %v1514
        %v1593 = vcombine.high %v1498, %v1514
        %v1595 = vunpack.c.l.s4 1983009808
        %v1596 = vunpack.c.0.s8 %v1595
        %v1597 = vlaneseq
        %v1598 = vshrl.u32 %v1597, 7
        %v1599 = vsub.s32 %v1596, %v1598
        %v1600 = vrot.slane %v1592, %v1599
        %v1602 = vunpack.c.l.s4 1983009808
        %v1603 = vunpack.c.0.s8 %v1602
        %v1604 = vlaneseq
        %v1605 = vshrl.u32 %v1604, 7
        %v1606 = vsub.s32 %v1603, %v1605
        %v1607 = vrot.slane %v1593, %v1606
        %v1608 = vcombine.low %v1506, %v1522
        %v1609 = vcombine.high %v1506, %v1522
        %v1611 = vunpack.c.l.s4 1983009808
        %v1612 = vunpack.c.0.s8 %v1611
        %v1613 = vlaneseq
        %v1614 = vshrl.u32 %v1613, 7
        %v1615 = vsub.s32 %v1612, %v1614
        %v1616 = vrot.slane %v1608, %v1615
        %v1618 = vunpack.c.l.s4 1983009808
        %v1619 = vunpack.c.0.s8 %v1618
        %v1620 = vlaneseq
        %v1621 = vshrl.u32 %v1620, 7
        %v1622 = vsub.s32 %v1619, %v1621
        %v1623 = vrot.slane %v1609, %v1622
        %v1624 = vcombine.low %v1600, %v1616
        %v1625 = vcombine.high %v1600, %v1616
        %v1627 = vunpack.c.l.s4 1934713408
        %v1628 = vunpack.c.0.s8 %v1627
        %v1629 = vlaneseq
        %v1630 = vshrl.u32 %v1629, 7
        %v1631 = vsub.s32 %v1628, %v1630
        %v1632 = vrot.slane %v1624, %v1631
        %v1634 = vunpack.c.l.s4 1934713408
        %v1635 = vunpack.c.0.s8 %v1634
        %v1636 = vlaneseq
        %v1637 = vshrl.u32 %v1636, 7
        %v1638 = vsub.s32 %v1635, %v1637
        %v1639 = vrot.slane %v1625, %v1638
        %v1640 = vcombine.low %v1607, %v1623
        %v1641 = vcombine.high %v1607, %v1623
        %v1643 = vunpack.c.l.s4 1934713408
        %v1644 = vunpack.c.0.s8 %v1643
        %v1645 = vlaneseq
        %v1646 = vshrl.u32 %v1645, 7
        %v1647 = vsub.s32 %v1644, %v1646
        %v1648 = vrot.slane %v1640, %v1647
        %v1650 = vunpack.c.l.s4 1934713408
        %v1651 = vunpack.c.0.s8 %v1650
        %v1652 = vlaneseq
        %v1653 = vshrl.u32 %v1652, 7
        %v1654 = vsub.s32 %v1651, %v1653
        %v1655 = vrot.slane %v1641, %v1654
        %v1656 = vcombine.high %v1632, 0
        %v1657 = vcombine.high %v1639, 0
        %v1658 = vcombine.high %v1648, 0
        %v1659 = vcombine.high %v1655, 0
        %1660 = vxpose.xlu0.c.b16.start [1/8] %v1564, 128
        %1661 = vxpose.xlu0.c.b16.cont [2/8] 0, 128
        %1662 = vxpose.xlu0.c.b16.cont [3/8] 0, 128
        %1663 = vxpose.xlu0.c.b16.cont [4/8] 0, 128
        %1664 = vxpose.xlu0.c.b16.cont [5/8] 0, 128
        %1665 = vxpose.xlu0.c.b16.cont [6/8] 0, 128
        %1666 = vxpose.xlu0.c.b16.cont [7/8] 0, 128
        %1667 = vxpose.xlu0.c.b16.end [8/8] 0, 128
        %v1668 = vpop.trf.xlu0
        %v1669 = vpop.trf.xlu0
        %v1670 = vpop.trf.xlu0
        %v1671 = vpop.trf.xlu0
        %v1672 = vpop.trf.xlu0
        %v1673 = vpop.trf.xlu0
        %v1674 = vpop.trf.xlu0
        %v1675 = vpop.trf.xlu0
        %1676 = vxpose.xlu0.c.b16.start [1/8] %v1632, 128
        %1677 = vxpose.xlu0.c.b16.cont [2/8] 0, 128
        %1678 = vxpose.xlu0.c.b16.cont [3/8] 0, 128
        %1679 = vxpose.xlu0.c.b16.cont [4/8] 0, 128
        %1680 = vxpose.xlu0.c.b16.cont [5/8] 0, 128
        %1681 = vxpose.xlu0.c.b16.cont [6/8] 0, 128
        %1682 = vxpose.xlu0.c.b16.cont [7/8] 0, 128
        %1683 = vxpose.xlu0.c.b16.end [8/8] 0, 128
        %v1684 = vpop.trf.xlu0
        %v1685 = vpop.trf.xlu0
        %v1686 = vpop.trf.xlu0
        %v1687 = vpop.trf.xlu0
        %v1688 = vpop.trf.xlu0
        %v1689 = vpop.trf.xlu0
        %v1690 = vpop.trf.xlu0
        %v1691 = vpop.trf.xlu0
        %1692 = vxpose.xlu0.c.b16.start [1/8] %v1588, 128
        %1693 = vxpose.xlu0.c.b16.cont [2/8] 0, 128
        %1694 = vxpose.xlu0.c.b16.cont [3/8] 0, 128
        %1695 = vxpose.xlu0.c.b16.cont [4/8] 0, 128
        %1696 = vxpose.xlu0.c.b16.cont [5/8] 0, 128
        %1697 = vxpose.xlu0.c.b16.cont [6/8] 0, 128
        %1698 = vxpose.xlu0.c.b16.cont [7/8] 0, 128
        %1699 = vxpose.xlu0.c.b16.end [8/8] 0, 128
        %v1700 = vpop.trf.xlu0
        %v1701 = vpop.trf.xlu0
        %v1702 = vpop.trf.xlu0
        %v1703 = vpop.trf.xlu0
        %v1704 = vpop.trf.xlu0
        %v1705 = vpop.trf.xlu0
        %v1706 = vpop.trf.xlu0
        %v1707 = vpop.trf.xlu0
        %1708 = vxpose.xlu0.c.b16.start [1/8] %v1656, 128
        %1709 = vxpose.xlu0.c.b16.cont [2/8] 0, 128
        %1710 = vxpose.xlu0.c.b16.cont [3/8] 0, 128
        %1711 = vxpose.xlu0.c.b16.cont [4/8] 0, 128
        %1712 = vxpose.xlu0.c.b16.cont [5/8] 0, 128
        %1713 = vxpose.xlu0.c.b16.cont [6/8] 0, 128
        %1714 = vxpose.xlu0.c.b16.cont [7/8] 0, 128
        %1715 = vxpose.xlu0.c.b16.end [8/8] 0, 128
        %v1716 = vpop.trf.xlu0
        %v1717 = vpop.trf.xlu0
        %v1718 = vpop.trf.xlu0
        %v1719 = vpop.trf.xlu0
        %v1720 = vpop.trf.xlu0
        %v1721 = vpop.trf.xlu0
        %v1722 = vpop.trf.xlu0
        %v1723 = vpop.trf.xlu0
        %1724 = vxpose.xlu0.c.b16.start [1/8] %v1571, 128
        %1725 = vxpose.xlu0.c.b16.cont [2/8] 0, 128
        %1726 = vxpose.xlu0.c.b16.cont [3/8] 0, 128
        %1727 = vxpose.xlu0.c.b16.cont [4/8] 0, 128
        %1728 = vxpose.xlu0.c.b16.cont [5/8] 0, 128
        %1729 = vxpose.xlu0.c.b16.cont [6/8] 0, 128
        %1730 = vxpose.xlu0.c.b16.cont [7/8] 0, 128
        %1731 = vxpose.xlu0.c.b16.end [8/8] 0, 128
        %v1732 = vpop.trf.xlu0
        %v1733 = vpop.trf.xlu0
        %v1734 = vpop.trf.xlu0
        %v1735 = vpop.trf.xlu0
        %v1736 = vpop.trf.xlu0
        %v1737 = vpop.trf.xlu0
        %v1738 = vpop.trf.xlu0
        %v1739 = vpop.trf.xlu0
        %1740 = vxpose.xlu0.c.b16.start [1/8] %v1639, 128
        %1741 = vxpose.xlu0.c.b16.cont [2/8] 0, 128
        %1742 = vxpose.xlu0.c.b16.cont [3/8] 0, 128
        %1743 = vxpose.xlu0.c.b16.cont [4/8] 0, 128
        %1744 = vxpose.xlu0.c.b16.cont [5/8] 0, 128
        %1745 = vxpose.xlu0.c.b16.cont [6/8] 0, 128
        %1746 = vxpose.xlu0.c.b16.cont [7/8] 0, 128
        %1747 = vxpose.xlu0.c.b16.end [8/8] 0, 128
        %v1748 = vpop.trf.xlu0
        %v1749 = vpop.trf.xlu0
        %v1750 = vpop.trf.xlu0
        %v1751 = vpop.trf.xlu0
        %v1752 = vpop.trf.xlu0
        %v1753 = vpop.trf.xlu0
        %v1754 = vpop.trf.xlu0
        %v1755 = vpop.trf.xlu0
        %1756 = vxpose.xlu0.c.b16.start [1/8] %v1589, 128
        %1757 = vxpose.xlu0.c.b16.cont [2/8] 0, 128
        %1758 = vxpose.xlu0.c.b16.cont [3/8] 0, 128
        %1759 = vxpose.xlu0.c.b16.cont [4/8] 0, 128
        %1760 = vxpose.xlu0.c.b16.cont [5/8] 0, 128
        %1761 = vxpose.xlu0.c.b16.cont [6/8] 0, 128
        %1762 = vxpose.xlu0.c.b16.cont [7/8] 0, 128
        %1763 = vxpose.xlu0.c.b16.end [8/8] 0, 128
        %v1764 = vpop.trf.xlu0
        %v1765 = vpop.trf.xlu0
        %v1766 = vpop.trf.xlu0
        %v1767 = vpop.trf.xlu0
        %v1768 = vpop.trf.xlu0
        %v1769 = vpop.trf.xlu0
        %v1770 = vpop.trf.xlu0
        %v1771 = vpop.trf.xlu0
        %1772 = vxpose.xlu0.c.b16.start [1/8] %v1657, 128
        %1773 = vxpose.xlu0.c.b16.cont [2/8] 0, 128
        %1774 = vxpose.xlu0.c.b16.cont [3/8] 0, 128
        %1775 = vxpose.xlu0.c.b16.cont [4/8] 0, 128
        %1776 = vxpose.xlu0.c.b16.cont [5/8] 0, 128
        %1777 = vxpose.xlu0.c.b16.cont [6/8] 0, 128
        %1778 = vxpose.xlu0.c.b16.cont [7/8] 0, 128
        %1779 = vxpose.xlu0.c.b16.end [8/8] 0, 128
        %v1780 = vpop.trf.xlu0
        %v1781 = vpop.trf.xlu0
        %v1782 = vpop.trf.xlu0
        %v1783 = vpop.trf.xlu0
        %v1784 = vpop.trf.xlu0
        %v1785 = vpop.trf.xlu0
        %v1786 = vpop.trf.xlu0
        %v1787 = vpop.trf.xlu0
        %1788 = vxpose.xlu0.c.b16.start [1/8] %v1580, 128
        %1789 = vxpose.xlu0.c.b16.cont [2/8] 0, 128
        %1790 = vxpose.xlu0.c.b16.cont [3/8] 0, 128
        %1791 = vxpose.xlu0.c.b16.cont [4/8] 0, 128
        %1792 = vxpose.xlu0.c.b16.cont [5/8] 0, 128
        %1793 = vxpose.xlu0.c.b16.cont [6/8] 0, 128
        %1794 = vxpose.xlu0.c.b16.cont [7/8] 0, 128
        %1795 = vxpose.xlu0.c.b16.end [8/8] 0, 128
        %v1796 = vpop.trf.xlu0
        %v1797 = vpop.trf.xlu0
        %v1798 = vpop.trf.xlu0
        %v1799 = vpop.trf.xlu0
        %v1800 = vpop.trf.xlu0
        %v1801 = vpop.trf.xlu0
        %v1802 = vpop.trf.xlu0
        %v1803 = vpop.trf.xlu0
        %1804 = vxpose.xlu0.c.b16.start [1/8] %v1648, 128
        %1805 = vxpose.xlu0.c.b16.cont [2/8] 0, 128
        %1806 = vxpose.xlu0.c.b16.cont [3/8] 0, 128
        %1807 = vxpose.xlu0.c.b16.cont [4/8] 0, 128
        %1808 = vxpose.xlu0.c.b16.cont [5/8] 0, 128
        %1809 = vxpose.xlu0.c.b16.cont [6/8] 0, 128
        %1810 = vxpose.xlu0.c.b16.cont [7/8] 0, 128
        %1811 = vxpose.xlu0.c.b16.end [8/8] 0, 128
        %v1812 = vpop.trf.xlu0
        %v1813 = vpop.trf.xlu0
        %v1814 = vpop.trf.xlu0
        %v1815 = vpop.trf.xlu0
        %v1816 = vpop.trf.xlu0
        %v1817 = vpop.trf.xlu0
        %v1818 = vpop.trf.xlu0
        %v1819 = vpop.trf.xlu0
        %1820 = vxpose.xlu0.c.b16.start [1/8] %v1590, 128
        %1821 = vxpose.xlu0.c.b16.cont [2/8] 0, 128
        %1822 = vxpose.xlu0.c.b16.cont [3/8] 0, 128
        %1823 = vxpose.xlu0.c.b16.cont [4/8] 0, 128
        %1824 = vxpose.xlu0.c.b16.cont [5/8] 0, 128
        %1825 = vxpose.xlu0.c.b16.cont [6/8] 0, 128
        %1826 = vxpose.xlu0.c.b16.cont [7/8] 0, 128
        %1827 = vxpose.xlu0.c.b16.end [8/8] 0, 128
        %v1828 = vpop.trf.xlu0
        %v1829 = vpop.trf.xlu0
        %v1830 = vpop.trf.xlu0
        %v1831 = vpop.trf.xlu0
        %v1832 = vpop.trf.xlu0
        %v1833 = vpop.trf.xlu0
        %v1834 = vpop.trf.xlu0
        %v1835 = vpop.trf.xlu0
        %1836 = vxpose.xlu0.c.b16.start [1/8] %v1658, 128
        %1837 = vxpose.xlu0.c.b16.cont [2/8] 0, 128
        %1838 = vxpose.xlu0.c.b16.cont [3/8] 0, 128
        %1839 = vxpose.xlu0.c.b16.cont [4/8] 0, 128
        %1840 = vxpose.xlu0.c.b16.cont [5/8] 0, 128
        %1841 = vxpose.xlu0.c.b16.cont [6/8] 0, 128
        %1842 = vxpose.xlu0.c.b16.cont [7/8] 0, 128
        %1843 = vxpose.xlu0.c.b16.end [8/8] 0, 128
        %v1844 = vpop.trf.xlu0
        %v1845 = vpop.trf.xlu0
        %v1846 = vpop.trf.xlu0
        %v1847 = vpop.trf.xlu0
        %v1848 = vpop.trf.xlu0
        %v1849 = vpop.trf.xlu0
        %v1850 = vpop.trf.xlu0
        %v1851 = vpop.trf.xlu0
        %1852 = vxpose.xlu0.c.b16.start [1/8] %v1587, 128
        %1853 = vxpose.xlu0.c.b16.cont [2/8] 0, 128
        %1854 = vxpose.xlu0.c.b16.cont [3/8] 0, 128
        %1855 = vxpose.xlu0.c.b16.cont [4/8] 0, 128
        %1856 = vxpose.xlu0.c.b16.cont [5/8] 0, 128
        %1857 = vxpose.xlu0.c.b16.cont [6/8] 0, 128
        %1858 = vxpose.xlu0.c.b16.cont [7/8] 0, 128
        %1859 = vxpose.xlu0.c.b16.end [8/8] 0, 128
        %v1860 = vpop.trf.xlu0
        %v1861 = vpop.trf.xlu0
        %v1862 = vpop.trf.xlu0
        %v1863 = vpop.trf.xlu0
        %v1864 = vpop.trf.xlu0
        %v1865 = vpop.trf.xlu0
        %v1866 = vpop.trf.xlu0
        %v1867 = vpop.trf.xlu0
        %1868 = vxpose.xlu0.c.b16.start [1/8] %v1655, 128
        %1869 = vxpose.xlu0.c.b16.cont [2/8] 0, 128
        %1870 = vxpose.xlu0.c.b16.cont [3/8] 0, 128
        %1871 = vxpose.xlu0.c.b16.cont [4/8] 0, 128
        %1872 = vxpose.xlu0.c.b16.cont [5/8] 0, 128
        %1873 = vxpose.xlu0.c.b16.cont [6/8] 0, 128
        %1874 = vxpose.xlu0.c.b16.cont [7/8] 0, 128
        %1875 = vxpose.xlu0.c.b16.end [8/8] 0, 128
        %v1876 = vpop.trf.xlu0
        %v1877 = vpop.trf.xlu0
        %v1878 = vpop.trf.xlu0
        %v1879 = vpop.trf.xlu0
        %v1880 = vpop.trf.xlu0
        %v1881 = vpop.trf.xlu0
        %v1882 = vpop.trf.xlu0
        %v1883 = vpop.trf.xlu0
        %1884 = vxpose.xlu0.c.b16.start [1/8] %v1591, 128
        %1885 = vxpose.xlu0.c.b16.cont [2/8] 0, 128
        %1886 = vxpose.xlu0.c.b16.cont [3/8] 0, 128
        %1887 = vxpose.xlu0.c.b16.cont [4/8] 0, 128
        %1888 = vxpose.xlu0.c.b16.cont [5/8] 0, 128
        %1889 = vxpose.xlu0.c.b16.cont [6/8] 0, 128
        %1890 = vxpose.xlu0.c.b16.cont [7/8] 0, 128
        %1891 = vxpose.xlu0.c.b16.end [8/8] 0, 128
        %v1892 = vpop.trf.xlu0
        %v1893 = vpop.trf.xlu0
        %v1894 = vpop.trf.xlu0
        %v1895 = vpop.trf.xlu0
        %v1896 = vpop.trf.xlu0
        %v1897 = vpop.trf.xlu0
        %v1898 = vpop.trf.xlu0
        %v1899 = vpop.trf.xlu0
        %1900 = vxpose.xlu0.c.b16.start [1/8] %v1659, 128
        %1901 = vxpose.xlu0.c.b16.cont [2/8] 0, 128
        %1902 = vxpose.xlu0.c.b16.cont [3/8] 0, 128
        %1903 = vxpose.xlu0.c.b16.cont [4/8] 0, 128
        %1904 = vxpose.xlu0.c.b16.cont [5/8] 0, 128
        %1905 = vxpose.xlu0.c.b16.cont [6/8] 0, 128
        %1906 = vxpose.xlu0.c.b16.cont [7/8] 0, 128
        %1907 = vxpose.xlu0.c.b16.end [8/8] 0, 128
        %v1908 = vpop.trf.xlu0
        %v1909 = vpop.trf.xlu0
        %v1910 = vpop.trf.xlu0
        %v1911 = vpop.trf.xlu0
        %v1912 = vpop.trf.xlu0
        %v1913 = vpop.trf.xlu0
        %v1914 = vpop.trf.xlu0
        %v1915 = vpop.trf.xlu0
        %v1916 = vcombine.low %v1668, %v1732
        %v1918 = vunpack.c.l.s4 1983009808
        %v1919 = vunpack.c.0.s8 %v1918
        %v1920 = vlaneseq
        %v1921 = vshrl.u32 %v1920, 7
        %v1922 = vsub.s32 %v1919, %v1921
        %v1923 = vrot.slane %v1916, %v1922
        %v1924 = vcombine.low %v1700, %v1764
        %v1926 = vunpack.c.l.s4 1983009808
        %v1927 = vunpack.c.0.s8 %v1926
        %v1928 = vlaneseq
        %v1929 = vshrl.u32 %v1928, 7
        %v1930 = vsub.s32 %v1927, %v1929
        %v1931 = vrot.slane %v1924, %v1930
        %v1932 = vcombine.low %v1796, %v1860
        %v1934 = vunpack.c.l.s4 1983009808
        %v1935 = vunpack.c.0.s8 %v1934
        %v1936 = vlaneseq
        %v1937 = vshrl.u32 %v1936, 7
        %v1938 = vsub.s32 %v1935, %v1937
        %v1939 = vrot.slane %v1932, %v1938
        %v1940 = vcombine.low %v1828, %v1892
        %v1942 = vunpack.c.l.s4 1983009808
        %v1943 = vunpack.c.0.s8 %v1942
        %v1944 = vlaneseq
        %v1945 = vshrl.u32 %v1944, 7
        %v1946 = vsub.s32 %v1943, %v1945
        %v1947 = vrot.slane %v1940, %v1946
        %v1948 = vcombine.low %v1923, %v1931
        %v1950 = vunpack.c.l.s4 1934713408
        %v1951 = vunpack.c.0.s8 %v1950
        %v1952 = vlaneseq
        %v1953 = vshrl.u32 %v1952, 7
        %v1954 = vsub.s32 %v1951, %v1953
        %v1955 = vrot.slane %v1948, %v1954
        %v1956 = vcombine.low %v1939, %v1947
        %v1958 = vunpack.c.l.s4 1934713408
        %v1959 = vunpack.c.0.s8 %v1958
        %v1960 = vlaneseq
        %v1961 = vshrl.u32 %v1960, 7
        %v1962 = vsub.s32 %v1959, %v1961
        %v1963 = vrot.slane %v1956, %v1962
        %v1964 = vcombine.low %v1955, %v1963
        %v1965 = vcombine.high %v1955, %v1963
        %v1966 = vcombine.low %v1684, %v1748
        %v1968 = vunpack.c.l.s4 1983009808
        %v1969 = vunpack.c.0.s8 %v1968
        %v1970 = vlaneseq
        %v1971 = vshrl.u32 %v1970, 7
        %v1972 = vsub.s32 %v1969, %v1971
        %v1973 = vrot.slane %v1966, %v1972
        %v1974 = vcombine.low %v1716, %v1780
        %v1976 = vunpack.c.l.s4 1983009808
        %v1977 = vunpack.c.0.s8 %v1976
        %v1978 = vlaneseq
        %v1979 = vshrl.u32 %v1978, 7
        %v1980 = vsub.s32 %v1977, %v1979
        %v1981 = vrot.slane %v1974, %v1980
        %v1982 = vcombine.low %v1812, %v1876
        %v1984 = vunpack.c.l.s4 1983009808
        %v1985 = vunpack.c.0.s8 %v1984
        %v1986 = vlaneseq
        %v1987 = vshrl.u32 %v1986, 7
        %v1988 = vsub.s32 %v1985, %v1987
        %v1989 = vrot.slane %v1982, %v1988
        %v1990 = vcombine.low %v1844, %v1908
        %v1992 = vunpack.c.l.s4 1983009808
        %v1993 = vunpack.c.0.s8 %v1992
        %v1994 = vlaneseq
        %v1995 = vshrl.u32 %v1994, 7
        %v1996 = vsub.s32 %v1993, %v1995
        %v1997 = vrot.slane %v1990, %v1996
        %v1998 = vcombine.low %v1973, %v1981
        %v2000 = vunpack.c.l.s4 1934713408
        %v2001 = vunpack.c.0.s8 %v2000
        %v2002 = vlaneseq
        %v2003 = vshrl.u32 %v2002, 7
        %v2004 = vsub.s32 %v2001, %v2003
        %v2005 = vrot.slane %v1998, %v2004
        %v2006 = vcombine.low %v1989, %v1997
        %v2008 = vunpack.c.l.s4 1934713408
        %v2009 = vunpack.c.0.s8 %v2008
        %v2010 = vlaneseq
        %v2011 = vshrl.u32 %v2010, 7
        %v2012 = vsub.s32 %v2009, %v2011
        %v2013 = vrot.slane %v2006, %v2012
        %v2014 = vcombine.low %v2005, %v2013
        %v2015 = vcombine.high %v2005, %v2013
        %v2018 = vpack.i.b16 %v2014, %v1964
        %v2020 = vshrl.u32 %v1964, 16
        %v2021 = vshrl.u32 %v2014, 16
        %v2022 = vpack.i.b16 %v2021, %v2020
        %v2026 = vpack.i.b16 %v2015, %v1965
        %v2028 = vshrl.u32 %v1965, 16
        %v2029 = vshrl.u32 %v2015, 16
        %v2030 = vpack.i.b16 %v2029, %v2028
        %vm2032 = vcmask 130048
        %v2034 = vsel %vm2032, %v1354, 0
        %2036 = vmatprep.subr.bf16.mxu0 0
        %2037 = vmatpush1.bf16.msra.mxu0 %v2018
        %2038 = vmatprep.subr.bf16.mxu0 0
        %2039 = vmatpush1.bf16.msra.mxu0 0
        %2040 = vmatprep.subr.bf16.mxu0 0
        %2041 = vmatpush1.bf16.msra.mxu0 0
        %2042 = vmatprep.subr.bf16.mxu0 0
        %2043 = vmatpush1.bf16.msra.mxu0 0
        %2044 = vmatprep.subr.bf16.mxu0 0
        %2045 = vmatpush1.bf16.msra.mxu0 0
        %2046 = vmatprep.subr.bf16.mxu0 0
        %2047 = vmatpush1.bf16.msra.mxu0 0
        %2048 = vmatprep.subr.bf16.mxu0 0
        %2049 = vmatpush1.bf16.msra.mxu0 0
        %2050 = vmatprep.subr.bf16.mxu0 0
        %2051 = vmatpush1.bf16.msra.mxu0 0
        %2052 = vmatprep.subr.bf16.mxu0 0
        %2053 = vmatpush1.bf16.msra.mxu0 0
        %2054 = vmatprep.subr.bf16.mxu0 0
        %2055 = vmatpush1.bf16.msra.mxu0 0
        %2056 = vmatprep.subr.bf16.mxu0 0
        %2057 = vmatpush1.bf16.msra.mxu0 0
        %2058 = vmatprep.subr.bf16.mxu0 0
        %2059 = vmatpush1.bf16.msra.mxu0 0
        %2060 = vmatprep.subr.bf16.mxu0 0
        %2061 = vmatpush1.bf16.msra.mxu0 0
        %2062 = vmatprep.subr.bf16.mxu0 0
        %2063 = vmatpush1.bf16.msra.mxu0 0
        %2064 = vmatprep.subr.bf16.mxu0 0
        %2065 = vmatpush1.bf16.msra.mxu0 0
        %2066 = vmatprep.subr.bf16.mxu0 0
        %2067 = vmatpush1.bf16.msra.mxu0 0
        %2068 = vmatprep.mubr.bf16.mxu0 0
        %2069 = vmatmul.mubr.bf16.gmra.mrb[0].mxu0 %v2034
        %v2070 = vpop.f32.mrb[0].mxu0
        %v2071 = vadd.f32 0.0, %v2070
        %v2072 = vpop.f32.mrb[0].mxu0
        %v2073 = vpop.f32.mrb[0].mxu0
        %v2074 = vpop.f32.mrb[0].mxu0
        %2075 = vdwg.mxu0
        %v2077 = vsel %vm2032, %v1357, 0
        %2079 = vmatprep.subr.bf16.mxu0 0
        %2080 = vmatpush1.bf16.msra.mxu0 %v2022
        %2081 = vmatprep.subr.bf16.mxu0 0
        %2082 = vmatpush1.bf16.msra.mxu0 0
        %2083 = vmatprep.subr.bf16.mxu0 0
        %2084 = vmatpush1.bf16.msra.mxu0 0
        %2085 = vmatprep.subr.bf16.mxu0 0
        %2086 = vmatpush1.bf16.msra.mxu0 0
        %2087 = vmatprep.subr.bf16.mxu0 0
        %2088 = vmatpush1.bf16.msra.mxu0 0
        %2089 = vmatprep.subr.bf16.mxu0 0
        %2090 = vmatpush1.bf16.msra.mxu0 0
        %2091 = vmatprep.subr.bf16.mxu0 0
        %2092 = vmatpush1.bf16.msra.mxu0 0
        %2093 = vmatprep.subr.bf16.mxu0 0
        %2094 = vmatpush1.bf16.msra.mxu0 0
        %2095 = vmatprep.subr.bf16.mxu0 0
        %2096 = vmatpush1.bf16.msra.mxu0 0
        %2097 = vmatprep.subr.bf16.mxu0 0
        %2098 = vmatpush1.bf16.msra.mxu0 0
        %2099 = vmatprep.subr.bf16.mxu0 0
        %2100 = vmatpush1.bf16.msra.mxu0 0
        %2101 = vmatprep.subr.bf16.mxu0 0
        %2102 = vmatpush1.bf16.msra.mxu0 0
        %2103 = vmatprep.subr.bf16.mxu0 0
        %2104 = vmatpush1.bf16.msra.mxu0 0
        %2105 = vmatprep.subr.bf16.mxu0 0
        %2106 = vmatpush1.bf16.msra.mxu0 0
        %2107 = vmatprep.subr.bf16.mxu0 0
        %2108 = vmatpush1.bf16.msra.mxu0 0
        %2109 = vmatprep.subr.bf16.mxu0 0
        %2110 = vmatpush1.bf16.msra.mxu0 0
        %2111 = vmatprep.mubr.bf16.mxu0 0
        %2112 = vmatmul.mubr.bf16.gmra.mrb[0].mxu0 %v2077
        %v2113 = vpop.f32.mrb[0].mxu0
        %v2114 = vadd.f32 0.0, %v2113
        %v2115 = vpop.f32.mrb[0].mxu0
        %v2116 = vpop.f32.mrb[0].mxu0
        %v2117 = vpop.f32.mrb[0].mxu0
        %2118 = vdwg.mxu0
        %v2120 = vsel %vm2032, %v1360, 0
        %2122 = vmatprep.subr.bf16.mxu0 0
        %2123 = vmatpush1.bf16.msra.mxu0 %v2026
        %2124 = vmatprep.subr.bf16.mxu0 0
        %2125 = vmatpush1.bf16.msra.mxu0 0
        %2126 = vmatprep.subr.bf16.mxu0 0
        %2127 = vmatpush1.bf16.msra.mxu0 0
        %2128 = vmatprep.subr.bf16.mxu0 0
        %2129 = vmatpush1.bf16.msra.mxu0 0
        %2130 = vmatprep.subr.bf16.mxu0 0
        %2131 = vmatpush1.bf16.msra.mxu0 0
        %2132 = vmatprep.subr.bf16.mxu0 0
        %2133 = vmatpush1.bf16.msra.mxu0 0
        %2134 = vmatprep.subr.bf16.mxu0 0
        %2135 = vmatpush1.bf16.msra.mxu0 0
        %2136 = vmatprep.subr.bf16.mxu0 0
        %2137 = vmatpush1.bf16.msra.mxu0 0
        %2138 = vmatprep.subr.bf16.mxu0 0
        %2139 = vmatpush1.bf16.msra.mxu0 0
        %2140 = vmatprep.subr.bf16.mxu0 0
        %2141 = vmatpush1.bf16.msra.mxu0 0
        %2142 = vmatprep.subr.bf16.mxu0 0
        %2143 = vmatpush1.bf16.msra.mxu0 0
        %2144 = vmatprep.subr.bf16.mxu0 0
        %2145 = vmatpush1.bf16.msra.mxu0 0
        %2146 = vmatprep.subr.bf16.mxu0 0
        %2147 = vmatpush1.bf16.msra.mxu0 0
        %2148 = vmatprep.subr.bf16.mxu0 0
        %2149 = vmatpush1.bf16.msra.mxu0 0
        %2150 = vmatprep.subr.bf16.mxu0 0
        %2151 = vmatpush1.bf16.msra.mxu0 0
        %2152 = vmatprep.subr.bf16.mxu0 0
        %2153 = vmatpush1.bf16.msra.mxu0 0
        %2154 = vmatprep.mubr.bf16.mxu0 0
        %2155 = vmatmul.mubr.bf16.gmra.mrb[0].mxu0 %v2120
        %v2156 = vpop.f32.mrb[0].mxu0
        %v2157 = vadd.f32 0.0, %v2156
        %v2158 = vpop.f32.mrb[0].mxu0
        %v2159 = vpop.f32.mrb[0].mxu0
        %v2160 = vpop.f32.mrb[0].mxu0
        %2161 = vdwg.mxu0
        %v2163 = vsel %vm2032, %v1363, 0
        %2165 = vmatprep.subr.bf16.mxu0 0
        %2166 = vmatpush1.bf16.msra.mxu0 %v2030
        %2167 = vmatprep.subr.bf16.mxu0 0
        %2168 = vmatpush1.bf16.msra.mxu0 0
        %2169 = vmatprep.subr.bf16.mxu0 0
        %2170 = vmatpush1.bf16.msra.mxu0 0
        %2171 = vmatprep.subr.bf16.mxu0 0
        %2172 = vmatpush1.bf16.msra.mxu0 0
        %2173 = vmatprep.subr.bf16.mxu0 0
        %2174 = vmatpush1.bf16.msra.mxu0 0
        %2175 = vmatprep.subr.bf16.mxu0 0
        %2176 = vmatpush1.bf16.msra.mxu0 0
        %2177 = vmatprep.subr.bf16.mxu0 0
        %2178 = vmatpush1.bf16.msra.mxu0 0
        %2179 = vmatprep.subr.bf16.mxu0 0
        %2180 = vmatpush1.bf16.msra.mxu0 0
        %2181 = vmatprep.subr.bf16.mxu0 0
        %2182 = vmatpush1.bf16.msra.mxu0 0
        %2183 = vmatprep.subr.bf16.mxu0 0
        %2184 = vmatpush1.bf16.msra.mxu0 0
        %2185 = vmatprep.subr.bf16.mxu0 0
        %2186 = vmatpush1.bf16.msra.mxu0 0
        %2187 = vmatprep.subr.bf16.mxu0 0
        %2188 = vmatpush1.bf16.msra.mxu0 0
        %2189 = vmatprep.subr.bf16.mxu0 0
        %2190 = vmatpush1.bf16.msra.mxu0 0
        %2191 = vmatprep.subr.bf16.mxu0 0
        %2192 = vmatpush1.bf16.msra.mxu0 0
        %2193 = vmatprep.subr.bf16.mxu0 0
        %2194 = vmatpush1.bf16.msra.mxu0 0
        %2195 = vmatprep.subr.bf16.mxu0 0
        %2196 = vmatpush1.bf16.msra.mxu0 0
        %2197 = vmatprep.mubr.bf16.mxu0 0
        %2198 = vmatmul.mubr.bf16.gmra.mrb[0].mxu0 %v2163
        %v2199 = vpop.f32.mrb[0].mxu0
        %v2200 = vadd.f32 0.0, %v2199
        %v2201 = vpop.f32.mrb[0].mxu0
        %v2202 = vpop.f32.mrb[0].mxu0
        %v2203 = vpop.f32.mrb[0].mxu0
        %2204 = vdwg.mxu0
        %v2205 = vlaneseq
        %v2206 = vand.u32 %v2205, 127
        %vm2207 = vcmp.lt.s32.totalorder %v2206, 5
        %v2208 = vsel %vm2207, %v2071, -1e+30
        %v2209 = vsel %vm2207, %v2114, -1e+30
        %v2210 = vsel %vm2207, %v2157, -1e+30
        %v2211 = vsel %vm2207, %v2200, -1e+30
        %vm2212 = vcmask 64512
        %v2213 = vsel %vm2212, %v2208, -inf
        %2214 = vmax.xlane.f32.xlu0 %v2213
        %v2215 = vpop.xlane.xlu0 %2214
        %v2216 = vsel %vm2212, %v2209, -inf
        %2217 = vmax.xlane.f32.xlu0 %v2216
        %v2218 = vpop.xlane.xlu0 %2217
        %v2219 = vsel %vm2212, %v2210, -inf
        %2220 = vmax.xlane.f32.xlu0 %v2219
        %v2221 = vpop.xlane.xlu0 %2220
        %v2222 = vsel %vm2212, %v2211, -inf
        %2223 = vmax.xlane.f32.xlu0 %v2222
        %v2224 = vpop.xlane.xlu0 %2223
        %v2225 = vsub.f32 %v2208, %v2215
        %v2226 = vsub.f32 %v2209, %v2218
        %v2227 = vsub.f32 %v2210, %v2221
        %v2228 = vsub.f32 %v2211, %v2224
        %v2229 = vmul.f32 %v2225, 1.442695
        %v2230 = vpow.pop %v2229
        %v2231 = vmul.f32 %v2226, 1.442695
        %v2232 = vpow.pop %v2231
        %v2233 = vmul.f32 %v2227, 1.442695
        %v2234 = vpow.pop %v2233
        %v2235 = vmul.f32 %v2228, 1.442695
        %v2236 = vpow.pop %v2235
        %v2237 = vsel %vm2212, %v2230, 0.0
        %2238 = vadd.xlane.f32.xlu0 %v2237
        %v2239 = vpop.xlane.xlu0 %2238
        %v2240 = vsel %vm2212, %v2232, 0.0
        %2241 = vadd.xlane.f32.xlu0 %v2240
        %v2242 = vpop.xlane.xlu0 %2241
        %v2243 = vsel %vm2212, %v2234, 0.0
        %2244 = vadd.xlane.f32.xlu0 %v2243
        %v2245 = vpop.xlane.xlu0 %2244
        %v2246 = vsel %vm2212, %v2236, 0.0
        %2247 = vadd.xlane.f32.xlu0 %v2246
        %v2248 = vpop.xlane.xlu0 %2247
        %v2249 = vrcp.pop %v2239
        %v2250 = vrcp.pop %v2242
        %v2251 = vrcp.pop %v2245
        %v2252 = vrcp.pop %v2248
        %v2253 = vmul.f32 %v2230, %v2249
        %v2254 = vmul.f32 %v2232, %v2250
        %v2255 = vmul.f32 %v2234, %v2251
        %v2256 = vmul.f32 %v2236, %v2252
        %v2257 = vpack.c.bf16 %v2253, %v2253
        %v2258 = vpack.c.bf16 %v2254, %v2254
        %v2259 = vpack.c.bf16 %v2255, %v2255
        %v2260 = vpack.c.bf16 %v2256, %v2256
        %v2261 = vpack.c.bf16 %v1258, %v1258
        %v2262 = vpack.c.bf16 %v1282, %v1282
        %v2263 = vpack.c.bf16 %v1265, %v1265
        %v2264 = vpack.c.bf16 %v1283, %v1283
        %v2265 = vpack.c.bf16 %v1274, %v1274
        %v2266 = vpack.c.bf16 %v1284, %v1284
        %v2267 = vpack.c.bf16 %v1281, %v1281
        %v2268 = vpack.c.bf16 %v1285, %v1285
        %2269 = vxpose.xlu0.c.b16.start [1/8] %v2261, 128
        %2270 = vxpose.xlu0.c.b16.cont [2/8] 0, 128
        %2271 = vxpose.xlu0.c.b16.cont [3/8] 0, 128
        %2272 = vxpose.xlu0.c.b16.cont [4/8] 0, 128
        %2273 = vxpose.xlu0.c.b16.cont [5/8] 0, 128
        %2274 = vxpose.xlu0.c.b16.cont [6/8] 0, 128
        %2275 = vxpose.xlu0.c.b16.cont [7/8] 0, 128
        %2276 = vxpose.xlu0.c.b16.end [8/8] 0, 128
        %v2277 = vpop.trf.xlu0
        %v2278 = vpop.trf.xlu0
        %v2279 = vpop.trf.xlu0
        %v2280 = vpop.trf.xlu0
        %v2281 = vpop.trf.xlu0
        %v2282 = vpop.trf.xlu0
        %v2283 = vpop.trf.xlu0
        %v2284 = vpop.trf.xlu0
        %2285 = vxpose.xlu0.c.b16.start [1/8] %v2262, 128
        %2286 = vxpose.xlu0.c.b16.cont [2/8] 0, 128
        %2287 = vxpose.xlu0.c.b16.cont [3/8] 0, 128
        %2288 = vxpose.xlu0.c.b16.cont [4/8] 0, 128
        %2289 = vxpose.xlu0.c.b16.cont [5/8] 0, 128
        %2290 = vxpose.xlu0.c.b16.cont [6/8] 0, 128
        %2291 = vxpose.xlu0.c.b16.cont [7/8] 0, 128
        %2292 = vxpose.xlu0.c.b16.end [8/8] 0, 128
        %v2293 = vpop.trf.xlu0
        %v2294 = vpop.trf.xlu0
        %v2295 = vpop.trf.xlu0
        %v2296 = vpop.trf.xlu0
        %v2297 = vpop.trf.xlu0
        %v2298 = vpop.trf.xlu0
        %v2299 = vpop.trf.xlu0
        %v2300 = vpop.trf.xlu0
        %2301 = vxpose.xlu0.c.b16.start [1/8] %v2263, 128
        %2302 = vxpose.xlu0.c.b16.cont [2/8] 0, 128
        %2303 = vxpose.xlu0.c.b16.cont [3/8] 0, 128
        %2304 = vxpose.xlu0.c.b16.cont [4/8] 0, 128
        %2305 = vxpose.xlu0.c.b16.cont [5/8] 0, 128
        %2306 = vxpose.xlu0.c.b16.cont [6/8] 0, 128
        %2307 = vxpose.xlu0.c.b16.cont [7/8] 0, 128
        %2308 = vxpose.xlu0.c.b16.end [8/8] 0, 128
        %v2309 = vpop.trf.xlu0
        %v2310 = vpop.trf.xlu0
        %v2311 = vpop.trf.xlu0
        %v2312 = vpop.trf.xlu0
        %v2313 = vpop.trf.xlu0
        %v2314 = vpop.trf.xlu0
        %v2315 = vpop.trf.xlu0
        %v2316 = vpop.trf.xlu0
        %2317 = vxpose.xlu0.c.b16.start [1/8] %v2264, 128
        %2318 = vxpose.xlu0.c.b16.cont [2/8] 0, 128
        %2319 = vxpose.xlu0.c.b16.cont [3/8] 0, 128
        %2320 = vxpose.xlu0.c.b16.cont [4/8] 0, 128
        %2321 = vxpose.xlu0.c.b16.cont [5/8] 0, 128
        %2322 = vxpose.xlu0.c.b16.cont [6/8] 0, 128
        %2323 = vxpose.xlu0.c.b16.cont [7/8] 0, 128
        %2324 = vxpose.xlu0.c.b16.end [8/8] 0, 128
        %v2325 = vpop.trf.xlu0
        %v2326 = vpop.trf.xlu0
        %v2327 = vpop.trf.xlu0
        %v2328 = vpop.trf.xlu0
        %v2329 = vpop.trf.xlu0
        %v2330 = vpop.trf.xlu0
        %v2331 = vpop.trf.xlu0
        %v2332 = vpop.trf.xlu0
        %2333 = vxpose.xlu0.c.b16.start [1/8] %v2265, 128
        %2334 = vxpose.xlu0.c.b16.cont [2/8] 0, 128
        %2335 = vxpose.xlu0.c.b16.cont [3/8] 0, 128
        %2336 = vxpose.xlu0.c.b16.cont [4/8] 0, 128
        %2337 = vxpose.xlu0.c.b16.cont [5/8] 0, 128
        %2338 = vxpose.xlu0.c.b16.cont [6/8] 0, 128
        %2339 = vxpose.xlu0.c.b16.cont [7/8] 0, 128
        %2340 = vxpose.xlu0.c.b16.end [8/8] 0, 128
        %v2341 = vpop.trf.xlu0
        %v2342 = vpop.trf.xlu0
        %v2343 = vpop.trf.xlu0
        %v2344 = vpop.trf.xlu0
        %v2345 = vpop.trf.xlu0
        %v2346 = vpop.trf.xlu0
        %v2347 = vpop.trf.xlu0
        %v2348 = vpop.trf.xlu0
        %2349 = vxpose.xlu0.c.b16.start [1/8] %v2266, 128
        %2350 = vxpose.xlu0.c.b16.cont [2/8] 0, 128
        %2351 = vxpose.xlu0.c.b16.cont [3/8] 0, 128
        %2352 = vxpose.xlu0.c.b16.cont [4/8] 0, 128
        %2353 = vxpose.xlu0.c.b16.cont [5/8] 0, 128
        %2354 = vxpose.xlu0.c.b16.cont [6/8] 0, 128
        %2355 = vxpose.xlu0.c.b16.cont [7/8] 0, 128
        %2356 = vxpose.xlu0.c.b16.end [8/8] 0, 128
        %v2357 = vpop.trf.xlu0
        %v2358 = vpop.trf.xlu0
        %v2359 = vpop.trf.xlu0
        %v2360 = vpop.trf.xlu0
        %v2361 = vpop.trf.xlu0
        %v2362 = vpop.trf.xlu0
        %v2363 = vpop.trf.xlu0
        %v2364 = vpop.trf.xlu0
        %2365 = vxpose.xlu0.c.b16.start [1/8] %v2267, 128
        %2366 = vxpose.xlu0.c.b16.cont [2/8] 0, 128
        %2367 = vxpose.xlu0.c.b16.cont [3/8] 0, 128
        %2368 = vxpose.xlu0.c.b16.cont [4/8] 0, 128
        %2369 = vxpose.xlu0.c.b16.cont [5/8] 0, 128
        %2370 = vxpose.xlu0.c.b16.cont [6/8] 0, 128
        %2371 = vxpose.xlu0.c.b16.cont [7/8] 0, 128
        %2372 = vxpose.xlu0.c.b16.end [8/8] 0, 128
        %v2373 = vpop.trf.xlu0
        %v2374 = vpop.trf.xlu0
        %v2375 = vpop.trf.xlu0
        %v2376 = vpop.trf.xlu0
        %v2377 = vpop.trf.xlu0
        %v2378 = vpop.trf.xlu0
        %v2379 = vpop.trf.xlu0
        %v2380 = vpop.trf.xlu0
        %2381 = vxpose.xlu0.c.b16.start [1/8] %v2268, 128
        %2382 = vxpose.xlu0.c.b16.cont [2/8] 0, 128
        %2383 = vxpose.xlu0.c.b16.cont [3/8] 0, 128
        %2384 = vxpose.xlu0.c.b16.cont [4/8] 0, 128
        %2385 = vxpose.xlu0.c.b16.cont [5/8] 0, 128
        %2386 = vxpose.xlu0.c.b16.cont [6/8] 0, 128
        %2387 = vxpose.xlu0.c.b16.cont [7/8] 0, 128
        %2388 = vxpose.xlu0.c.b16.end [8/8] 0, 128
        %v2389 = vpop.trf.xlu0
        %v2390 = vpop.trf.xlu0
        %v2391 = vpop.trf.xlu0
        %v2392 = vpop.trf.xlu0
        %v2393 = vpop.trf.xlu0
        %v2394 = vpop.trf.xlu0
        %v2395 = vpop.trf.xlu0
        %v2396 = vpop.trf.xlu0
        %v2399 = vpack.i.b16 %v2293, %v2277
        %v2401 = vshrl.u32 %v2277, 16
        %v2402 = vshrl.u32 %v2293, 16
        %v2403 = vpack.i.b16 %v2402, %v2401
        %v2407 = vpack.i.b16 %v2325, %v2309
        %v2409 = vshrl.u32 %v2309, 16
        %v2410 = vshrl.u32 %v2325, 16
        %v2411 = vpack.i.b16 %v2410, %v2409
        %v2415 = vpack.i.b16 %v2357, %v2341
        %v2417 = vshrl.u32 %v2341, 16
        %v2418 = vshrl.u32 %v2357, 16
        %v2419 = vpack.i.b16 %v2418, %v2417
        %v2423 = vpack.i.b16 %v2389, %v2373
        %v2425 = vshrl.u32 %v2373, 16
        %v2426 = vshrl.u32 %v2389, 16
        %v2427 = vpack.i.b16 %v2426, %v2425
        %v2429 = vcombine.low %v2399, %v2415
        %v2430 = vcombine.high %v2399, %v2415
        %v2432 = vunpack.c.l.s4 1983009808
        %v2433 = vunpack.c.0.s8 %v2432
        %v2434 = vlaneseq
        %v2435 = vshrl.u32 %v2434, 7
        %v2436 = vsub.s32 %v2433, %v2435
        %v2437 = vrot.slane %v2429, %v2436
        %v2439 = vunpack.c.l.s4 1983009808
        %v2440 = vunpack.c.0.s8 %v2439
        %v2441 = vlaneseq
        %v2442 = vshrl.u32 %v2441, 7
        %v2443 = vsub.s32 %v2440, %v2442
        %v2444 = vrot.slane %v2430, %v2443
        %v2445 = vcombine.low %v2407, %v2423
        %v2446 = vcombine.high %v2407, %v2423
        %v2448 = vunpack.c.l.s4 1983009808
        %v2449 = vunpack.c.0.s8 %v2448
        %v2450 = vlaneseq
        %v2451 = vshrl.u32 %v2450, 7
        %v2452 = vsub.s32 %v2449, %v2451
        %v2453 = vrot.slane %v2445, %v2452
        %v2455 = vunpack.c.l.s4 1983009808
        %v2456 = vunpack.c.0.s8 %v2455
        %v2457 = vlaneseq
        %v2458 = vshrl.u32 %v2457, 7
        %v2459 = vsub.s32 %v2456, %v2458
        %v2460 = vrot.slane %v2446, %v2459
        %v2461 = vcombine.low %v2437, %v2453
        %v2462 = vcombine.high %v2437, %v2453
        %v2464 = vunpack.c.l.s4 1934713408
        %v2465 = vunpack.c.0.s8 %v2464
        %v2466 = vlaneseq
        %v2467 = vshrl.u32 %v2466, 7
        %v2468 = vsub.s32 %v2465, %v2467
        %v2469 = vrot.slane %v2461, %v2468
        %v2471 = vunpack.c.l.s4 1934713408
        %v2472 = vunpack.c.0.s8 %v2471
        %v2473 = vlaneseq
        %v2474 = vshrl.u32 %v2473, 7
        %v2475 = vsub.s32 %v2472, %v2474
        %v2476 = vrot.slane %v2462, %v2475
        %v2477 = vcombine.low %v2444, %v2460
        %v2478 = vcombine.high %v2444, %v2460
        %v2480 = vunpack.c.l.s4 1934713408
        %v2481 = vunpack.c.0.s8 %v2480
        %v2482 = vlaneseq
        %v2483 = vshrl.u32 %v2482, 7
        %v2484 = vsub.s32 %v2481, %v2483
        %v2485 = vrot.slane %v2477, %v2484
        %v2487 = vunpack.c.l.s4 1934713408
        %v2488 = vunpack.c.0.s8 %v2487
        %v2489 = vlaneseq
        %v2490 = vshrl.u32 %v2489, 7
        %v2491 = vsub.s32 %v2488, %v2490
        %v2492 = vrot.slane %v2478, %v2491
        %v2493 = vcombine.high %v2469, 0
        %v2494 = vcombine.high %v2476, 0
        %v2495 = vcombine.high %v2485, 0
        %v2496 = vcombine.high %v2492, 0
        %v2497 = vcombine.low %v2403, %v2419
        %v2498 = vcombine.high %v2403, %v2419
        %v2500 = vunpack.c.l.s4 1983009808
        %v2501 = vunpack.c.0.s8 %v2500
        %v2502 = vlaneseq
        %v2503 = vshrl.u32 %v2502, 7
        %v2504 = vsub.s32 %v2501, %v2503
        %v2505 = vrot.slane %v2497, %v2504
        %v2507 = vunpack.c.l.s4 1983009808
        %v2508 = vunpack.c.0.s8 %v2507
        %v2509 = vlaneseq
        %v2510 = vshrl.u32 %v2509, 7
        %v2511 = vsub.s32 %v2508, %v2510
        %v2512 = vrot.slane %v2498, %v2511
        %v2513 = vcombine.low %v2411, %v2427
        %v2514 = vcombine.high %v2411, %v2427
        %v2516 = vunpack.c.l.s4 1983009808
        %v2517 = vunpack.c.0.s8 %v2516
        %v2518 = vlaneseq
        %v2519 = vshrl.u32 %v2518, 7
        %v2520 = vsub.s32 %v2517, %v2519
        %v2521 = vrot.slane %v2513, %v2520
        %v2523 = vunpack.c.l.s4 1983009808
        %v2524 = vunpack.c.0.s8 %v2523
        %v2525 = vlaneseq
        %v2526 = vshrl.u32 %v2525, 7
        %v2527 = vsub.s32 %v2524, %v2526
        %v2528 = vrot.slane %v2514, %v2527
        %v2529 = vcombine.low %v2505, %v2521
        %v2530 = vcombine.high %v2505, %v2521
        %v2532 = vunpack.c.l.s4 1934713408
        %v2533 = vunpack.c.0.s8 %v2532
        %v2534 = vlaneseq
        %v2535 = vshrl.u32 %v2534, 7
        %v2536 = vsub.s32 %v2533, %v2535
        %v2537 = vrot.slane %v2529, %v2536
        %v2539 = vunpack.c.l.s4 1934713408
        %v2540 = vunpack.c.0.s8 %v2539
        %v2541 = vlaneseq
        %v2542 = vshrl.u32 %v2541, 7
        %v2543 = vsub.s32 %v2540, %v2542
        %v2544 = vrot.slane %v2530, %v2543
        %v2545 = vcombine.low %v2512, %v2528
        %v2546 = vcombine.high %v2512, %v2528
        %v2548 = vunpack.c.l.s4 1934713408
        %v2549 = vunpack.c.0.s8 %v2548
        %v2550 = vlaneseq
        %v2551 = vshrl.u32 %v2550, 7
        %v2552 = vsub.s32 %v2549, %v2551
        %v2553 = vrot.slane %v2545, %v2552
        %v2555 = vunpack.c.l.s4 1934713408
        %v2556 = vunpack.c.0.s8 %v2555
        %v2557 = vlaneseq
        %v2558 = vshrl.u32 %v2557, 7
        %v2559 = vsub.s32 %v2556, %v2558
        %v2560 = vrot.slane %v2546, %v2559
        %v2561 = vcombine.high %v2537, 0
        %v2562 = vcombine.high %v2544, 0
        %v2563 = vcombine.high %v2553, 0
        %v2564 = vcombine.high %v2560, 0
        %2565 = vxpose.xlu0.c.b16.start [1/8] %v2469, 128
        %2566 = vxpose.xlu0.c.b16.cont [2/8] 0, 128
        %2567 = vxpose.xlu0.c.b16.cont [3/8] 0, 128
        %2568 = vxpose.xlu0.c.b16.cont [4/8] 0, 128
        %2569 = vxpose.xlu0.c.b16.cont [5/8] 0, 128
        %2570 = vxpose.xlu0.c.b16.cont [6/8] 0, 128
        %2571 = vxpose.xlu0.c.b16.cont [7/8] 0, 128
        %2572 = vxpose.xlu0.c.b16.end [8/8] 0, 128
        %v2573 = vpop.trf.xlu0
        %v2574 = vpop.trf.xlu0
        %v2575 = vpop.trf.xlu0
        %v2576 = vpop.trf.xlu0
        %v2577 = vpop.trf.xlu0
        %v2578 = vpop.trf.xlu0
        %v2579 = vpop.trf.xlu0
        %v2580 = vpop.trf.xlu0
        %2581 = vxpose.xlu0.c.b16.start [1/8] %v2537, 128
        %2582 = vxpose.xlu0.c.b16.cont [2/8] 0, 128
        %2583 = vxpose.xlu0.c.b16.cont [3/8] 0, 128
        %2584 = vxpose.xlu0.c.b16.cont [4/8] 0, 128
        %2585 = vxpose.xlu0.c.b16.cont [5/8] 0, 128
        %2586 = vxpose.xlu0.c.b16.cont [6/8] 0, 128
        %2587 = vxpose.xlu0.c.b16.cont [7/8] 0, 128
        %2588 = vxpose.xlu0.c.b16.end [8/8] 0, 128
        %v2589 = vpop.trf.xlu0
        %v2590 = vpop.trf.xlu0
        %v2591 = vpop.trf.xlu0
        %v2592 = vpop.trf.xlu0
        %v2593 = vpop.trf.xlu0
        %v2594 = vpop.trf.xlu0
        %v2595 = vpop.trf.xlu0
        %v2596 = vpop.trf.xlu0
        %2597 = vxpose.xlu0.c.b16.start [1/8] %v2493, 128
        %2598 = vxpose.xlu0.c.b16.cont [2/8] 0, 128
        %2599 = vxpose.xlu0.c.b16.cont [3/8] 0, 128
        %2600 = vxpose.xlu0.c.b16.cont [4/8] 0, 128
        %2601 = vxpose.xlu0.c.b16.cont [5/8] 0, 128
        %2602 = vxpose.xlu0.c.b16.cont [6/8] 0, 128
        %2603 = vxpose.xlu0.c.b16.cont [7/8] 0, 128
        %2604 = vxpose.xlu0.c.b16.end [8/8] 0, 128
        %v2605 = vpop.trf.xlu0
        %v2606 = vpop.trf.xlu0
        %v2607 = vpop.trf.xlu0
        %v2608 = vpop.trf.xlu0
        %v2609 = vpop.trf.xlu0
        %v2610 = vpop.trf.xlu0
        %v2611 = vpop.trf.xlu0
        %v2612 = vpop.trf.xlu0
        %2613 = vxpose.xlu0.c.b16.start [1/8] %v2561, 128
        %2614 = vxpose.xlu0.c.b16.cont [2/8] 0, 128
        %2615 = vxpose.xlu0.c.b16.cont [3/8] 0, 128
        %2616 = vxpose.xlu0.c.b16.cont [4/8] 0, 128
        %2617 = vxpose.xlu0.c.b16.cont [5/8] 0, 128
        %2618 = vxpose.xlu0.c.b16.cont [6/8] 0, 128
        %2619 = vxpose.xlu0.c.b16.cont [7/8] 0, 128
        %2620 = vxpose.xlu0.c.b16.end [8/8] 0, 128
        %v2621 = vpop.trf.xlu0
        %v2622 = vpop.trf.xlu0
        %v2623 = vpop.trf.xlu0
        %v2624 = vpop.trf.xlu0
        %v2625 = vpop.trf.xlu0
        %v2626 = vpop.trf.xlu0
        %v2627 = vpop.trf.xlu0
        %v2628 = vpop.trf.xlu0
        %2629 = vxpose.xlu0.c.b16.start [1/8] %v2476, 128
        %2630 = vxpose.xlu0.c.b16.cont [2/8] 0, 128
        %2631 = vxpose.xlu0.c.b16.cont [3/8] 0, 128
        %2632 = vxpose.xlu0.c.b16.cont [4/8] 0, 128
        %2633 = vxpose.xlu0.c.b16.cont [5/8] 0, 128
        %2634 = vxpose.xlu0.c.b16.cont [6/8] 0, 128
        %2635 = vxpose.xlu0.c.b16.cont [7/8] 0, 128
        %2636 = vxpose.xlu0.c.b16.end [8/8] 0, 128
        %v2637 = vpop.trf.xlu0
        %v2638 = vpop.trf.xlu0
        %v2639 = vpop.trf.xlu0
        %v2640 = vpop.trf.xlu0
        %v2641 = vpop.trf.xlu0
        %v2642 = vpop.trf.xlu0
        %v2643 = vpop.trf.xlu0
        %v2644 = vpop.trf.xlu0
        %2645 = vxpose.xlu0.c.b16.start [1/8] %v2544, 128
        %2646 = vxpose.xlu0.c.b16.cont [2/8] 0, 128
        %2647 = vxpose.xlu0.c.b16.cont [3/8] 0, 128
        %2648 = vxpose.xlu0.c.b16.cont [4/8] 0, 128
        %2649 = vxpose.xlu0.c.b16.cont [5/8] 0, 128
        %2650 = vxpose.xlu0.c.b16.cont [6/8] 0, 128
        %2651 = vxpose.xlu0.c.b16.cont [7/8] 0, 128
        %2652 = vxpose.xlu0.c.b16.end [8/8] 0, 128
        %v2653 = vpop.trf.xlu0
        %v2654 = vpop.trf.xlu0
        %v2655 = vpop.trf.xlu0
        %v2656 = vpop.trf.xlu0
        %v2657 = vpop.trf.xlu0
        %v2658 = vpop.trf.xlu0
        %v2659 = vpop.trf.xlu0
        %v2660 = vpop.trf.xlu0
        %2661 = vxpose.xlu0.c.b16.start [1/8] %v2494, 128
        %2662 = vxpose.xlu0.c.b16.cont [2/8] 0, 128
        %2663 = vxpose.xlu0.c.b16.cont [3/8] 0, 128
        %2664 = vxpose.xlu0.c.b16.cont [4/8] 0, 128
        %2665 = vxpose.xlu0.c.b16.cont [5/8] 0, 128
        %2666 = vxpose.xlu0.c.b16.cont [6/8] 0, 128
        %2667 = vxpose.xlu0.c.b16.cont [7/8] 0, 128
        %2668 = vxpose.xlu0.c.b16.end [8/8] 0, 128
        %v2669 = vpop.trf.xlu0
        %v2670 = vpop.trf.xlu0
        %v2671 = vpop.trf.xlu0
        %v2672 = vpop.trf.xlu0
        %v2673 = vpop.trf.xlu0
        %v2674 = vpop.trf.xlu0
        %v2675 = vpop.trf.xlu0
        %v2676 = vpop.trf.xlu0
        %2677 = vxpose.xlu0.c.b16.start [1/8] %v2562, 128
        %2678 = vxpose.xlu0.c.b16.cont [2/8] 0, 128
        %2679 = vxpose.xlu0.c.b16.cont [3/8] 0, 128
        %2680 = vxpose.xlu0.c.b16.cont [4/8] 0, 128
        %2681 = vxpose.xlu0.c.b16.cont [5/8] 0, 128
        %2682 = vxpose.xlu0.c.b16.cont [6/8] 0, 128
        %2683 = vxpose.xlu0.c.b16.cont [7/8] 0, 128
        %2684 = vxpose.xlu0.c.b16.end [8/8] 0, 128
        %v2685 = vpop.trf.xlu0
        %v2686 = vpop.trf.xlu0
        %v2687 = vpop.trf.xlu0
        %v2688 = vpop.trf.xlu0
        %v2689 = vpop.trf.xlu0
        %v2690 = vpop.trf.xlu0
        %v2691 = vpop.trf.xlu0
        %v2692 = vpop.trf.xlu0
        %2693 = vxpose.xlu0.c.b16.start [1/8] %v2485, 128
        %2694 = vxpose.xlu0.c.b16.cont [2/8] 0, 128
        %2695 = vxpose.xlu0.c.b16.cont [3/8] 0, 128
        %2696 = vxpose.xlu0.c.b16.cont [4/8] 0, 128
        %2697 = vxpose.xlu0.c.b16.cont [5/8] 0, 128
        %2698 = vxpose.xlu0.c.b16.cont [6/8] 0, 128
        %2699 = vxpose.xlu0.c.b16.cont [7/8] 0, 128
        %2700 = vxpose.xlu0.c.b16.end [8/8] 0, 128
        %v2701 = vpop.trf.xlu0
        %v2702 = vpop.trf.xlu0
        %v2703 = vpop.trf.xlu0
        %v2704 = vpop.trf.xlu0
        %v2705 = vpop.trf.xlu0
        %v2706 = vpop.trf.xlu0
        %v2707 = vpop.trf.xlu0
        %v2708 = vpop.trf.xlu0
        %2709 = vxpose.xlu0.c.b16.start [1/8] %v2553, 128
        %2710 = vxpose.xlu0.c.b16.cont [2/8] 0, 128
        %2711 = vxpose.xlu0.c.b16.cont [3/8] 0, 128
        %2712 = vxpose.xlu0.c.b16.cont [4/8] 0, 128
        %2713 = vxpose.xlu0.c.b16.cont [5/8] 0, 128
        %2714 = vxpose.xlu0.c.b16.cont [6/8] 0, 128
        %2715 = vxpose.xlu0.c.b16.cont [7/8] 0, 128
        %2716 = vxpose.xlu0.c.b16.end [8/8] 0, 128
        %v2717 = vpop.trf.xlu0
        %v2718 = vpop.trf.xlu0
        %v2719 = vpop.trf.xlu0
        %v2720 = vpop.trf.xlu0
        %v2721 = vpop.trf.xlu0
        %v2722 = vpop.trf.xlu0
        %v2723 = vpop.trf.xlu0
        %v2724 = vpop.trf.xlu0
        %2725 = vxpose.xlu0.c.b16.start [1/8] %v2495, 128
        %2726 = vxpose.xlu0.c.b16.cont [2/8] 0, 128
        %2727 = vxpose.xlu0.c.b16.cont [3/8] 0, 128
        %2728 = vxpose.xlu0.c.b16.cont [4/8] 0, 128
        %2729 = vxpose.xlu0.c.b16.cont [5/8] 0, 128
        %2730 = vxpose.xlu0.c.b16.cont [6/8] 0, 128
        %2731 = vxpose.xlu0.c.b16.cont [7/8] 0, 128
        %2732 = vxpose.xlu0.c.b16.end [8/8] 0, 128
        %v2733 = vpop.trf.xlu0
        %v2734 = vpop.trf.xlu0
        %v2735 = vpop.trf.xlu0
        %v2736 = vpop.trf.xlu0
        %v2737 = vpop.trf.xlu0
        %v2738 = vpop.trf.xlu0
        %v2739 = vpop.trf.xlu0
        %v2740 = vpop.trf.xlu0
        %2741 = vxpose.xlu0.c.b16.start [1/8] %v2563, 128
        %2742 = vxpose.xlu0.c.b16.cont [2/8] 0, 128
        %2743 = vxpose.xlu0.c.b16.cont [3/8] 0, 128
        %2744 = vxpose.xlu0.c.b16.cont [4/8] 0, 128
        %2745 = vxpose.xlu0.c.b16.cont [5/8] 0, 128
        %2746 = vxpose.xlu0.c.b16.cont [6/8] 0, 128
        %2747 = vxpose.xlu0.c.b16.cont [7/8] 0, 128
        %2748 = vxpose.xlu0.c.b16.end [8/8] 0, 128
        %v2749 = vpop.trf.xlu0
        %v2750 = vpop.trf.xlu0
        %v2751 = vpop.trf.xlu0
        %v2752 = vpop.trf.xlu0
        %v2753 = vpop.trf.xlu0
        %v2754 = vpop.trf.xlu0
        %v2755 = vpop.trf.xlu0
        %v2756 = vpop.trf.xlu0
        %2757 = vxpose.xlu0.c.b16.start [1/8] %v2492, 128
        %2758 = vxpose.xlu0.c.b16.cont [2/8] 0, 128
        %2759 = vxpose.xlu0.c.b16.cont [3/8] 0, 128
        %2760 = vxpose.xlu0.c.b16.cont [4/8] 0, 128
        %2761 = vxpose.xlu0.c.b16.cont [5/8] 0, 128
        %2762 = vxpose.xlu0.c.b16.cont [6/8] 0, 128
        %2763 = vxpose.xlu0.c.b16.cont [7/8] 0, 128
        %2764 = vxpose.xlu0.c.b16.end [8/8] 0, 128
        %v2765 = vpop.trf.xlu0
        %v2766 = vpop.trf.xlu0
        %v2767 = vpop.trf.xlu0
        %v2768 = vpop.trf.xlu0
        %v2769 = vpop.trf.xlu0
        %v2770 = vpop.trf.xlu0
        %v2771 = vpop.trf.xlu0
        %v2772 = vpop.trf.xlu0
        %2773 = vxpose.xlu0.c.b16.start [1/8] %v2560, 128
        %2774 = vxpose.xlu0.c.b16.cont [2/8] 0, 128
        %2775 = vxpose.xlu0.c.b16.cont [3/8] 0, 128
        %2776 = vxpose.xlu0.c.b16.cont [4/8] 0, 128
        %2777 = vxpose.xlu0.c.b16.cont [5/8] 0, 128
        %2778 = vxpose.xlu0.c.b16.cont [6/8] 0, 128
        %2779 = vxpose.xlu0.c.b16.cont [7/8] 0, 128
        %2780 = vxpose.xlu0.c.b16.end [8/8] 0, 128
        %v2781 = vpop.trf.xlu0
        %v2782 = vpop.trf.xlu0
        %v2783 = vpop.trf.xlu0
        %v2784 = vpop.trf.xlu0
        %v2785 = vpop.trf.xlu0
        %v2786 = vpop.trf.xlu0
        %v2787 = vpop.trf.xlu0
        %v2788 = vpop.trf.xlu0
        %2789 = vxpose.xlu0.c.b16.start [1/8] %v2496, 128
        %2790 = vxpose.xlu0.c.b16.cont [2/8] 0, 128
        %2791 = vxpose.xlu0.c.b16.cont [3/8] 0, 128
        %2792 = vxpose.xlu0.c.b16.cont [4/8] 0, 128
        %2793 = vxpose.xlu0.c.b16.cont [5/8] 0, 128
        %2794 = vxpose.xlu0.c.b16.cont [6/8] 0, 128
        %2795 = vxpose.xlu0.c.b16.cont [7/8] 0, 128
        %2796 = vxpose.xlu0.c.b16.end [8/8] 0, 128
        %v2797 = vpop.trf.xlu0
        %v2798 = vpop.trf.xlu0
        %v2799 = vpop.trf.xlu0
        %v2800 = vpop.trf.xlu0
        %v2801 = vpop.trf.xlu0
        %v2802 = vpop.trf.xlu0
        %v2803 = vpop.trf.xlu0
        %v2804 = vpop.trf.xlu0
        %2805 = vxpose.xlu0.c.b16.start [1/8] %v2564, 128
        %2806 = vxpose.xlu0.c.b16.cont [2/8] 0, 128
        %2807 = vxpose.xlu0.c.b16.cont [3/8] 0, 128
        %2808 = vxpose.xlu0.c.b16.cont [4/8] 0, 128
        %2809 = vxpose.xlu0.c.b16.cont [5/8] 0, 128
        %2810 = vxpose.xlu0.c.b16.cont [6/8] 0, 128
        %2811 = vxpose.xlu0.c.b16.cont [7/8] 0, 128
        %2812 = vxpose.xlu0.c.b16.end [8/8] 0, 128
        %v2813 = vpop.trf.xlu0
        %v2814 = vpop.trf.xlu0
        %v2815 = vpop.trf.xlu0
        %v2816 = vpop.trf.xlu0
        %v2817 = vpop.trf.xlu0
        %v2818 = vpop.trf.xlu0
        %v2819 = vpop.trf.xlu0
        %v2820 = vpop.trf.xlu0
        %v2821 = vcombine.low %v2573, %v2637
        %v2823 = vunpack.c.l.s4 1983009808
        %v2824 = vunpack.c.0.s8 %v2823
        %v2825 = vlaneseq
        %v2826 = vshrl.u32 %v2825, 7
        %v2827 = vsub.s32 %v2824, %v2826
        %v2828 = vrot.slane %v2821, %v2827
        %v2829 = vcombine.low %v2605, %v2669
        %v2831 = vunpack.c.l.s4 1983009808
        %v2832 = vunpack.c.0.s8 %v2831
        %v2833 = vlaneseq
        %v2834 = vshrl.u32 %v2833, 7
        %v2835 = vsub.s32 %v2832, %v2834
        %v2836 = vrot.slane %v2829, %v2835
        %v2837 = vcombine.low %v2701, %v2765
        %v2839 = vunpack.c.l.s4 1983009808
        %v2840 = vunpack.c.0.s8 %v2839
        %v2841 = vlaneseq
        %v2842 = vshrl.u32 %v2841, 7
        %v2843 = vsub.s32 %v2840, %v2842
        %v2844 = vrot.slane %v2837, %v2843
        %v2845 = vcombine.low %v2733, %v2797
        %v2847 = vunpack.c.l.s4 1983009808
        %v2848 = vunpack.c.0.s8 %v2847
        %v2849 = vlaneseq
        %v2850 = vshrl.u32 %v2849, 7
        %v2851 = vsub.s32 %v2848, %v2850
        %v2852 = vrot.slane %v2845, %v2851
        %v2853 = vcombine.low %v2828, %v2836
        %v2855 = vunpack.c.l.s4 1934713408
        %v2856 = vunpack.c.0.s8 %v2855
        %v2857 = vlaneseq
        %v2858 = vshrl.u32 %v2857, 7
        %v2859 = vsub.s32 %v2856, %v2858
        %v2860 = vrot.slane %v2853, %v2859
        %v2861 = vcombine.low %v2844, %v2852
        %v2863 = vunpack.c.l.s4 1934713408
        %v2864 = vunpack.c.0.s8 %v2863
        %v2865 = vlaneseq
        %v2866 = vshrl.u32 %v2865, 7
        %v2867 = vsub.s32 %v2864, %v2866
        %v2868 = vrot.slane %v2861, %v2867
        %v2869 = vcombine.low %v2860, %v2868
        %v2870 = vcombine.high %v2860, %v2868
        %v2871 = vcombine.low %v2589, %v2653
        %v2873 = vunpack.c.l.s4 1983009808
        %v2874 = vunpack.c.0.s8 %v2873
        %v2875 = vlaneseq
        %v2876 = vshrl.u32 %v2875, 7
        %v2877 = vsub.s32 %v2874, %v2876
        %v2878 = vrot.slane %v2871, %v2877
        %v2879 = vcombine.low %v2621, %v2685
        %v2881 = vunpack.c.l.s4 1983009808
        %v2882 = vunpack.c.0.s8 %v2881
        %v2883 = vlaneseq
        %v2884 = vshrl.u32 %v2883, 7
        %v2885 = vsub.s32 %v2882, %v2884
        %v2886 = vrot.slane %v2879, %v2885
        %v2887 = vcombine.low %v2717, %v2781
        %v2889 = vunpack.c.l.s4 1983009808
        %v2890 = vunpack.c.0.s8 %v2889
        %v2891 = vlaneseq
        %v2892 = vshrl.u32 %v2891, 7
        %v2893 = vsub.s32 %v2890, %v2892
        %v2894 = vrot.slane %v2887, %v2893
        %v2895 = vcombine.low %v2749, %v2813
        %v2897 = vunpack.c.l.s4 1983009808
        %v2898 = vunpack.c.0.s8 %v2897
        %v2899 = vlaneseq
        %v2900 = vshrl.u32 %v2899, 7
        %v2901 = vsub.s32 %v2898, %v2900
        %v2902 = vrot.slane %v2895, %v2901
        %v2903 = vcombine.low %v2878, %v2886
        %v2905 = vunpack.c.l.s4 1934713408
        %v2906 = vunpack.c.0.s8 %v2905
        %v2907 = vlaneseq
        %v2908 = vshrl.u32 %v2907, 7
        %v2909 = vsub.s32 %v2906, %v2908
        %v2910 = vrot.slane %v2903, %v2909
        %v2911 = vcombine.low %v2894, %v2902
        %v2913 = vunpack.c.l.s4 1934713408
        %v2914 = vunpack.c.0.s8 %v2913
        %v2915 = vlaneseq
        %v2916 = vshrl.u32 %v2915, 7
        %v2917 = vsub.s32 %v2914, %v2916
        %v2918 = vrot.slane %v2911, %v2917
        %v2919 = vcombine.low %v2910, %v2918
        %v2920 = vcombine.high %v2910, %v2918
        %v2923 = vpack.i.b16 %v2919, %v2869
        %v2924 = vshrl.u32 %v2869, 16
        %v2925 = vshrl.u32 %v2919, 16
        %v2926 = vpack.i.b16 %v2925, %v2924
        %v2929 = vpack.i.b16 %v2920, %v2870
        %v2930 = vshrl.u32 %v2870, 16
        %v2931 = vshrl.u32 %v2920, 16
        %v2932 = vpack.i.b16 %v2931, %v2930
        %v2934 = vsel %vm2212, %v2923, 0
        %v2937 = vsel %vm2212, %v2257, 0
        %2939 = vmatprep.subr.bf16.mxu0 0
        %2940 = vmatpush1.bf16.xpose.msra.mxu0 %v2937
        %2941 = vmatprep.subr.bf16.mxu0 0
        %2942 = vmatpush1.bf16.xpose.msra.mxu0 0
        %2943 = vmatprep.subr.bf16.mxu0 0
        %2944 = vmatpush1.bf16.xpose.msra.mxu0 0
        %2945 = vmatprep.subr.bf16.mxu0 0
        %2946 = vmatpush1.bf16.xpose.msra.mxu0 0
        %2947 = vmatprep.subr.bf16.mxu0 0
        %2948 = vmatpush1.bf16.xpose.msra.mxu0 0
        %2949 = vmatprep.subr.bf16.mxu0 0
        %2950 = vmatpush1.bf16.xpose.msra.mxu0 0
        %2951 = vmatprep.subr.bf16.mxu0 0
        %2952 = vmatpush1.bf16.xpose.msra.mxu0 0
        %2953 = vmatprep.subr.bf16.mxu0 0
        %2954 = vmatpush1.bf16.xpose.msra.mxu0 0
        %2955 = vmatprep.subr.bf16.mxu0 0
        %2956 = vmatpush1.bf16.xpose.msra.mxu0 0
        %2957 = vmatprep.subr.bf16.mxu0 0
        %2958 = vmatpush1.bf16.xpose.msra.mxu0 0
        %2959 = vmatprep.subr.bf16.mxu0 0
        %2960 = vmatpush1.bf16.xpose.msra.mxu0 0
        %2961 = vmatprep.subr.bf16.mxu0 0
        %2962 = vmatpush1.bf16.xpose.msra.mxu0 0
        %2963 = vmatprep.subr.bf16.mxu0 0
        %2964 = vmatpush1.bf16.xpose.msra.mxu0 0
        %2965 = vmatprep.subr.bf16.mxu0 0
        %2966 = vmatpush1.bf16.xpose.msra.mxu0 0
        %2967 = vmatprep.subr.bf16.mxu0 0
        %2968 = vmatpush1.bf16.xpose.msra.mxu0 0
        %2969 = vmatprep.subr.bf16.mxu0 0
        %2970 = vmatpush1.bf16.xpose.msra.mxu0 0
        %2971 = vmatprep.mubr.bf16.mxu0 0
        %2972 = vmatmul.mubr.bf16.gmra.mrb[0].mxu0 %v2934
        %v2973 = vpop.f32.mrb[0].mxu0
        %v2974 = vadd.f32 0.0, %v2973
        %v2975 = vpop.f32.mrb[0].mxu0
        %v2976 = vpop.f32.mrb[0].mxu0
        %v2977 = vadd.f32 0.0, %v2976
        %v2978 = vpop.f32.mrb[0].mxu0
        %2979 = vdwg.mxu0
        %v2981 = vsel %vm2212, %v2926, 0
        %v2984 = vsel %vm2212, %v2258, 0
        %2986 = vmatprep.subr.bf16.mxu0 0
        %2987 = vmatpush1.bf16.xpose.msra.mxu0 %v2984
        %2988 = vmatprep.subr.bf16.mxu0 0
        %2989 = vmatpush1.bf16.xpose.msra.mxu0 0
        %2990 = vmatprep.subr.bf16.mxu0 0
        %2991 = vmatpush1.bf16.xpose.msra.mxu0 0
        %2992 = vmatprep.subr.bf16.mxu0 0
        %2993 = vmatpush1.bf16.xpose.msra.mxu0 0
        %2994 = vmatprep.subr.bf16.mxu0 0
        %2995 = vmatpush1.bf16.xpose.msra.mxu0 0
        %2996 = vmatprep.subr.bf16.mxu0 0
        %2997 = vmatpush1.bf16.xpose.msra.mxu0 0
        %2998 = vmatprep.subr.bf16.mxu0 0
        %2999 = vmatpush1.bf16.xpose.msra.mxu0 0
        %3000 = vmatprep.subr.bf16.mxu0 0
        %3001 = vmatpush1.bf16.xpose.msra.mxu0 0
        %3002 = vmatprep.subr.bf16.mxu0 0
        %3003 = vmatpush1.bf16.xpose.msra.mxu0 0
        %3004 = vmatprep.subr.bf16.mxu0 0
        %3005 = vmatpush1.bf16.xpose.msra.mxu0 0
        %3006 = vmatprep.subr.bf16.mxu0 0
        %3007 = vmatpush1.bf16.xpose.msra.mxu0 0
        %3008 = vmatprep.subr.bf16.mxu0 0
        %3009 = vmatpush1.bf16.xpose.msra.mxu0 0
        %3010 = vmatprep.subr.bf16.mxu0 0
        %3011 = vmatpush1.bf16.xpose.msra.mxu0 0
        %3012 = vmatprep.subr.bf16.mxu0 0
        %3013 = vmatpush1.bf16.xpose.msra.mxu0 0
        %3014 = vmatprep.subr.bf16.mxu0 0
        %3015 = vmatpush1.bf16.xpose.msra.mxu0 0
        %3016 = vmatprep.subr.bf16.mxu0 0
        %3017 = vmatpush1.bf16.xpose.msra.mxu0 0
        %3018 = vmatprep.mubr.bf16.mxu0 0
        %3019 = vmatmul.mubr.bf16.gmra.mrb[0].mxu0 %v2981
        %v3020 = vpop.f32.mrb[0].mxu0
        %v3021 = vadd.f32 0.0, %v3020
        %v3022 = vpop.f32.mrb[0].mxu0
        %v3023 = vpop.f32.mrb[0].mxu0
        %v3024 = vadd.f32 0.0, %v3023
        %v3025 = vpop.f32.mrb[0].mxu0
        %3026 = vdwg.mxu0
        %v3028 = vsel %vm2212, %v2929, 0
        %v3031 = vsel %vm2212, %v2259, 0
        %3033 = vmatprep.subr.bf16.mxu0 0
        %3034 = vmatpush1.bf16.xpose.msra.mxu0 %v3031
        %3035 = vmatprep.subr.bf16.mxu0 0
        %3036 = vmatpush1.bf16.xpose.msra.mxu0 0
        %3037 = vmatprep.subr.bf16.mxu0 0
        %3038 = vmatpush1.bf16.xpose.msra.mxu0 0
        %3039 = vmatprep.subr.bf16.mxu0 0
        %3040 = vmatpush1.bf16.xpose.msra.mxu0 0
        %3041 = vmatprep.subr.bf16.mxu0 0
        %3042 = vmatpush1.bf16.xpose.msra.mxu0 0
        %3043 = vmatprep.subr.bf16.mxu0 0
        %3044 = vmatpush1.bf16.xpose.msra.mxu0 0
        %3045 = vmatprep.subr.bf16.mxu0 0
        %3046 = vmatpush1.bf16.xpose.msra.mxu0 0
        %3047 = vmatprep.subr.bf16.mxu0 0
        %3048 = vmatpush1.bf16.xpose.msra.mxu0 0
        %3049 = vmatprep.subr.bf16.mxu0 0
        %3050 = vmatpush1.bf16.xpose.msra.mxu0 0
        %3051 = vmatprep.subr.bf16.mxu0 0
        %3052 = vmatpush1.bf16.xpose.msra.mxu0 0
        %3053 = vmatprep.subr.bf16.mxu0 0
        %3054 = vmatpush1.bf16.xpose.msra.mxu0 0
        %3055 = vmatprep.subr.bf16.mxu0 0
        %3056 = vmatpush1.bf16.xpose.msra.mxu0 0
        %3057 = vmatprep.subr.bf16.mxu0 0
        %3058 = vmatpush1.bf16.xpose.msra.mxu0 0
        %3059 = vmatprep.subr.bf16.mxu0 0
        %3060 = vmatpush1.bf16.xpose.msra.mxu0 0
        %3061 = vmatprep.subr.bf16.mxu0 0
        %3062 = vmatpush1.bf16.xpose.msra.mxu0 0
        %3063 = vmatprep.subr.bf16.mxu0 0
        %3064 = vmatpush1.bf16.xpose.msra.mxu0 0
        %3065 = vmatprep.mubr.bf16.mxu0 0
        %3066 = vmatmul.mubr.bf16.gmra.mrb[0].mxu0 %v3028
        %v3067 = vpop.f32.mrb[0].mxu0
        %v3068 = vadd.f32 0.0, %v3067
        %v3069 = vpop.f32.mrb[0].mxu0
        %v3070 = vpop.f32.mrb[0].mxu0
        %v3071 = vadd.f32 0.0, %v3070
        %v3072 = vpop.f32.mrb[0].mxu0
        %3073 = vdwg.mxu0
        %v3075 = vsel %vm2212, %v2932, 0
        %v3078 = vsel %vm2212, %v2260, 0
        %3080 = vmatprep.subr.bf16.mxu0 0
        %3081 = vmatpush1.bf16.xpose.msra.mxu0 %v3078
        %3082 = vmatprep.subr.bf16.mxu0 0
        %3083 = vmatpush1.bf16.xpose.msra.mxu0 0
        %3084 = vmatprep.subr.bf16.mxu0 0
        %3085 = vmatpush1.bf16.xpose.msra.mxu0 0
        %3086 = vmatprep.subr.bf16.mxu0 0
        %3087 = vmatpush1.bf16.xpose.msra.mxu0 0
        %3088 = vmatprep.subr.bf16.mxu0 0
        %3089 = vmatpush1.bf16.xpose.msra.mxu0 0
        %3090 = vmatprep.subr.bf16.mxu0 0
        %3091 = vmatpush1.bf16.xpose.msra.mxu0 0
        %3092 = vmatprep.subr.bf16.mxu0 0
        %3093 = vmatpush1.bf16.xpose.msra.mxu0 0
        %3094 = vmatprep.subr.bf16.mxu0 0
        %3095 = vmatpush1.bf16.xpose.msra.mxu0 0
        %3096 = vmatprep.subr.bf16.mxu0 0
        %3097 = vmatpush1.bf16.xpose.msra.mxu0 0
        %3098 = vmatprep.subr.bf16.mxu0 0
        %3099 = vmatpush1.bf16.xpose.msra.mxu0 0
        %3100 = vmatprep.subr.bf16.mxu0 0
        %3101 = vmatpush1.bf16.xpose.msra.mxu0 0
        %3102 = vmatprep.subr.bf16.mxu0 0
        %3103 = vmatpush1.bf16.xpose.msra.mxu0 0
        %3104 = vmatprep.subr.bf16.mxu0 0
        %3105 = vmatpush1.bf16.xpose.msra.mxu0 0
        %3106 = vmatprep.subr.bf16.mxu0 0
        %3107 = vmatpush1.bf16.xpose.msra.mxu0 0
        %3108 = vmatprep.subr.bf16.mxu0 0
        %3109 = vmatpush1.bf16.xpose.msra.mxu0 0
        %3110 = vmatprep.subr.bf16.mxu0 0
        %3111 = vmatpush1.bf16.xpose.msra.mxu0 0
        %3112 = vmatprep.mubr.bf16.mxu0 0
        %3113 = vmatmul.mubr.bf16.gmra.mrb[0].mxu0 %v3075
        %v3114 = vpop.f32.mrb[0].mxu0
        %v3115 = vadd.f32 0.0, %v3114
        %v3116 = vpop.f32.mrb[0].mxu0
        %v3117 = vpop.f32.mrb[0].mxu0
        %v3118 = vadd.f32 0.0, %v3117
        %v3119 = vpop.f32.mrb[0].mxu0
        %3120 = vdwg.mxu0
        %3121 = vxpose.xlu0.b32.start [1/16] %v2974, 128
        %3122 = vxpose.xlu0.b32.cont [2/16] %v2977, 128
        %3123 = vxpose.xlu0.b32.cont [3/16] 0.0, 128
        %3124 = vxpose.xlu0.b32.cont [4/16] 0.0, 128
        %3125 = vxpose.xlu0.b32.cont [5/16] 0.0, 128
        %3126 = vxpose.xlu0.b32.cont [6/16] 0.0, 128
        %3127 = vxpose.xlu0.b32.cont [7/16] 0.0, 128
        %3128 = vxpose.xlu0.b32.cont [8/16] 0.0, 128
        %3129 = vxpose.xlu0.b32.cont [9/16] 0.0, 128
        %3130 = vxpose.xlu0.b32.cont [10/16] 0.0, 128
        %3131 = vxpose.xlu0.b32.cont [11/16] 0.0, 128
        %3132 = vxpose.xlu0.b32.cont [12/16] 0.0, 128
        %3133 = vxpose.xlu0.b32.cont [13/16] 0.0, 128
        %3134 = vxpose.xlu0.b32.cont [14/16] 0.0, 128
        %3135 = vxpose.xlu0.b32.cont [15/16] 0.0, 128
        %3136 = vxpose.xlu0.b32.end [16/16] 0.0, 128
        %v3137 = vpop.trf.xlu0
        %v3138 = vpop.trf.xlu0
        %v3139 = vpop.trf.xlu0
        %v3140 = vpop.trf.xlu0
        %v3141 = vpop.trf.xlu0
        %v3142 = vpop.trf.xlu0
        %v3143 = vpop.trf.xlu0
        %v3144 = vpop.trf.xlu0
        %v3145 = vpop.trf.xlu0
        %v3146 = vpop.trf.xlu0
        %v3147 = vpop.trf.xlu0
        %v3148 = vpop.trf.xlu0
        %v3149 = vpop.trf.xlu0
        %v3150 = vpop.trf.xlu0
        %v3151 = vpop.trf.xlu0
        %v3152 = vpop.trf.xlu0
        %3153 = vxpose.xlu0.b32.start [1/16] %v3021, 128
        %3154 = vxpose.xlu0.b32.cont [2/16] %v3024, 128
        %3155 = vxpose.xlu0.b32.cont [3/16] 0.0, 128
        %3156 = vxpose.xlu0.b32.cont [4/16] 0.0, 128
        %3157 = vxpose.xlu0.b32.cont [5/16] 0.0, 128
        %3158 = vxpose.xlu0.b32.cont [6/16] 0.0, 128
        %3159 = vxpose.xlu0.b32.cont [7/16] 0.0, 128
        %3160 = vxpose.xlu0.b32.cont [8/16] 0.0, 128
        %3161 = vxpose.xlu0.b32.cont [9/16] 0.0, 128
        %3162 = vxpose.xlu0.b32.cont [10/16] 0.0, 128
        %3163 = vxpose.xlu0.b32.cont [11/16] 0.0, 128
        %3164 = vxpose.xlu0.b32.cont [12/16] 0.0, 128
        %3165 = vxpose.xlu0.b32.cont [13/16] 0.0, 128
        %3166 = vxpose.xlu0.b32.cont [14/16] 0.0, 128
        %3167 = vxpose.xlu0.b32.cont [15/16] 0.0, 128
        %3168 = vxpose.xlu0.b32.end [16/16] 0.0, 128
        %v3169 = vpop.trf.xlu0
        %v3170 = vpop.trf.xlu0
        %v3171 = vpop.trf.xlu0
        %v3172 = vpop.trf.xlu0
        %v3173 = vpop.trf.xlu0
        %v3174 = vpop.trf.xlu0
        %v3175 = vpop.trf.xlu0
        %v3176 = vpop.trf.xlu0
        %v3177 = vpop.trf.xlu0
        %v3178 = vpop.trf.xlu0
        %v3179 = vpop.trf.xlu0
        %v3180 = vpop.trf.xlu0
        %v3181 = vpop.trf.xlu0
        %v3182 = vpop.trf.xlu0
        %v3183 = vpop.trf.xlu0
        %v3184 = vpop.trf.xlu0
        %3185 = vxpose.xlu0.b32.start [1/16] %v3068, 128
        %3186 = vxpose.xlu0.b32.cont [2/16] %v3071, 128
        %3187 = vxpose.xlu0.b32.cont [3/16] 0.0, 128
        %3188 = vxpose.xlu0.b32.cont [4/16] 0.0, 128
        %3189 = vxpose.xlu0.b32.cont [5/16] 0.0, 128
        %3190 = vxpose.xlu0.b32.cont [6/16] 0.0, 128
        %3191 = vxpose.xlu0.b32.cont [7/16] 0.0, 128
        %3192 = vxpose.xlu0.b32.cont [8/16] 0.0, 128
        %3193 = vxpose.xlu0.b32.cont [9/16] 0.0, 128
        %3194 = vxpose.xlu0.b32.cont [10/16] 0.0, 128
        %3195 = vxpose.xlu0.b32.cont [11/16] 0.0, 128
        %3196 = vxpose.xlu0.b32.cont [12/16] 0.0, 128
        %3197 = vxpose.xlu0.b32.cont [13/16] 0.0, 128
        %3198 = vxpose.xlu0.b32.cont [14/16] 0.0, 128
        %3199 = vxpose.xlu0.b32.cont [15/16] 0.0, 128
        %3200 = vxpose.xlu0.b32.end [16/16] 0.0, 128
        %v3201 = vpop.trf.xlu0
        %v3202 = vpop.trf.xlu0
        %v3203 = vpop.trf.xlu0
        %v3204 = vpop.trf.xlu0
        %v3205 = vpop.trf.xlu0
        %v3206 = vpop.trf.xlu0
        %v3207 = vpop.trf.xlu0
        %v3208 = vpop.trf.xlu0
        %v3209 = vpop.trf.xlu0
        %v3210 = vpop.trf.xlu0
        %v3211 = vpop.trf.xlu0
        %v3212 = vpop.trf.xlu0
        %v3213 = vpop.trf.xlu0
        %v3214 = vpop.trf.xlu0
        %v3215 = vpop.trf.xlu0
        %v3216 = vpop.trf.xlu0
        %3217 = vxpose.xlu0.b32.start [1/16] %v3115, 128
        %3218 = vxpose.xlu0.b32.cont [2/16] %v3118, 128
        %3219 = vxpose.xlu0.b32.cont [3/16] 0.0, 128
        %3220 = vxpose.xlu0.b32.cont [4/16] 0.0, 128
        %3221 = vxpose.xlu0.b32.cont [5/16] 0.0, 128
        %3222 = vxpose.xlu0.b32.cont [6/16] 0.0, 128
        %3223 = vxpose.xlu0.b32.cont [7/16] 0.0, 128
        %3224 = vxpose.xlu0.b32.cont [8/16] 0.0, 128
        %3225 = vxpose.xlu0.b32.cont [9/16] 0.0, 128
        %3226 = vxpose.xlu0.b32.cont [10/16] 0.0, 128
        %3227 = vxpose.xlu0.b32.cont [11/16] 0.0, 128
        %3228 = vxpose.xlu0.b32.cont [12/16] 0.0, 128
        %3229 = vxpose.xlu0.b32.cont [13/16] 0.0, 128
        %3230 = vxpose.xlu0.b32.cont [14/16] 0.0, 128
        %3231 = vxpose.xlu0.b32.cont [15/16] 0.0, 128
        %3232 = vxpose.xlu0.b32.end [16/16] 0.0, 128
        %v3233 = vpop.trf.xlu0
        %v3234 = vpop.trf.xlu0
        %v3235 = vpop.trf.xlu0
        %v3236 = vpop.trf.xlu0
        %v3237 = vpop.trf.xlu0
        %v3238 = vpop.trf.xlu0
        %v3239 = vpop.trf.xlu0
        %v3240 = vpop.trf.xlu0
        %v3241 = vpop.trf.xlu0
        %v3242 = vpop.trf.xlu0
        %v3243 = vpop.trf.xlu0
        %v3244 = vpop.trf.xlu0
        %v3245 = vpop.trf.xlu0
        %v3246 = vpop.trf.xlu0
        %v3247 = vpop.trf.xlu0
        %v3248 = vpop.trf.xlu0
        %v3249 = vcombine.low %v3137, %v3201
        %v3250 = vcombine.high %v3137, %v3201
        %v3252 = vunpack.c.l.s4 1983009808
        %v3253 = vunpack.c.0.s8 %v3252
        %v3254 = vlaneseq
        %v3255 = vshrl.u32 %v3254, 7
        %v3256 = vsub.s32 %v3253, %v3255
        %v3257 = vrot.slane %v3249, %v3256
        %v3259 = vunpack.c.l.s4 1983009808
        %v3260 = vunpack.c.0.s8 %v3259
        %v3261 = vlaneseq
        %v3262 = vshrl.u32 %v3261, 7
        %v3263 = vsub.s32 %v3260, %v3262
        %v3264 = vrot.slane %v3250, %v3263
        %v3265 = vcombine.low %v3169, %v3233
        %v3266 = vcombine.high %v3169, %v3233
        %v3268 = vunpack.c.l.s4 1983009808
        %v3269 = vunpack.c.0.s8 %v3268
        %v3270 = vlaneseq
        %v3271 = vshrl.u32 %v3270, 7
        %v3272 = vsub.s32 %v3269, %v3271
        %v3273 = vrot.slane %v3265, %v3272
        %v3275 = vunpack.c.l.s4 1983009808
        %v3276 = vunpack.c.0.s8 %v3275
        %v3277 = vlaneseq
        %v3278 = vshrl.u32 %v3277, 7
        %v3279 = vsub.s32 %v3276, %v3278
        %v3280 = vrot.slane %v3266, %v3279
        %v3281 = vcombine.low %v3257, %v3273
        %v3282 = vcombine.high %v3257, %v3273
        %v3284 = vunpack.c.l.s4 1934713408
        %v3285 = vunpack.c.0.s8 %v3284
        %v3286 = vlaneseq
        %v3287 = vshrl.u32 %v3286, 7
        %v3288 = vsub.s32 %v3285, %v3287
        %v3289 = vrot.slane %v3281, %v3288
        %v3291 = vunpack.c.l.s4 1934713408
        %v3292 = vunpack.c.0.s8 %v3291
        %v3293 = vlaneseq
        %v3294 = vshrl.u32 %v3293, 7
        %v3295 = vsub.s32 %v3292, %v3294
        %v3296 = vrot.slane %v3282, %v3295
        %v3297 = vcombine.low %v3264, %v3280
        %v3298 = vcombine.high %v3264, %v3280
        %v3300 = vunpack.c.l.s4 1934713408
        %v3301 = vunpack.c.0.s8 %v3300
        %v3302 = vlaneseq
        %v3303 = vshrl.u32 %v3302, 7
        %v3304 = vsub.s32 %v3301, %v3303
        %v3305 = vrot.slane %v3297, %v3304
        %v3307 = vunpack.c.l.s4 1934713408
        %v3308 = vunpack.c.0.s8 %v3307
        %v3309 = vlaneseq
        %v3310 = vshrl.u32 %v3309, 7
        %v3311 = vsub.s32 %v3308, %v3310
        %v3312 = vrot.slane %v3298, %v3311
        %v3313 = vcombine.high %v3289, 0.0
        %v3314 = vcombine.high %v3296, 0.0
        %v3315 = vcombine.high %v3305, 0.0
        %v3316 = vcombine.high %v3312, 0.0
        %v3317 = vcombine.low %v3289, %v3296
        %v3319 = vunpack.c.l.s4 1983009808
        %v3320 = vunpack.c.0.s8 %v3319
        %v3321 = vlaneseq
        %v3322 = vshrl.u32 %v3321, 7
        %v3323 = vsub.s32 %v3320, %v3322
        %v3324 = vrot.slane %v3317, %v3323
        %v3325 = vcombine.low %v3313, %v3314
        %v3327 = vunpack.c.l.s4 1983009808
        %v3328 = vunpack.c.0.s8 %v3327
        %v3329 = vlaneseq
        %v3330 = vshrl.u32 %v3329, 7
        %v3331 = vsub.s32 %v3328, %v3330
        %v3332 = vrot.slane %v3325, %v3331
        %v3333 = vcombine.low %v3305, %v3312
        %v3335 = vunpack.c.l.s4 1983009808
        %v3336 = vunpack.c.0.s8 %v3335
        %v3337 = vlaneseq
        %v3338 = vshrl.u32 %v3337, 7
        %v3339 = vsub.s32 %v3336, %v3338
        %v3340 = vrot.slane %v3333, %v3339
        %v3341 = vcombine.low %v3315, %v3316
        %v3343 = vunpack.c.l.s4 1983009808
        %v3344 = vunpack.c.0.s8 %v3343
        %v3345 = vlaneseq
        %v3346 = vshrl.u32 %v3345, 7
        %v3347 = vsub.s32 %v3344, %v3346
        %v3348 = vrot.slane %v3341, %v3347
        %v3349 = vcombine.low %v3324, %v3332
        %v3350 = vcombine.high %v3324, %v3332
        %v3352 = vunpack.c.l.s4 1934713408
        %v3353 = vunpack.c.0.s8 %v3352
        %v3354 = vlaneseq
        %v3355 = vshrl.u32 %v3354, 7
        %v3356 = vsub.s32 %v3353, %v3355
        %v3357 = vrot.slane %v3349, %v3356
        %v3359 = vunpack.c.l.s4 1934713408
        %v3360 = vunpack.c.0.s8 %v3359
        %v3361 = vlaneseq
        %v3362 = vshrl.u32 %v3361, 7
        %v3363 = vsub.s32 %v3360, %v3362
        %v3364 = vrot.slane %v3350, %v3363
        %v3365 = vcombine.low %v3340, %v3348
        %v3366 = vcombine.high %v3340, %v3348
        %v3368 = vunpack.c.l.s4 1934713408
        %v3369 = vunpack.c.0.s8 %v3368
        %v3370 = vlaneseq
        %v3371 = vshrl.u32 %v3370, 7
        %v3372 = vsub.s32 %v3369, %v3371
        %v3373 = vrot.slane %v3365, %v3372
        %v3375 = vunpack.c.l.s4 1934713408
        %v3376 = vunpack.c.0.s8 %v3375
        %v3377 = vlaneseq
        %v3378 = vshrl.u32 %v3377, 7
        %v3379 = vsub.s32 %v3376, %v3378
        %v3380 = vrot.slane %v3366, %v3379
        %v3381 = vcombine.low %v3357, %v3373
        %v3382 = vcombine.high %v3357, %v3373
        %v3383 = vcombine.low %v3364, %v3380
        %v3384 = vcombine.high %v3364, %v3380
        %3386 = vrot.lane.b32.xlu0 %v3382, 16
        %v3387 = vpop.permute.xlu0 %3386
        %3390 = vrot.lane.b32.xlu0 %v3383, 32
        %v3391 = vpop.permute.xlu0 %3390
        %3394 = vrot.lane.b32.xlu0 %v3384, 48
        %v3395 = vpop.permute.xlu0 %3394
        %v3397 = vsel %vm2032, %v3381, %v3387
        %vm3398 = vcmask 261120
        %v3399 = vsel %vm3398, %v3397, %v3391
        %vm3400 = vcmask 392192
        %v3401 = vsel %vm3400, %v3399, %v3395
        %v3402 = vpack.c.bf16 %v3401, %v3401
        %v3403 = vld [vmem:[%s680] sm:$0xf]
        %v3404 = vld [vmem:[%s680 + $0x4] sm:$0xf]
        %v3405 = vld [vmem:[%s680 + $0x8] sm:$0xf]
        %v3406 = vld [vmem:[%s680 + $0xc] sm:$0xf]
        %v3407 = vld [vmem:[%s680 + $0x10] sm:$0xf]
        %v3408 = vld [vmem:[%s680 + $0x14] sm:$0xf]
        %v3409 = vld [vmem:[%s680 + $0x18] sm:$0xf]
        %v3410 = vld [vmem:[%s680 + $0x1c] sm:$0xf]
        %v3411 = vld [vmem:[%s683] sm:$0x1]
        %v3413 = vlaneseq
        %v3414 = vshrl.u32 %v3413, 7
        %v3415 = vsub.s32 0, %v3414
        %v3416 = vrot.slane %v3411, %v3415
        %v3426 = vunpack.c.l.b16 %v3403
        %v3427 = vunpack.c.l.b16 %v3404
        %v3428 = vunpack.c.l.b16 %v3405
        %v3429 = vunpack.c.l.b16 %v3406
        %v3430 = vunpack.c.l.b16 %v3407
        %v3431 = vunpack.c.l.b16 %v3408
        %v3432 = vunpack.c.l.b16 %v3409
        %v3433 = vunpack.c.l.b16 %v3410
        %v3434 = vpack.c.b16 %v3427, %v3426
        %v3435 = vpack.c.b16 %v3429, %v3428
        %v3436 = vpack.c.b16 %v3431, %v3430
        %v3437 = vpack.c.b16 %v3433, %v3432
        %v3443 = vsel %vm1005, %v3402, 0
        %3445 = vmatprep.subr.bf16.mxu0 0
        %3446 = vmatpush1.bf16.msra.mxu0 %v3434
        %3447 = vmatprep.subr.bf16.mxu0 0
        %3448 = vmatpush1.bf16.msra.mxu0 %v3435
        %3449 = vmatprep.subr.bf16.mxu0 0
        %3450 = vmatpush1.bf16.msra.mxu0 %v3436
        %3451 = vmatprep.subr.bf16.mxu0 0
        %3452 = vmatpush1.bf16.msra.mxu0 %v3437
        %3453 = vmatprep.subr.bf16.mxu0 0
        %3454 = vmatpush1.bf16.msra.mxu0 0
        %3455 = vmatprep.subr.bf16.mxu0 0
        %3456 = vmatpush1.bf16.msra.mxu0 0
        %3457 = vmatprep.subr.bf16.mxu0 0
        %3458 = vmatpush1.bf16.msra.mxu0 0
        %3459 = vmatprep.subr.bf16.mxu0 0
        %3460 = vmatpush1.bf16.msra.mxu0 0
        %3461 = vmatprep.subr.bf16.mxu0 0
        %3462 = vmatpush1.bf16.msra.mxu0 0
        %3463 = vmatprep.subr.bf16.mxu0 0
        %3464 = vmatpush1.bf16.msra.mxu0 0
        %3465 = vmatprep.subr.bf16.mxu0 0
        %3466 = vmatpush1.bf16.msra.mxu0 0
        %3467 = vmatprep.subr.bf16.mxu0 0
        %3468 = vmatpush1.bf16.msra.mxu0 0
        %3469 = vmatprep.subr.bf16.mxu0 0
        %3470 = vmatpush1.bf16.msra.mxu0 0
        %3471 = vmatprep.subr.bf16.mxu0 0
        %3472 = vmatpush1.bf16.msra.mxu0 0
        %3473 = vmatprep.subr.bf16.mxu0 0
        %3474 = vmatpush1.bf16.msra.mxu0 0
        %3475 = vmatprep.subr.bf16.mxu0 0
        %3476 = vmatpush1.bf16.msra.mxu0 0
        %3477 = vmatprep.mubr.bf16.mxu0 0
        %3478 = vmatmul.mubr.bf16.gmra.mrb[0].mxu0 %v3443
        %v3479 = vpop.f32.mrb[0].mxu0
        %v3480 = vadd.f32 %v3416, %v3479
        %v3481 = vpop.f32.mrb[0].mxu0
        %v3482 = vpop.f32.mrb[0].mxu0
        %v3483 = vpop.f32.mrb[0].mxu0
        %3484 = vdwg.mxu0
        %v3485 = vadd.f32 %v943, %v3480
        %v3486 = vld [vmem:[%s686] sm:$0x1]
        %v3487 = vld [vmem:[%s689] sm:$0x1]
        %v3488 = vsel %vm1005, %v3485, 0.0
        %3489 = vadd.xlane.f32.xlu0 %v3488
        %v3490 = vpop.xlane.xlu0 %3489
        %v3491 = vrcp.pop 64.0
        %v3492 = vmul.f32 %v3490, %v3491
        %v3493 = vsub.f32 %v3485, %v3492
        %v3494 = vmul.f32 %v3493, %v3493
        %v3495 = vsel %vm1005, %v3494, 0.0
        %3496 = vadd.xlane.f32.xlu0 %v3495
        %v3497 = vpop.xlane.xlu0 %3496
        %v3498 = vmul.f32 %v3497, %v3491
        %v3499 = vadd.f32 %v3498, 1e-05
        %v3500 = vrsqrt.pop %v3499
        %v3501 = vmul.f32 %v3493, %v3500
        %v3503 = vlaneseq
        %v3504 = vshrl.u32 %v3503, 7
        %v3505 = vsub.s32 0, %v3504
        %v3506 = vrot.slane %v3486, %v3505
        %v3508 = vmul.f32 %v3501, %v3506
        %v3510 = vlaneseq
        %v3511 = vshrl.u32 %v3510, 7
        %v3512 = vsub.s32 0, %v3511
        %v3513 = vrot.slane %v3487, %v3512
        %v3515 = vadd.f32 %v3508, %v3513
        %v3516 = vpack.c.bf16 %v3515, %v3515
        %v3517 = vld [vmem:[%s694] sm:$0xff]
        %v3518 = vld [vmem:[%s694 + $0x8] sm:$0xff]
        %v3519 = vld [vmem:[%s694 + $0x10] sm:$0xff]
        %v3520 = vld [vmem:[%s694 + $0x18] sm:$0xff]
        %v3521 = vld [vmem:[%s694 + $0x20] sm:$0xff]
        %v3522 = vld [vmem:[%s694 + $0x28] sm:$0xff]
        %v3523 = vld [vmem:[%s694 + $0x30] sm:$0xff]
        %v3524 = vld [vmem:[%s694 + $0x38] sm:$0xff]
        %v3525 = vld [vmem:[%s694 + $0x40] sm:$0xff]
        %v3526 = vld [vmem:[%s694 + $0x48] sm:$0xff]
        %v3527 = vld [vmem:[%s694 + $0x50] sm:$0xff]
        %v3528 = vld [vmem:[%s694 + $0x58] sm:$0xff]
        %v3529 = vld [vmem:[%s694 + $0x60] sm:$0xff]
        %v3530 = vld [vmem:[%s694 + $0x68] sm:$0xff]
        %v3531 = vld [vmem:[%s694 + $0x70] sm:$0xff]
        %v3532 = vld [vmem:[%s694 + $0x78] sm:$0xff]
        %v3533 = vld [vmem:[%s694 + $0x80] sm:$0xff]
        %v3534 = vld [vmem:[%s694 + $0x88] sm:$0xff]
        %v3535 = vld [vmem:[%s694 + $0x90] sm:$0xff]
        %v3536 = vld [vmem:[%s694 + $0x98] sm:$0xff]
        %v3537 = vld [vmem:[%s694 + $0xa0] sm:$0xff]
        %v3538 = vld [vmem:[%s694 + $0xa8] sm:$0xff]
        %v3539 = vld [vmem:[%s694 + $0xb0] sm:$0xff]
        %v3540 = vld [vmem:[%s694 + $0xb8] sm:$0xff]
        %v3541 = vld [vmem:[%s694 + $0xc0] sm:$0xff]
        %v3542 = vld [vmem:[%s694 + $0xc8] sm:$0xff]
        %v3543 = vld [vmem:[%s694 + $0xd0] sm:$0xff]
        %v3544 = vld [vmem:[%s694 + $0xd8] sm:$0xff]
        %v3545 = vld [vmem:[%s694 + $0xe0] sm:$0xff]
        %v3546 = vld [vmem:[%s694 + $0xe8] sm:$0xff]
        %v3547 = vld [vmem:[%s694 + $0xf0] sm:$0xff]
        %v3548 = vld [vmem:[%s694 + $0xf8] sm:$0xff]
        %v3549 = vld [vmem:[%s694 + $0x100] sm:$0xff]
        %v3550 = vld [vmem:[%s694 + $0x108] sm:$0xff]
        %v3551 = vld [vmem:[%s694 + $0x110] sm:$0xff]
        %v3552 = vld [vmem:[%s694 + $0x118] sm:$0xff]
        %v3553 = vld [vmem:[%s694 + $0x120] sm:$0xff]
        %v3554 = vld [vmem:[%s694 + $0x128] sm:$0xff]
        %v3555 = vld [vmem:[%s694 + $0x130] sm:$0xff]
        %v3556 = vld [vmem:[%s694 + $0x138] sm:$0xff]
        %v3557 = vld [vmem:[%s694 + $0x140] sm:$0xff]
        %v3558 = vld [vmem:[%s694 + $0x148] sm:$0xff]
        %v3559 = vld [vmem:[%s694 + $0x150] sm:$0xff]
        %v3560 = vld [vmem:[%s694 + $0x158] sm:$0xff]
        %v3561 = vld [vmem:[%s694 + $0x160] sm:$0xff]
        %v3562 = vld [vmem:[%s694 + $0x168] sm:$0xff]
        %v3563 = vld [vmem:[%s694 + $0x170] sm:$0xff]
        %v3564 = vld [vmem:[%s694 + $0x178] sm:$0xff]
        %v3565 = vld [vmem:[%s694 + $0x180] sm:$0xff]
        %v3566 = vld [vmem:[%s694 + $0x188] sm:$0xff]
        %v3567 = vld [vmem:[%s694 + $0x190] sm:$0xff]
        %v3568 = vld [vmem:[%s694 + $0x198] sm:$0xff]
        %v3569 = vld [vmem:[%s694 + $0x1a0] sm:$0xff]
        %v3570 = vld [vmem:[%s694 + $0x1a8] sm:$0xff]
        %v3571 = vld [vmem:[%s694 + $0x1b0] sm:$0xff]
        %v3572 = vld [vmem:[%s694 + $0x1b8] sm:$0xff]
        %v3573 = vld [vmem:[%s694 + $0x1c0] sm:$0xff]
        %v3574 = vld [vmem:[%s694 + $0x1c8] sm:$0xff]
        %v3575 = vld [vmem:[%s694 + $0x1d0] sm:$0xff]
        %v3576 = vld [vmem:[%s694 + $0x1d8] sm:$0xff]
        %v3577 = vld [vmem:[%s694 + $0x1e0] sm:$0xff]
        %v3578 = vld [vmem:[%s694 + $0x1e8] sm:$0xff]
        %v3579 = vld [vmem:[%s694 + $0x1f0] sm:$0xff]
        %v3580 = vld [vmem:[%s694 + $0x1f8] sm:$0xff]
        %v3581 = vld [vmem:[%s698] sm:$0xff]
        %v3582 = vld [vmem:[%s698 + $0x8] sm:$0xff]
        %v3585 = vlaneseq
        %v3586 = vshrl.u32 %v3585, 7
        %v3587 = vsub.s32 0, %v3586
        %v3588 = vrot.slane %v3581, %v3587
        %v3589 = vlaneseq
        %v3590 = vshrl.u32 %v3589, 7
        %v3591 = vsub.s32 1, %v3590
        %v3592 = vrot.slane %v3581, %v3591
        %v3593 = vlaneseq
        %v3594 = vshrl.u32 %v3593, 7
        %v3595 = vsub.s32 2, %v3594
        %v3596 = vrot.slane %v3581, %v3595
        %v3597 = vlaneseq
        %v3598 = vshrl.u32 %v3597, 7
        %v3599 = vsub.s32 3, %v3598
        %v3600 = vrot.slane %v3581, %v3599
        %v3601 = vlaneseq
        %v3602 = vshrl.u32 %v3601, 7
        %v3603 = vsub.s32 4, %v3602
        %v3604 = vrot.slane %v3581, %v3603
        %v3605 = vlaneseq
        %v3606 = vshrl.u32 %v3605, 7
        %v3607 = vsub.s32 5, %v3606
        %v3608 = vrot.slane %v3581, %v3607
        %v3609 = vlaneseq
        %v3610 = vshrl.u32 %v3609, 7
        %v3611 = vsub.s32 6, %v3610
        %v3612 = vrot.slane %v3581, %v3611
        %v3613 = vlaneseq
        %v3614 = vshrl.u32 %v3613, 7
        %v3615 = vsub.s32 7, %v3614
        %v3616 = vrot.slane %v3581, %v3615
        %v3617 = vlaneseq
        %v3618 = vshrl.u32 %v3617, 7
        %v3619 = vsub.s32 0, %v3618
        %v3620 = vrot.slane %v3582, %v3619
        %v3621 = vlaneseq
        %v3622 = vshrl.u32 %v3621, 7
        %v3623 = vsub.s32 1, %v3622
        %v3624 = vrot.slane %v3582, %v3623
        %v3625 = vlaneseq
        %v3626 = vshrl.u32 %v3625, 7
        %v3627 = vsub.s32 2, %v3626
        %v3628 = vrot.slane %v3582, %v3627
        %v3629 = vlaneseq
        %v3630 = vshrl.u32 %v3629, 7
        %v3631 = vsub.s32 3, %v3630
        %v3632 = vrot.slane %v3582, %v3631
        %v3633 = vlaneseq
        %v3634 = vshrl.u32 %v3633, 7
        %v3635 = vsub.s32 4, %v3634
        %v3636 = vrot.slane %v3582, %v3635
        %v3637 = vlaneseq
        %v3638 = vshrl.u32 %v3637, 7
        %v3639 = vsub.s32 5, %v3638
        %v3640 = vrot.slane %v3582, %v3639
        %v3641 = vlaneseq
        %v3642 = vshrl.u32 %v3641, 7
        %v3643 = vsub.s32 6, %v3642
        %v3644 = vrot.slane %v3582, %v3643
        %v3645 = vlaneseq
        %v3646 = vshrl.u32 %v3645, 7
        %v3647 = vsub.s32 7, %v3646
        %v3648 = vrot.slane %v3582, %v3647
        %v3729 = vunpack.c.l.b16 %v3517
        %v3730 = vunpack.c.h.b16 %v3517
        %v3731 = vunpack.c.l.b16 %v3518
        %v3732 = vunpack.c.h.b16 %v3518
        %v3733 = vunpack.c.l.b16 %v3519
        %v3734 = vunpack.c.h.b16 %v3519
        %v3735 = vunpack.c.l.b16 %v3520
        %v3736 = vunpack.c.h.b16 %v3520
        %v3737 = vunpack.c.l.b16 %v3521
        %v3738 = vunpack.c.h.b16 %v3521
        %v3739 = vunpack.c.l.b16 %v3522
        %v3740 = vunpack.c.h.b16 %v3522
        %v3741 = vunpack.c.l.b16 %v3523
        %v3742 = vunpack.c.h.b16 %v3523
        %v3743 = vunpack.c.l.b16 %v3524
        %v3744 = vunpack.c.h.b16 %v3524
        %v3745 = vunpack.c.l.b16 %v3525
        %v3746 = vunpack.c.h.b16 %v3525
        %v3747 = vunpack.c.l.b16 %v3526
        %v3748 = vunpack.c.h.b16 %v3526
        %v3749 = vunpack.c.l.b16 %v3527
        %v3750 = vunpack.c.h.b16 %v3527
        %v3751 = vunpack.c.l.b16 %v3528
        %v3752 = vunpack.c.h.b16 %v3528
        %v3753 = vunpack.c.l.b16 %v3529
        %v3754 = vunpack.c.h.b16 %v3529
        %v3755 = vunpack.c.l.b16 %v3530
        %v3756 = vunpack.c.h.b16 %v3530
        %v3757 = vunpack.c.l.b16 %v3531
        %v3758 = vunpack.c.h.b16 %v3531
        %v3759 = vunpack.c.l.b16 %v3532
        %v3760 = vunpack.c.h.b16 %v3532
        %v3761 = vunpack.c.l.b16 %v3533
        %v3762 = vunpack.c.h.b16 %v3533
        %v3763 = vunpack.c.l.b16 %v3534
        %v3764 = vunpack.c.h.b16 %v3534
        %v3765 = vunpack.c.l.b16 %v3535
        %v3766 = vunpack.c.h.b16 %v3535
        %v3767 = vunpack.c.l.b16 %v3536
        %v3768 = vunpack.c.h.b16 %v3536
        %v3769 = vunpack.c.l.b16 %v3537
        %v3770 = vunpack.c.h.b16 %v3537
        %v3771 = vunpack.c.l.b16 %v3538
        %v3772 = vunpack.c.h.b16 %v3538
        %v3773 = vunpack.c.l.b16 %v3539
        %v3774 = vunpack.c.h.b16 %v3539
        %v3775 = vunpack.c.l.b16 %v3540
        %v3776 = vunpack.c.h.b16 %v3540
        %v3777 = vunpack.c.l.b16 %v3541
        %v3778 = vunpack.c.h.b16 %v3541
        %v3779 = vunpack.c.l.b16 %v3542
        %v3780 = vunpack.c.h.b16 %v3542
        %v3781 = vunpack.c.l.b16 %v3543
        %v3782 = vunpack.c.h.b16 %v3543
        %v3783 = vunpack.c.l.b16 %v3544
        %v3784 = vunpack.c.h.b16 %v3544
        %v3785 = vunpack.c.l.b16 %v3545
        %v3786 = vunpack.c.h.b16 %v3545
        %v3787 = vunpack.c.l.b16 %v3546
        %v3788 = vunpack.c.h.b16 %v3546
        %v3789 = vunpack.c.l.b16 %v3547
        %v3790 = vunpack.c.h.b16 %v3547
        %v3791 = vunpack.c.l.b16 %v3548
        %v3792 = vunpack.c.h.b16 %v3548
        %v3793 = vunpack.c.l.b16 %v3549
        %v3794 = vunpack.c.h.b16 %v3549
        %v3795 = vunpack.c.l.b16 %v3550
        %v3796 = vunpack.c.h.b16 %v3550
        %v3797 = vunpack.c.l.b16 %v3551
        %v3798 = vunpack.c.h.b16 %v3551
        %v3799 = vunpack.c.l.b16 %v3552
        %v3800 = vunpack.c.h.b16 %v3552
        %v3801 = vunpack.c.l.b16 %v3553
        %v3802 = vunpack.c.h.b16 %v3553
        %v3803 = vunpack.c.l.b16 %v3554
        %v3804 = vunpack.c.h.b16 %v3554
        %v3805 = vunpack.c.l.b16 %v3555
        %v3806 = vunpack.c.h.b16 %v3555
        %v3807 = vunpack.c.l.b16 %v3556
        %v3808 = vunpack.c.h.b16 %v3556
        %v3809 = vunpack.c.l.b16 %v3557
        %v3810 = vunpack.c.h.b16 %v3557
        %v3811 = vunpack.c.l.b16 %v3558
        %v3812 = vunpack.c.h.b16 %v3558
        %v3813 = vunpack.c.l.b16 %v3559
        %v3814 = vunpack.c.h.b16 %v3559
        %v3815 = vunpack.c.l.b16 %v3560
        %v3816 = vunpack.c.h.b16 %v3560
        %v3817 = vunpack.c.l.b16 %v3561
        %v3818 = vunpack.c.h.b16 %v3561
        %v3819 = vunpack.c.l.b16 %v3562
        %v3820 = vunpack.c.h.b16 %v3562
        %v3821 = vunpack.c.l.b16 %v3563
        %v3822 = vunpack.c.h.b16 %v3563
        %v3823 = vunpack.c.l.b16 %v3564
        %v3824 = vunpack.c.h.b16 %v3564
        %v3825 = vunpack.c.l.b16 %v3565
        %v3826 = vunpack.c.h.b16 %v3565
        %v3827 = vunpack.c.l.b16 %v3566
        %v3828 = vunpack.c.h.b16 %v3566
        %v3829 = vunpack.c.l.b16 %v3567
        %v3830 = vunpack.c.h.b16 %v3567
        %v3831 = vunpack.c.l.b16 %v3568
        %v3832 = vunpack.c.h.b16 %v3568
        %v3833 = vunpack.c.l.b16 %v3569
        %v3834 = vunpack.c.h.b16 %v3569
        %v3835 = vunpack.c.l.b16 %v3570
        %v3836 = vunpack.c.h.b16 %v3570
        %v3837 = vunpack.c.l.b16 %v3571
        %v3838 = vunpack.c.h.b16 %v3571
        %v3839 = vunpack.c.l.b16 %v3572
        %v3840 = vunpack.c.h.b16 %v3572
        %v3841 = vunpack.c.l.b16 %v3573
        %v3842 = vunpack.c.h.b16 %v3573
        %v3843 = vunpack.c.l.b16 %v3574
        %v3844 = vunpack.c.h.b16 %v3574
        %v3845 = vunpack.c.l.b16 %v3575
        %v3846 = vunpack.c.h.b16 %v3575
        %v3847 = vunpack.c.l.b16 %v3576
        %v3848 = vunpack.c.h.b16 %v3576
        %v3849 = vunpack.c.l.b16 %v3577
        %v3850 = vunpack.c.h.b16 %v3577
        %v3851 = vunpack.c.l.b16 %v3578
        %v3852 = vunpack.c.h.b16 %v3578
        %v3853 = vunpack.c.l.b16 %v3579
        %v3854 = vunpack.c.h.b16 %v3579
        %v3855 = vunpack.c.l.b16 %v3580
        %v3856 = vunpack.c.h.b16 %v3580
        %v3857 = vpack.c.b16 %v3745, %v3729
        %v3858 = vpack.c.b16 %v3746, %v3730
        %v3859 = vpack.c.b16 %v3747, %v3731
        %v3860 = vpack.c.b16 %v3748, %v3732
        %v3861 = vpack.c.b16 %v3749, %v3733
        %v3862 = vpack.c.b16 %v3750, %v3734
        %v3863 = vpack.c.b16 %v3751, %v3735
        %v3864 = vpack.c.b16 %v3752, %v3736
        %v3865 = vpack.c.b16 %v3753, %v3737
        %v3866 = vpack.c.b16 %v3754, %v3738
        %v3867 = vpack.c.b16 %v3755, %v3739
        %v3868 = vpack.c.b16 %v3756, %v3740
        %v3869 = vpack.c.b16 %v3757, %v3741
        %v3870 = vpack.c.b16 %v3758, %v3742
        %v3871 = vpack.c.b16 %v3759, %v3743
        %v3872 = vpack.c.b16 %v3760, %v3744
        %v3873 = vpack.c.b16 %v3777, %v3761
        %v3874 = vpack.c.b16 %v3778, %v3762
        %v3875 = vpack.c.b16 %v3779, %v3763
        %v3876 = vpack.c.b16 %v3780, %v3764
        %v3877 = vpack.c.b16 %v3781, %v3765
        %v3878 = vpack.c.b16 %v3782, %v3766
        %v3879 = vpack.c.b16 %v3783, %v3767
        %v3880 = vpack.c.b16 %v3784, %v3768
        %v3881 = vpack.c.b16 %v3785, %v3769
        %v3882 = vpack.c.b16 %v3786, %v3770
        %v3883 = vpack.c.b16 %v3787, %v3771
        %v3884 = vpack.c.b16 %v3788, %v3772
        %v3885 = vpack.c.b16 %v3789, %v3773
        %v3886 = vpack.c.b16 %v3790, %v3774
        %v3887 = vpack.c.b16 %v3791, %v3775
        %v3888 = vpack.c.b16 %v3792, %v3776
        %v3889 = vpack.c.b16 %v3809, %v3793
        %v3890 = vpack.c.b16 %v3810, %v3794
        %v3891 = vpack.c.b16 %v3811, %v3795
        %v3892 = vpack.c.b16 %v3812, %v3796
        %v3893 = vpack.c.b16 %v3813, %v3797
        %v3894 = vpack.c.b16 %v3814, %v3798
        %v3895 = vpack.c.b16 %v3815, %v3799
        %v3896 = vpack.c.b16 %v3816, %v3800
        %v3897 = vpack.c.b16 %v3817, %v3801
        %v3898 = vpack.c.b16 %v3818, %v3802
        %v3899 = vpack.c.b16 %v3819, %v3803
        %v3900 = vpack.c.b16 %v3820, %v3804
        %v3901 = vpack.c.b16 %v3821, %v3805
        %v3902 = vpack.c.b16 %v3822, %v3806
        %v3903 = vpack.c.b16 %v3823, %v3807
        %v3904 = vpack.c.b16 %v3824, %v3808
        %v3905 = vpack.c.b16 %v3841, %v3825
        %v3906 = vpack.c.b16 %v3842, %v3826
        %v3907 = vpack.c.b16 %v3843, %v3827
        %v3908 = vpack.c.b16 %v3844, %v3828
        %v3909 = vpack.c.b16 %v3845, %v3829
        %v3910 = vpack.c.b16 %v3846, %v3830
        %v3911 = vpack.c.b16 %v3847, %v3831
        %v3912 = vpack.c.b16 %v3848, %v3832
        %v3913 = vpack.c.b16 %v3849, %v3833
        %v3914 = vpack.c.b16 %v3850, %v3834
        %v3915 = vpack.c.b16 %v3851, %v3835
        %v3916 = vpack.c.b16 %v3852, %v3836
        %v3917 = vpack.c.b16 %v3853, %v3837
        %v3918 = vpack.c.b16 %v3854, %v3838
        %v3919 = vpack.c.b16 %v3855, %v3839
        %v3920 = vpack.c.b16 %v3856, %v3840
        %v3986 = vsel %vm1005, %v3516, 0
        %3988 = vmatprep.subr.bf16.mxu0 %v3858
        %3989 = vmatpush1.bf16.msra.mxu0 %v3857
        %3990 = vmatprep.subr.bf16.mxu0 %v3874
        %3991 = vmatpush1.bf16.msra.mxu0 %v3873
        %3992 = vmatprep.subr.bf16.mxu0 %v3890
        %3993 = vmatpush1.bf16.msra.mxu0 %v3889
        %3994 = vmatprep.subr.bf16.mxu0 %v3906
        %3995 = vmatpush1.bf16.msra.mxu0 %v3905
        %3996 = vmatprep.subr.bf16.mxu0 0
        %3997 = vmatpush1.bf16.msra.mxu0 0
        %3998 = vmatprep.subr.bf16.mxu0 0
        %3999 = vmatpush1.bf16.msra.mxu0 0
        %4000 = vmatprep.subr.bf16.mxu0 0
        %4001 = vmatpush1.bf16.msra.mxu0 0
        %4002 = vmatprep.subr.bf16.mxu0 0
        %4003 = vmatpush1.bf16.msra.mxu0 0
        %4004 = vmatprep.subr.bf16.mxu0 0
        %4005 = vmatpush1.bf16.msra.mxu0 0
        %4006 = vmatprep.subr.bf16.mxu0 0
        %4007 = vmatpush1.bf16.msra.mxu0 0
        %4008 = vmatprep.subr.bf16.mxu0 0
        %4009 = vmatpush1.bf16.msra.mxu0 0
        %4010 = vmatprep.subr.bf16.mxu0 0
        %4011 = vmatpush1.bf16.msra.mxu0 0
        %4012 = vmatprep.subr.bf16.mxu0 0
        %4013 = vmatpush1.bf16.msra.mxu0 0
        %4014 = vmatprep.subr.bf16.mxu0 0
        %4015 = vmatpush1.bf16.msra.mxu0 0
        %4016 = vmatprep.subr.bf16.mxu0 0
        %4017 = vmatpush1.bf16.msra.mxu0 0
        %4018 = vmatprep.subr.bf16.mxu0 0
        %4019 = vmatpush1.bf16.msra.mxu0 0
        %4020 = vmatprep.mubr.bf16.mxu0 0
        %4021 = vmatmul.mubr.bf16.gmra.mrb[0].mxu0 %v3986
        %v4022 = vpop.f32.mrb[0].mxu0
        %v4023 = vadd.f32 %v3588, %v4022
        %v4024 = vpop.f32.mrb[0].mxu0
        %v4025 = vadd.f32 %v3592, %v4024
        %v4026 = vpop.f32.mrb[0].mxu0
        %v4027 = vpop.f32.mrb[0].mxu0
        %4028 = vdwg.mxu0
        %4029 = vmatprep.subr.bf16.mxu0 %v3860
        %4030 = vmatpush1.bf16.msra.mxu0 %v3859
        %4031 = vmatprep.subr.bf16.mxu0 %v3876
        %4032 = vmatpush1.bf16.msra.mxu0 %v3875
        %4033 = vmatprep.subr.bf16.mxu0 %v3892
        %4034 = vmatpush1.bf16.msra.mxu0 %v3891
        %4035 = vmatprep.subr.bf16.mxu0 %v3908
        %4036 = vmatpush1.bf16.msra.mxu0 %v3907
        %4037 = vmatprep.subr.bf16.mxu0 0
        %4038 = vmatpush1.bf16.msra.mxu0 0
        %4039 = vmatprep.subr.bf16.mxu0 0
        %4040 = vmatpush1.bf16.msra.mxu0 0
        %4041 = vmatprep.subr.bf16.mxu0 0
        %4042 = vmatpush1.bf16.msra.mxu0 0
        %4043 = vmatprep.subr.bf16.mxu0 0
        %4044 = vmatpush1.bf16.msra.mxu0 0
        %4045 = vmatprep.subr.bf16.mxu0 0
        %4046 = vmatpush1.bf16.msra.mxu0 0
        %4047 = vmatprep.subr.bf16.mxu0 0
        %4048 = vmatpush1.bf16.msra.mxu0 0
        %4049 = vmatprep.subr.bf16.mxu0 0
        %4050 = vmatpush1.bf16.msra.mxu0 0
        %4051 = vmatprep.subr.bf16.mxu0 0
        %4052 = vmatpush1.bf16.msra.mxu0 0
        %4053 = vmatprep.subr.bf16.mxu0 0
        %4054 = vmatpush1.bf16.msra.mxu0 0
        %4055 = vmatprep.subr.bf16.mxu0 0
        %4056 = vmatpush1.bf16.msra.mxu0 0
        %4057 = vmatprep.subr.bf16.mxu0 0
        %4058 = vmatpush1.bf16.msra.mxu0 0
        %4059 = vmatprep.subr.bf16.mxu0 0
        %4060 = vmatpush1.bf16.msra.mxu0 0
        %4061 = vmatprep.mubr.bf16.mxu0 0
        %4062 = vmatmul.mubr.bf16.gmra.mrb[0].mxu0 %v3986
        %v4063 = vpop.f32.mrb[0].mxu0
        %v4064 = vadd.f32 %v3596, %v4063
        %v4065 = vpop.f32.mrb[0].mxu0
        %v4066 = vadd.f32 %v3600, %v4065
        %v4067 = vpop.f32.mrb[0].mxu0
        %v4068 = vpop.f32.mrb[0].mxu0
        %4069 = vdwg.mxu0
        %4070 = vmatprep.subr.bf16.mxu0 %v3862
        %4071 = vmatpush1.bf16.msra.mxu0 %v3861
        %4072 = vmatprep.subr.bf16.mxu0 %v3878
        %4073 = vmatpush1.bf16.msra.mxu0 %v3877
        %4074 = vmatprep.subr.bf16.mxu0 %v3894
        %4075 = vmatpush1.bf16.msra.mxu0 %v3893
        %4076 = vmatprep.subr.bf16.mxu0 %v3910
        %4077 = vmatpush1.bf16.msra.mxu0 %v3909
        %4078 = vmatprep.subr.bf16.mxu0 0
        %4079 = vmatpush1.bf16.msra.mxu0 0
        %4080 = vmatprep.subr.bf16.mxu0 0
        %4081 = vmatpush1.bf16.msra.mxu0 0
        %4082 = vmatprep.subr.bf16.mxu0 0
        %4083 = vmatpush1.bf16.msra.mxu0 0
        %4084 = vmatprep.subr.bf16.mxu0 0
        %4085 = vmatpush1.bf16.msra.mxu0 0
        %4086 = vmatprep.subr.bf16.mxu0 0
        %4087 = vmatpush1.bf16.msra.mxu0 0
        %4088 = vmatprep.subr.bf16.mxu0 0
        %4089 = vmatpush1.bf16.msra.mxu0 0
        %4090 = vmatprep.subr.bf16.mxu0 0
        %4091 = vmatpush1.bf16.msra.mxu0 0
        %4092 = vmatprep.subr.bf16.mxu0 0
        %4093 = vmatpush1.bf16.msra.mxu0 0
        %4094 = vmatprep.subr.bf16.mxu0 0
        %4095 = vmatpush1.bf16.msra.mxu0 0
        %4096 = vmatprep.subr.bf16.mxu0 0
        %4097 = vmatpush1.bf16.msra.mxu0 0
        %4098 = vmatprep.subr.bf16.mxu0 0
        %4099 = vmatpush1.bf16.msra.mxu0 0
        %4100 = vmatprep.subr.bf16.mxu0 0
        %4101 = vmatpush1.bf16.msra.mxu0 0
        %4102 = vmatprep.mubr.bf16.mxu0 0
        %4103 = vmatmul.mubr.bf16.gmra.mrb[0].mxu0 %v3986
        %v4104 = vpop.f32.mrb[0].mxu0
        %v4105 = vadd.f32 %v3604, %v4104
        %v4106 = vpop.f32.mrb[0].mxu0
        %v4107 = vadd.f32 %v3608, %v4106
        %v4108 = vpop.f32.mrb[0].mxu0
        %v4109 = vpop.f32.mrb[0].mxu0
        %4110 = vdwg.mxu0
        %4111 = vmatprep.subr.bf16.mxu0 %v3864
        %4112 = vmatpush1.bf16.msra.mxu0 %v3863
        %4113 = vmatprep.subr.bf16.mxu0 %v3880
        %4114 = vmatpush1.bf16.msra.mxu0 %v3879
        %4115 = vmatprep.subr.bf16.mxu0 %v3896
        %4116 = vmatpush1.bf16.msra.mxu0 %v3895
        %4117 = vmatprep.subr.bf16.mxu0 %v3912
        %4118 = vmatpush1.bf16.msra.mxu0 %v3911
        %4119 = vmatprep.subr.bf16.mxu0 0
        %4120 = vmatpush1.bf16.msra.mxu0 0
        %4121 = vmatprep.subr.bf16.mxu0 0
        %4122 = vmatpush1.bf16.msra.mxu0 0
        %4123 = vmatprep.subr.bf16.mxu0 0
        %4124 = vmatpush1.bf16.msra.mxu0 0
        %4125 = vmatprep.subr.bf16.mxu0 0
        %4126 = vmatpush1.bf16.msra.mxu0 0
        %4127 = vmatprep.subr.bf16.mxu0 0
        %4128 = vmatpush1.bf16.msra.mxu0 0
        %4129 = vmatprep.subr.bf16.mxu0 0
        %4130 = vmatpush1.bf16.msra.mxu0 0
        %4131 = vmatprep.subr.bf16.mxu0 0
        %4132 = vmatpush1.bf16.msra.mxu0 0
        %4133 = vmatprep.subr.bf16.mxu0 0
        %4134 = vmatpush1.bf16.msra.mxu0 0
        %4135 = vmatprep.subr.bf16.mxu0 0
        %4136 = vmatpush1.bf16.msra.mxu0 0
        %4137 = vmatprep.subr.bf16.mxu0 0
        %4138 = vmatpush1.bf16.msra.mxu0 0
        %4139 = vmatprep.subr.bf16.mxu0 0
        %4140 = vmatpush1.bf16.msra.mxu0 0
        %4141 = vmatprep.subr.bf16.mxu0 0
        %4142 = vmatpush1.bf16.msra.mxu0 0
        %4143 = vmatprep.mubr.bf16.mxu0 0
        %4144 = vmatmul.mubr.bf16.gmra.mrb[0].mxu0 %v3986
        %v4145 = vpop.f32.mrb[0].mxu0
        %v4146 = vadd.f32 %v3612, %v4145
        %v4147 = vpop.f32.mrb[0].mxu0
        %v4148 = vadd.f32 %v3616, %v4147
        %v4149 = vpop.f32.mrb[0].mxu0
        %v4150 = vpop.f32.mrb[0].mxu0
        %4151 = vdwg.mxu0
        %4152 = vmatprep.subr.bf16.mxu0 %v3866
        %4153 = vmatpush1.bf16.msra.mxu0 %v3865
        %4154 = vmatprep.subr.bf16.mxu0 %v3882
        %4155 = vmatpush1.bf16.msra.mxu0 %v3881
        %4156 = vmatprep.subr.bf16.mxu0 %v3898
        %4157 = vmatpush1.bf16.msra.mxu0 %v3897
        %4158 = vmatprep.subr.bf16.mxu0 %v3914
        %4159 = vmatpush1.bf16.msra.mxu0 %v3913
        %4160 = vmatprep.subr.bf16.mxu0 0
        %4161 = vmatpush1.bf16.msra.mxu0 0
        %4162 = vmatprep.subr.bf16.mxu0 0
        %4163 = vmatpush1.bf16.msra.mxu0 0
        %4164 = vmatprep.subr.bf16.mxu0 0
        %4165 = vmatpush1.bf16.msra.mxu0 0
        %4166 = vmatprep.subr.bf16.mxu0 0
        %4167 = vmatpush1.bf16.msra.mxu0 0
        %4168 = vmatprep.subr.bf16.mxu0 0
        %4169 = vmatpush1.bf16.msra.mxu0 0
        %4170 = vmatprep.subr.bf16.mxu0 0
        %4171 = vmatpush1.bf16.msra.mxu0 0
        %4172 = vmatprep.subr.bf16.mxu0 0
        %4173 = vmatpush1.bf16.msra.mxu0 0
        %4174 = vmatprep.subr.bf16.mxu0 0
        %4175 = vmatpush1.bf16.msra.mxu0 0
        %4176 = vmatprep.subr.bf16.mxu0 0
        %4177 = vmatpush1.bf16.msra.mxu0 0
        %4178 = vmatprep.subr.bf16.mxu0 0
        %4179 = vmatpush1.bf16.msra.mxu0 0
        %4180 = vmatprep.subr.bf16.mxu0 0
        %4181 = vmatpush1.bf16.msra.mxu0 0
        %4182 = vmatprep.subr.bf16.mxu0 0
        %4183 = vmatpush1.bf16.msra.mxu0 0
        %4184 = vmatprep.mubr.bf16.mxu0 0
        %4185 = vmatmul.mubr.bf16.gmra.mrb[0].mxu0 %v3986
        %v4186 = vpop.f32.mrb[0].mxu0
        %v4187 = vadd.f32 %v3620, %v4186
        %v4188 = vpop.f32.mrb[0].mxu0
        %v4189 = vadd.f32 %v3624, %v4188
        %v4190 = vpop.f32.mrb[0].mxu0
        %v4191 = vpop.f32.mrb[0].mxu0
        %4192 = vdwg.mxu0
        %4193 = vmatprep.subr.bf16.mxu0 %v3868
        %4194 = vmatpush1.bf16.msra.mxu0 %v3867
        %4195 = vmatprep.subr.bf16.mxu0 %v3884
        %4196 = vmatpush1.bf16.msra.mxu0 %v3883
        %4197 = vmatprep.subr.bf16.mxu0 %v3900
        %4198 = vmatpush1.bf16.msra.mxu0 %v3899
        %4199 = vmatprep.subr.bf16.mxu0 %v3916
        %4200 = vmatpush1.bf16.msra.mxu0 %v3915
        %4201 = vmatprep.subr.bf16.mxu0 0
        %4202 = vmatpush1.bf16.msra.mxu0 0
        %4203 = vmatprep.subr.bf16.mxu0 0
        %4204 = vmatpush1.bf16.msra.mxu0 0
        %4205 = vmatprep.subr.bf16.mxu0 0
        %4206 = vmatpush1.bf16.msra.mxu0 0
        %4207 = vmatprep.subr.bf16.mxu0 0
        %4208 = vmatpush1.bf16.msra.mxu0 0
        %4209 = vmatprep.subr.bf16.mxu0 0
        %4210 = vmatpush1.bf16.msra.mxu0 0
        %4211 = vmatprep.subr.bf16.mxu0 0
        %4212 = vmatpush1.bf16.msra.mxu0 0
        %4213 = vmatprep.subr.bf16.mxu0 0
        %4214 = vmatpush1.bf16.msra.mxu0 0
        %4215 = vmatprep.subr.bf16.mxu0 0
        %4216 = vmatpush1.bf16.msra.mxu0 0
        %4217 = vmatprep.subr.bf16.mxu0 0
        %4218 = vmatpush1.bf16.msra.mxu0 0
        %4219 = vmatprep.subr.bf16.mxu0 0
        %4220 = vmatpush1.bf16.msra.mxu0 0
        %4221 = vmatprep.subr.bf16.mxu0 0
        %4222 = vmatpush1.bf16.msra.mxu0 0
        %4223 = vmatprep.subr.bf16.mxu0 0
        %4224 = vmatpush1.bf16.msra.mxu0 0
        %4225 = vmatprep.mubr.bf16.mxu0 0
        %4226 = vmatmul.mubr.bf16.gmra.mrb[0].mxu0 %v3986
        %v4227 = vpop.f32.mrb[0].mxu0
        %v4228 = vadd.f32 %v3628, %v4227
        %v4229 = vpop.f32.mrb[0].mxu0
        %v4230 = vadd.f32 %v3632, %v4229
        %v4231 = vpop.f32.mrb[0].mxu0
        %v4232 = vpop.f32.mrb[0].mxu0
        %4233 = vdwg.mxu0
        %4234 = vmatprep.subr.bf16.mxu0 %v3870
        %4235 = vmatpush1.bf16.msra.mxu0 %v3869
        %4236 = vmatprep.subr.bf16.mxu0 %v3886
        %4237 = vmatpush1.bf16.msra.mxu0 %v3885
        %4238 = vmatprep.subr.bf16.mxu0 %v3902
        %4239 = vmatpush1.bf16.msra.mxu0 %v3901
        %4240 = vmatprep.subr.bf16.mxu0 %v3918
        %4241 = vmatpush1.bf16.msra.mxu0 %v3917
        %4242 = vmatprep.subr.bf16.mxu0 0
        %4243 = vmatpush1.bf16.msra.mxu0 0
        %4244 = vmatprep.subr.bf16.mxu0 0
        %4245 = vmatpush1.bf16.msra.mxu0 0
        %4246 = vmatprep.subr.bf16.mxu0 0
        %4247 = vmatpush1.bf16.msra.mxu0 0
        %4248 = vmatprep.subr.bf16.mxu0 0
        %4249 = vmatpush1.bf16.msra.mxu0 0
        %4250 = vmatprep.subr.bf16.mxu0 0
        %4251 = vmatpush1.bf16.msra.mxu0 0
        %4252 = vmatprep.subr.bf16.mxu0 0
        %4253 = vmatpush1.bf16.msra.mxu0 0
        %4254 = vmatprep.subr.bf16.mxu0 0
        %4255 = vmatpush1.bf16.msra.mxu0 0
        %4256 = vmatprep.subr.bf16.mxu0 0
        %4257 = vmatpush1.bf16.msra.mxu0 0
        %4258 = vmatprep.subr.bf16.mxu0 0
        %4259 = vmatpush1.bf16.msra.mxu0 0
        %4260 = vmatprep.subr.bf16.mxu0 0
        %4261 = vmatpush1.bf16.msra.mxu0 0
        %4262 = vmatprep.subr.bf16.mxu0 0
        %4263 = vmatpush1.bf16.msra.mxu0 0
        %4264 = vmatprep.subr.bf16.mxu0 0
        %4265 = vmatpush1.bf16.msra.mxu0 0
        %4266 = vmatprep.mubr.bf16.mxu0 0
        %4267 = vmatmul.mubr.bf16.gmra.mrb[0].mxu0 %v3986
        %v4268 = vpop.f32.mrb[0].mxu0
        %v4269 = vadd.f32 %v3636, %v4268
        %v4270 = vpop.f32.mrb[0].mxu0
        %v4271 = vadd.f32 %v3640, %v4270
        %v4272 = vpop.f32.mrb[0].mxu0
        %v4273 = vpop.f32.mrb[0].mxu0
        %4274 = vdwg.mxu0
        %4275 = vmatprep.subr.bf16.mxu0 %v3872
        %4276 = vmatpush1.bf16.msra.mxu0 %v3871
        %4277 = vmatprep.subr.bf16.mxu0 %v3888
        %4278 = vmatpush1.bf16.msra.mxu0 %v3887
        %4279 = vmatprep.subr.bf16.mxu0 %v3904
        %4280 = vmatpush1.bf16.msra.mxu0 %v3903
        %4281 = vmatprep.subr.bf16.mxu0 %v3920
        %4282 = vmatpush1.bf16.msra.mxu0 %v3919
        %4283 = vmatprep.subr.bf16.mxu0 0
        %4284 = vmatpush1.bf16.msra.mxu0 0
        %4285 = vmatprep.subr.bf16.mxu0 0
        %4286 = vmatpush1.bf16.msra.mxu0 0
        %4287 = vmatprep.subr.bf16.mxu0 0
        %4288 = vmatpush1.bf16.msra.mxu0 0
        %4289 = vmatprep.subr.bf16.mxu0 0
        %4290 = vmatpush1.bf16.msra.mxu0 0
        %4291 = vmatprep.subr.bf16.mxu0 0
        %4292 = vmatpush1.bf16.msra.mxu0 0
        %4293 = vmatprep.subr.bf16.mxu0 0
        %4294 = vmatpush1.bf16.msra.mxu0 0
        %4295 = vmatprep.subr.bf16.mxu0 0
        %4296 = vmatpush1.bf16.msra.mxu0 0
        %4297 = vmatprep.subr.bf16.mxu0 0
        %4298 = vmatpush1.bf16.msra.mxu0 0
        %4299 = vmatprep.subr.bf16.mxu0 0
        %4300 = vmatpush1.bf16.msra.mxu0 0
        %4301 = vmatprep.subr.bf16.mxu0 0
        %4302 = vmatpush1.bf16.msra.mxu0 0
        %4303 = vmatprep.subr.bf16.mxu0 0
        %4304 = vmatpush1.bf16.msra.mxu0 0
        %4305 = vmatprep.subr.bf16.mxu0 0
        %4306 = vmatpush1.bf16.msra.mxu0 0
        %4307 = vmatprep.mubr.bf16.mxu0 0
        %4308 = vmatmul.mubr.bf16.gmra.mrb[0].mxu0 %v3986
        %v4309 = vpop.f32.mrb[0].mxu0
        %v4310 = vadd.f32 %v3644, %v4309
        %v4311 = vpop.f32.mrb[0].mxu0
        %v4312 = vadd.f32 %v3648, %v4311
        %v4313 = vpop.f32.mrb[0].mxu0
        %v4314 = vpop.f32.mrb[0].mxu0
        %4315 = vdwg.mxu0
        %v4316 = vmax.f32 %v4023, 0.0
        %v4317 = vmax.f32 %v4025, 0.0
        %v4318 = vmax.f32 %v4064, 0.0
        %v4319 = vmax.f32 %v4066, 0.0
        %v4320 = vmax.f32 %v4105, 0.0
        %v4321 = vmax.f32 %v4107, 0.0
        %v4322 = vmax.f32 %v4146, 0.0
        %v4323 = vmax.f32 %v4148, 0.0
        %v4324 = vmax.f32 %v4187, 0.0
        %v4325 = vmax.f32 %v4189, 0.0
        %v4326 = vmax.f32 %v4228, 0.0
        %v4327 = vmax.f32 %v4230, 0.0
        %v4328 = vmax.f32 %v4269, 0.0
        %v4329 = vmax.f32 %v4271, 0.0
        %v4330 = vmax.f32 %v4310, 0.0
        %v4331 = vmax.f32 %v4312, 0.0
        %v4332 = vpack.c.bf16 %v4316, %v4316
        %v4333 = vpack.c.bf16 %v4317, %v4317
        %v4334 = vpack.c.bf16 %v4318, %v4318
        %v4335 = vpack.c.bf16 %v4319, %v4319
        %v4336 = vpack.c.bf16 %v4320, %v4320
        %v4337 = vpack.c.bf16 %v4321, %v4321
        %v4338 = vpack.c.bf16 %v4322, %v4322
        %v4339 = vpack.c.bf16 %v4323, %v4323
        %v4340 = vpack.c.bf16 %v4324, %v4324
        %v4341 = vpack.c.bf16 %v4325, %v4325
        %v4342 = vpack.c.bf16 %v4326, %v4326
        %v4343 = vpack.c.bf16 %v4327, %v4327
        %v4344 = vpack.c.bf16 %v4328, %v4328
        %v4345 = vpack.c.bf16 %v4329, %v4329
        %v4346 = vpack.c.bf16 %v4330, %v4330
        %v4347 = vpack.c.bf16 %v4331, %v4331
        %v4348 = vld [vmem:[%s703] sm:$0xf]
        %v4349 = vld [vmem:[%s703 + $0x4] sm:$0xf]
        %v4350 = vld [vmem:[%s703 + $0x8] sm:$0xf]
        %v4351 = vld [vmem:[%s703 + $0xc] sm:$0xf]
        %v4352 = vld [vmem:[%s703 + $0x10] sm:$0xf]
        %v4353 = vld [vmem:[%s703 + $0x14] sm:$0xf]
        %v4354 = vld [vmem:[%s703 + $0x18] sm:$0xf]
        %v4355 = vld [vmem:[%s703 + $0x1c] sm:$0xf]
        %v4356 = vld [vmem:[%s703 + $0x20] sm:$0xf]
        %v4357 = vld [vmem:[%s703 + $0x24] sm:$0xf]
        %v4358 = vld [vmem:[%s703 + $0x28] sm:$0xf]
        %v4359 = vld [vmem:[%s703 + $0x2c] sm:$0xf]
        %v4360 = vld [vmem:[%s703 + $0x30] sm:$0xf]
        %v4361 = vld [vmem:[%s703 + $0x34] sm:$0xf]
        %v4362 = vld [vmem:[%s703 + $0x38] sm:$0xf]
        %v4363 = vld [vmem:[%s703 + $0x3c] sm:$0xf]
        %v4364 = vld [vmem:[%s703 + $0x40] sm:$0xf]
        %v4365 = vld [vmem:[%s703 + $0x44] sm:$0xf]
        %v4366 = vld [vmem:[%s703 + $0x48] sm:$0xf]
        %v4367 = vld [vmem:[%s703 + $0x4c] sm:$0xf]
        %v4368 = vld [vmem:[%s703 + $0x50] sm:$0xf]
        %v4369 = vld [vmem:[%s703 + $0x54] sm:$0xf]
        %v4370 = vld [vmem:[%s703 + $0x58] sm:$0xf]
        %v4371 = vld [vmem:[%s703 + $0x5c] sm:$0xf]
        %v4372 = vld [vmem:[%s703 + $0x60] sm:$0xf]
        %v4373 = vld [vmem:[%s703 + $0x64] sm:$0xf]
        %v4374 = vld [vmem:[%s703 + $0x68] sm:$0xf]
        %v4375 = vld [vmem:[%s703 + $0x6c] sm:$0xf]
        %v4376 = vld [vmem:[%s703 + $0x70] sm:$0xf]
        %v4377 = vld [vmem:[%s703 + $0x74] sm:$0xf]
        %v4378 = vld [vmem:[%s703 + $0x78] sm:$0xf]
        %v4379 = vld [vmem:[%s703 + $0x7c] sm:$0xf]
        %v4380 = vld [vmem:[%s703 + $0x80] sm:$0xf]
        %v4381 = vld [vmem:[%s703 + $0x84] sm:$0xf]
        %v4382 = vld [vmem:[%s703 + $0x88] sm:$0xf]
        %v4383 = vld [vmem:[%s703 + $0x8c] sm:$0xf]
        %v4384 = vld [vmem:[%s703 + $0x90] sm:$0xf]
        %v4385 = vld [vmem:[%s703 + $0x94] sm:$0xf]
        %v4386 = vld [vmem:[%s703 + $0x98] sm:$0xf]
        %v4387 = vld [vmem:[%s703 + $0x9c] sm:$0xf]
        %v4388 = vld [vmem:[%s703 + $0xa0] sm:$0xf]
        %v4389 = vld [vmem:[%s703 + $0xa4] sm:$0xf]
        %v4390 = vld [vmem:[%s703 + $0xa8] sm:$0xf]
        %v4391 = vld [vmem:[%s703 + $0xac] sm:$0xf]
        %v4392 = vld [vmem:[%s703 + $0xb0] sm:$0xf]
        %v4393 = vld [vmem:[%s703 + $0xb4] sm:$0xf]
        %v4394 = vld [vmem:[%s703 + $0xb8] sm:$0xf]
        %v4395 = vld [vmem:[%s703 + $0xbc] sm:$0xf]
        %v4396 = vld [vmem:[%s703 + $0xc0] sm:$0xf]
        %v4397 = vld [vmem:[%s703 + $0xc4] sm:$0xf]
        %v4398 = vld [vmem:[%s703 + $0xc8] sm:$0xf]
        %v4399 = vld [vmem:[%s703 + $0xcc] sm:$0xf]
        %v4400 = vld [vmem:[%s703 + $0xd0] sm:$0xf]
        %v4401 = vld [vmem:[%s703 + $0xd4] sm:$0xf]
        %v4402 = vld [vmem:[%s703 + $0xd8] sm:$0xf]
        %v4403 = vld [vmem:[%s703 + $0xdc] sm:$0xf]
        %v4404 = vld [vmem:[%s703 + $0xe0] sm:$0xf]
        %v4405 = vld [vmem:[%s703 + $0xe4] sm:$0xf]
        %v4406 = vld [vmem:[%s703 + $0xe8] sm:$0xf]
        %v4407 = vld [vmem:[%s703 + $0xec] sm:$0xf]
        %v4408 = vld [vmem:[%s703 + $0xf0] sm:$0xf]
        %v4409 = vld [vmem:[%s703 + $0xf4] sm:$0xf]
        %v4410 = vld [vmem:[%s703 + $0xf8] sm:$0xf]
        %v4411 = vld [vmem:[%s703 + $0xfc] sm:$0xf]
        %v4412 = vld [vmem:[%s703 + $0x100] sm:$0xf]
        %v4413 = vld [vmem:[%s703 + $0x104] sm:$0xf]
        %v4414 = vld [vmem:[%s703 + $0x108] sm:$0xf]
        %v4415 = vld [vmem:[%s703 + $0x10c] sm:$0xf]
        %v4416 = vld [vmem:[%s703 + $0x110] sm:$0xf]
        %v4417 = vld [vmem:[%s703 + $0x114] sm:$0xf]
        %v4418 = vld [vmem:[%s703 + $0x118] sm:$0xf]
        %v4419 = vld [vmem:[%s703 + $0x11c] sm:$0xf]
        %v4420 = vld [vmem:[%s703 + $0x120] sm:$0xf]
        %v4421 = vld [vmem:[%s703 + $0x124] sm:$0xf]
        %v4422 = vld [vmem:[%s703 + $0x128] sm:$0xf]
        %v4423 = vld [vmem:[%s703 + $0x12c] sm:$0xf]
        %v4424 = vld [vmem:[%s703 + $0x130] sm:$0xf]
        %v4425 = vld [vmem:[%s703 + $0x134] sm:$0xf]
        %v4426 = vld [vmem:[%s703 + $0x138] sm:$0xf]
        %v4427 = vld [vmem:[%s703 + $0x13c] sm:$0xf]
        %v4428 = vld [vmem:[%s703 + $0x140] sm:$0xf]
        %v4429 = vld [vmem:[%s703 + $0x144] sm:$0xf]
        %v4430 = vld [vmem:[%s703 + $0x148] sm:$0xf]
        %v4431 = vld [vmem:[%s703 + $0x14c] sm:$0xf]
        %v4432 = vld [vmem:[%s703 + $0x150] sm:$0xf]
        %v4433 = vld [vmem:[%s703 + $0x154] sm:$0xf]
        %v4434 = vld [vmem:[%s703 + $0x158] sm:$0xf]
        %v4435 = vld [vmem:[%s703 + $0x15c] sm:$0xf]
        %v4436 = vld [vmem:[%s703 + $0x160] sm:$0xf]
        %v4437 = vld [vmem:[%s703 + $0x164] sm:$0xf]
        %v4438 = vld [vmem:[%s703 + $0x168] sm:$0xf]
        %v4439 = vld [vmem:[%s703 + $0x16c] sm:$0xf]
        %v4440 = vld [vmem:[%s703 + $0x170] sm:$0xf]
        %v4441 = vld [vmem:[%s703 + $0x174] sm:$0xf]
        %v4442 = vld [vmem:[%s703 + $0x178] sm:$0xf]
        %v4443 = vld [vmem:[%s703 + $0x17c] sm:$0xf]
        %v4444 = vld [vmem:[%s703 + $0x180] sm:$0xf]
        %v4445 = vld [vmem:[%s703 + $0x184] sm:$0xf]
        %v4446 = vld [vmem:[%s703 + $0x188] sm:$0xf]
        %v4447 = vld [vmem:[%s703 + $0x18c] sm:$0xf]
        %v4448 = vld [vmem:[%s703 + $0x190] sm:$0xf]
        %v4449 = vld [vmem:[%s703 + $0x194] sm:$0xf]
        %v4450 = vld [vmem:[%s703 + $0x198] sm:$0xf]
        %v4451 = vld [vmem:[%s703 + $0x19c] sm:$0xf]
        %v4452 = vld [vmem:[%s703 + $0x1a0] sm:$0xf]
        %v4453 = vld [vmem:[%s703 + $0x1a4] sm:$0xf]
        %v4454 = vld [vmem:[%s703 + $0x1a8] sm:$0xf]
        %v4455 = vld [vmem:[%s703 + $0x1ac] sm:$0xf]
        %v4456 = vld [vmem:[%s703 + $0x1b0] sm:$0xf]
        %v4457 = vld [vmem:[%s703 + $0x1b4] sm:$0xf]
        %v4458 = vld [vmem:[%s703 + $0x1b8] sm:$0xf]
        %v4459 = vld [vmem:[%s703 + $0x1bc] sm:$0xf]
        %v4460 = vld [vmem:[%s703 + $0x1c0] sm:$0xf]
        %v4461 = vld [vmem:[%s703 + $0x1c4] sm:$0xf]
        %v4462 = vld [vmem:[%s703 + $0x1c8] sm:$0xf]
        %v4463 = vld [vmem:[%s703 + $0x1cc] sm:$0xf]
        %v4464 = vld [vmem:[%s703 + $0x1d0] sm:$0xf]
        %v4465 = vld [vmem:[%s703 + $0x1d4] sm:$0xf]
        %v4466 = vld [vmem:[%s703 + $0x1d8] sm:$0xf]
        %v4467 = vld [vmem:[%s703 + $0x1dc] sm:$0xf]
        %v4468 = vld [vmem:[%s703 + $0x1e0] sm:$0xf]
        %v4469 = vld [vmem:[%s703 + $0x1e4] sm:$0xf]
        %v4470 = vld [vmem:[%s703 + $0x1e8] sm:$0xf]
        %v4471 = vld [vmem:[%s703 + $0x1ec] sm:$0xf]
        %v4472 = vld [vmem:[%s703 + $0x1f0] sm:$0xf]
        %v4473 = vld [vmem:[%s703 + $0x1f4] sm:$0xf]
        %v4474 = vld [vmem:[%s703 + $0x1f8] sm:$0xf]
        %v4475 = vld [vmem:[%s703 + $0x1fc] sm:$0xf]
        %v4476 = vld [vmem:[%s703 + $0x200] sm:$0xf]
        %v4477 = vld [vmem:[%s703 + $0x204] sm:$0xf]
        %v4478 = vld [vmem:[%s703 + $0x208] sm:$0xf]
        %v4479 = vld [vmem:[%s703 + $0x20c] sm:$0xf]
        %v4480 = vld [vmem:[%s703 + $0x210] sm:$0xf]
        %v4481 = vld [vmem:[%s703 + $0x214] sm:$0xf]
        %v4482 = vld [vmem:[%s703 + $0x218] sm:$0xf]
        %v4483 = vld [vmem:[%s703 + $0x21c] sm:$0xf]
        %v4484 = vld [vmem:[%s703 + $0x220] sm:$0xf]
        %v4485 = vld [vmem:[%s703 + $0x224] sm:$0xf]
        %v4486 = vld [vmem:[%s703 + $0x228] sm:$0xf]
        %v4487 = vld [vmem:[%s703 + $0x22c] sm:$0xf]
        %v4488 = vld [vmem:[%s703 + $0x230] sm:$0xf]
        %v4489 = vld [vmem:[%s703 + $0x234] sm:$0xf]
        %v4490 = vld [vmem:[%s703 + $0x238] sm:$0xf]
        %v4491 = vld [vmem:[%s703 + $0x23c] sm:$0xf]
        %v4492 = vld [vmem:[%s703 + $0x240] sm:$0xf]
        %v4493 = vld [vmem:[%s703 + $0x244] sm:$0xf]
        %v4494 = vld [vmem:[%s703 + $0x248] sm:$0xf]
        %v4495 = vld [vmem:[%s703 + $0x24c] sm:$0xf]
        %v4496 = vld [vmem:[%s703 + $0x250] sm:$0xf]
        %v4497 = vld [vmem:[%s703 + $0x254] sm:$0xf]
        %v4498 = vld [vmem:[%s703 + $0x258] sm:$0xf]
        %v4499 = vld [vmem:[%s703 + $0x25c] sm:$0xf]
        %v4500 = vld [vmem:[%s703 + $0x260] sm:$0xf]
        %v4501 = vld [vmem:[%s703 + $0x264] sm:$0xf]
        %v4502 = vld [vmem:[%s703 + $0x268] sm:$0xf]
        %v4503 = vld [vmem:[%s703 + $0x26c] sm:$0xf]
        %v4504 = vld [vmem:[%s703 + $0x270] sm:$0xf]
        %v4505 = vld [vmem:[%s703 + $0x274] sm:$0xf]
        %v4506 = vld [vmem:[%s703 + $0x278] sm:$0xf]
        %v4507 = vld [vmem:[%s703 + $0x27c] sm:$0xf]
        %v4508 = vld [vmem:[%s703 + $0x280] sm:$0xf]
        %v4509 = vld [vmem:[%s703 + $0x284] sm:$0xf]
        %v4510 = vld [vmem:[%s703 + $0x288] sm:$0xf]
        %v4511 = vld [vmem:[%s703 + $0x28c] sm:$0xf]
        %v4512 = vld [vmem:[%s703 + $0x290] sm:$0xf]
        %v4513 = vld [vmem:[%s703 + $0x294] sm:$0xf]
        %v4514 = vld [vmem:[%s703 + $0x298] sm:$0xf]
        %v4515 = vld [vmem:[%s703 + $0x29c] sm:$0xf]
        %v4516 = vld [vmem:[%s703 + $0x2a0] sm:$0xf]
        %v4517 = vld [vmem:[%s703 + $0x2a4] sm:$0xf]
        %v4518 = vld [vmem:[%s703 + $0x2a8] sm:$0xf]
        %v4519 = vld [vmem:[%s703 + $0x2ac] sm:$0xf]
        %v4520 = vld [vmem:[%s703 + $0x2b0] sm:$0xf]
        %v4521 = vld [vmem:[%s703 + $0x2b4] sm:$0xf]
        %v4522 = vld [vmem:[%s703 + $0x2b8] sm:$0xf]
        %v4523 = vld [vmem:[%s703 + $0x2bc] sm:$0xf]
        %v4524 = vld [vmem:[%s703 + $0x2c0] sm:$0xf]
        %v4525 = vld [vmem:[%s703 + $0x2c4] sm:$0xf]
        %v4526 = vld [vmem:[%s703 + $0x2c8] sm:$0xf]
        %v4527 = vld [vmem:[%s703 + $0x2cc] sm:$0xf]
        %v4528 = vld [vmem:[%s703 + $0x2d0] sm:$0xf]
        %v4529 = vld [vmem:[%s703 + $0x2d4] sm:$0xf]
        %v4530 = vld [vmem:[%s703 + $0x2d8] sm:$0xf]
        %v4531 = vld [vmem:[%s703 + $0x2dc] sm:$0xf]
        %v4532 = vld [vmem:[%s703 + $0x2e0] sm:$0xf]
        %v4533 = vld [vmem:[%s703 + $0x2e4] sm:$0xf]
        %v4534 = vld [vmem:[%s703 + $0x2e8] sm:$0xf]
        %v4535 = vld [vmem:[%s703 + $0x2ec] sm:$0xf]
        %v4536 = vld [vmem:[%s703 + $0x2f0] sm:$0xf]
        %v4537 = vld [vmem:[%s703 + $0x2f4] sm:$0xf]
        %v4538 = vld [vmem:[%s703 + $0x2f8] sm:$0xf]
        %v4539 = vld [vmem:[%s703 + $0x2fc] sm:$0xf]
        %v4540 = vld [vmem:[%s703 + $0x300] sm:$0xf]
        %v4541 = vld [vmem:[%s703 + $0x304] sm:$0xf]
        %v4542 = vld [vmem:[%s703 + $0x308] sm:$0xf]
        %v4543 = vld [vmem:[%s703 + $0x30c] sm:$0xf]
        %v4544 = vld [vmem:[%s703 + $0x310] sm:$0xf]
        %v4545 = vld [vmem:[%s703 + $0x314] sm:$0xf]
        %v4546 = vld [vmem:[%s703 + $0x318] sm:$0xf]
        %v4547 = vld [vmem:[%s703 + $0x31c] sm:$0xf]
        %v4548 = vld [vmem:[%s703 + $0x320] sm:$0xf]
        %v4549 = vld [vmem:[%s703 + $0x324] sm:$0xf]
        %v4550 = vld [vmem:[%s703 + $0x328] sm:$0xf]
        %v4551 = vld [vmem:[%s703 + $0x32c] sm:$0xf]
        %v4552 = vld [vmem:[%s703 + $0x330] sm:$0xf]
        %v4553 = vld [vmem:[%s703 + $0x334] sm:$0xf]
        %v4554 = vld [vmem:[%s703 + $0x338] sm:$0xf]
        %v4555 = vld [vmem:[%s703 + $0x33c] sm:$0xf]
        %v4556 = vld [vmem:[%s703 + $0x340] sm:$0xf]
        %v4557 = vld [vmem:[%s703 + $0x344] sm:$0xf]
        %v4558 = vld [vmem:[%s703 + $0x348] sm:$0xf]
        %v4559 = vld [vmem:[%s703 + $0x34c] sm:$0xf]
        %v4560 = vld [vmem:[%s703 + $0x350] sm:$0xf]
        %v4561 = vld [vmem:[%s703 + $0x354] sm:$0xf]
        %v4562 = vld [vmem:[%s703 + $0x358] sm:$0xf]
        %v4563 = vld [vmem:[%s703 + $0x35c] sm:$0xf]
        %v4564 = vld [vmem:[%s703 + $0x360] sm:$0xf]
        %v4565 = vld [vmem:[%s703 + $0x364] sm:$0xf]
        %v4566 = vld [vmem:[%s703 + $0x368] sm:$0xf]
        %v4567 = vld [vmem:[%s703 + $0x36c] sm:$0xf]
        %v4568 = vld [vmem:[%s703 + $0x370] sm:$0xf]
        %v4569 = vld [vmem:[%s703 + $0x374] sm:$0xf]
        %v4570 = vld [vmem:[%s703 + $0x378] sm:$0xf]
        %v4571 = vld [vmem:[%s703 + $0x37c] sm:$0xf]
        %v4572 = vld [vmem:[%s703 + $0x380] sm:$0xf]
        %v4573 = vld [vmem:[%s703 + $0x384] sm:$0xf]
        %v4574 = vld [vmem:[%s703 + $0x388] sm:$0xf]
        %v4575 = vld [vmem:[%s703 + $0x38c] sm:$0xf]
        %v4576 = vld [vmem:[%s703 + $0x390] sm:$0xf]
        %v4577 = vld [vmem:[%s703 + $0x394] sm:$0xf]
        %v4578 = vld [vmem:[%s703 + $0x398] sm:$0xf]
        %v4579 = vld [vmem:[%s703 + $0x39c] sm:$0xf]
        %v4580 = vld [vmem:[%s703 + $0x3a0] sm:$0xf]
        %v4581 = vld [vmem:[%s703 + $0x3a4] sm:$0xf]
        %v4582 = vld [vmem:[%s703 + $0x3a8] sm:$0xf]
        %v4583 = vld [vmem:[%s703 + $0x3ac] sm:$0xf]
        %v4584 = vld [vmem:[%s703 + $0x3b0] sm:$0xf]
        %v4585 = vld [vmem:[%s703 + $0x3b4] sm:$0xf]
        %v4586 = vld [vmem:[%s703 + $0x3b8] sm:$0xf]
        %v4587 = vld [vmem:[%s703 + $0x3bc] sm:$0xf]
        %v4588 = vld [vmem:[%s703 + $0x3c0] sm:$0xf]
        %v4589 = vld [vmem:[%s703 + $0x3c4] sm:$0xf]
        %v4590 = vld [vmem:[%s703 + $0x3c8] sm:$0xf]
        %v4591 = vld [vmem:[%s703 + $0x3cc] sm:$0xf]
        %v4592 = vld [vmem:[%s703 + $0x3d0] sm:$0xf]
        %v4593 = vld [vmem:[%s703 + $0x3d4] sm:$0xf]
        %v4594 = vld [vmem:[%s703 + $0x3d8] sm:$0xf]
        %v4595 = vld [vmem:[%s703 + $0x3dc] sm:$0xf]
        %v4596 = vld [vmem:[%s703 + $0x3e0] sm:$0xf]
        %v4597 = vld [vmem:[%s703 + $0x3e4] sm:$0xf]
        %v4598 = vld [vmem:[%s703 + $0x3e8] sm:$0xf]
        %v4599 = vld [vmem:[%s703 + $0x3ec] sm:$0xf]
        %v4600 = vld [vmem:[%s703 + $0x3f0] sm:$0xf]
        %v4601 = vld [vmem:[%s703 + $0x3f4] sm:$0xf]
        %v4602 = vld [vmem:[%s703 + $0x3f8] sm:$0xf]
        %v4603 = vld [vmem:[%s703 + $0x3fc] sm:$0xf]
        %v4604 = vld [vmem:[%s706] sm:$0x1]
        %v4606 = vlaneseq
        %v4607 = vshrl.u32 %v4606, 7
        %v4608 = vsub.s32 0, %v4607
        %v4609 = vrot.slane %v4604, %v4608
        %v4867 = vunpack.c.l.b16 %v4348
        %v4868 = vunpack.c.l.b16 %v4349
        %v4869 = vunpack.c.l.b16 %v4350
        %v4870 = vunpack.c.l.b16 %v4351
        %v4871 = vunpack.c.l.b16 %v4352
        %v4872 = vunpack.c.l.b16 %v4353
        %v4873 = vunpack.c.l.b16 %v4354
        %v4874 = vunpack.c.l.b16 %v4355
        %v4875 = vunpack.c.l.b16 %v4356
        %v4876 = vunpack.c.l.b16 %v4357
        %v4877 = vunpack.c.l.b16 %v4358
        %v4878 = vunpack.c.l.b16 %v4359
        %v4879 = vunpack.c.l.b16 %v4360
        %v4880 = vunpack.c.l.b16 %v4361
        %v4881 = vunpack.c.l.b16 %v4362
        %v4882 = vunpack.c.l.b16 %v4363
        %v4883 = vunpack.c.l.b16 %v4364
        %v4884 = vunpack.c.l.b16 %v4365
        %v4885 = vunpack.c.l.b16 %v4366
        %v4886 = vunpack.c.l.b16 %v4367
        %v4887 = vunpack.c.l.b16 %v4368
        %v4888 = vunpack.c.l.b16 %v4369
        %v4889 = vunpack.c.l.b16 %v4370
        %v4890 = vunpack.c.l.b16 %v4371
        %v4891 = vunpack.c.l.b16 %v4372
        %v4892 = vunpack.c.l.b16 %v4373
        %v4893 = vunpack.c.l.b16 %v4374
        %v4894 = vunpack.c.l.b16 %v4375
        %v4895 = vunpack.c.l.b16 %v4376
        %v4896 = vunpack.c.l.b16 %v4377
        %v4897 = vunpack.c.l.b16 %v4378
        %v4898 = vunpack.c.l.b16 %v4379
        %v4899 = vunpack.c.l.b16 %v4380
        %v4900 = vunpack.c.l.b16 %v4381
        %v4901 = vunpack.c.l.b16 %v4382
        %v4902 = vunpack.c.l.b16 %v4383
        %v4903 = vunpack.c.l.b16 %v4384
        %v4904 = vunpack.c.l.b16 %v4385
        %v4905 = vunpack.c.l.b16 %v4386
        %v4906 = vunpack.c.l.b16 %v4387
        %v4907 = vunpack.c.l.b16 %v4388
        %v4908 = vunpack.c.l.b16 %v4389
        %v4909 = vunpack.c.l.b16 %v4390
        %v4910 = vunpack.c.l.b16 %v4391
        %v4911 = vunpack.c.l.b16 %v4392
        %v4912 = vunpack.c.l.b16 %v4393
        %v4913 = vunpack.c.l.b16 %v4394
        %v4914 = vunpack.c.l.b16 %v4395
        %v4915 = vunpack.c.l.b16 %v4396
        %v4916 = vunpack.c.l.b16 %v4397
        %v4917 = vunpack.c.l.b16 %v4398
        %v4918 = vunpack.c.l.b16 %v4399
        %v4919 = vunpack.c.l.b16 %v4400
        %v4920 = vunpack.c.l.b16 %v4401
        %v4921 = vunpack.c.l.b16 %v4402
        %v4922 = vunpack.c.l.b16 %v4403
        %v4923 = vunpack.c.l.b16 %v4404
        %v4924 = vunpack.c.l.b16 %v4405
        %v4925 = vunpack.c.l.b16 %v4406
        %v4926 = vunpack.c.l.b16 %v4407
        %v4927 = vunpack.c.l.b16 %v4408
        %v4928 = vunpack.c.l.b16 %v4409
        %v4929 = vunpack.c.l.b16 %v4410
        %v4930 = vunpack.c.l.b16 %v4411
        %v4931 = vunpack.c.l.b16 %v4412
        %v4932 = vunpack.c.l.b16 %v4413
        %v4933 = vunpack.c.l.b16 %v4414
        %v4934 = vunpack.c.l.b16 %v4415
        %v4935 = vunpack.c.l.b16 %v4416
        %v4936 = vunpack.c.l.b16 %v4417
        %v4937 = vunpack.c.l.b16 %v4418
        %v4938 = vunpack.c.l.b16 %v4419
        %v4939 = vunpack.c.l.b16 %v4420
        %v4940 = vunpack.c.l.b16 %v4421
        %v4941 = vunpack.c.l.b16 %v4422
        %v4942 = vunpack.c.l.b16 %v4423
        %v4943 = vunpack.c.l.b16 %v4424
        %v4944 = vunpack.c.l.b16 %v4425
        %v4945 = vunpack.c.l.b16 %v4426
        %v4946 = vunpack.c.l.b16 %v4427
        %v4947 = vunpack.c.l.b16 %v4428
        %v4948 = vunpack.c.l.b16 %v4429
        %v4949 = vunpack.c.l.b16 %v4430
        %v4950 = vunpack.c.l.b16 %v4431
        %v4951 = vunpack.c.l.b16 %v4432
        %v4952 = vunpack.c.l.b16 %v4433
        %v4953 = vunpack.c.l.b16 %v4434
        %v4954 = vunpack.c.l.b16 %v4435
        %v4955 = vunpack.c.l.b16 %v4436
        %v4956 = vunpack.c.l.b16 %v4437
        %v4957 = vunpack.c.l.b16 %v4438
        %v4958 = vunpack.c.l.b16 %v4439
        %v4959 = vunpack.c.l.b16 %v4440
        %v4960 = vunpack.c.l.b16 %v4441
        %v4961 = vunpack.c.l.b16 %v4442
        %v4962 = vunpack.c.l.b16 %v4443
        %v4963 = vunpack.c.l.b16 %v4444
        %v4964 = vunpack.c.l.b16 %v4445
        %v4965 = vunpack.c.l.b16 %v4446
        %v4966 = vunpack.c.l.b16 %v4447
        %v4967 = vunpack.c.l.b16 %v4448
        %v4968 = vunpack.c.l.b16 %v4449
        %v4969 = vunpack.c.l.b16 %v4450
        %v4970 = vunpack.c.l.b16 %v4451
        %v4971 = vunpack.c.l.b16 %v4452
        %v4972 = vunpack.c.l.b16 %v4453
        %v4973 = vunpack.c.l.b16 %v4454
        %v4974 = vunpack.c.l.b16 %v4455
        %v4975 = vunpack.c.l.b16 %v4456
        %v4976 = vunpack.c.l.b16 %v4457
        %v4977 = vunpack.c.l.b16 %v4458
        %v4978 = vunpack.c.l.b16 %v4459
        %v4979 = vunpack.c.l.b16 %v4460
        %v4980 = vunpack.c.l.b16 %v4461
        %v4981 = vunpack.c.l.b16 %v4462
        %v4982 = vunpack.c.l.b16 %v4463
        %v4983 = vunpack.c.l.b16 %v4464
        %v4984 = vunpack.c.l.b16 %v4465
        %v4985 = vunpack.c.l.b16 %v4466
        %v4986 = vunpack.c.l.b16 %v4467
        %v4987 = vunpack.c.l.b16 %v4468
        %v4988 = vunpack.c.l.b16 %v4469
        %v4989 = vunpack.c.l.b16 %v4470
        %v4990 = vunpack.c.l.b16 %v4471
        %v4991 = vunpack.c.l.b16 %v4472
        %v4992 = vunpack.c.l.b16 %v4473
        %v4993 = vunpack.c.l.b16 %v4474
        %v4994 = vunpack.c.l.b16 %v4475
        %v4995 = vunpack.c.l.b16 %v4476
        %v4996 = vunpack.c.l.b16 %v4477
        %v4997 = vunpack.c.l.b16 %v4478
        %v4998 = vunpack.c.l.b16 %v4479
        %v4999 = vunpack.c.l.b16 %v4480
        %v5000 = vunpack.c.l.b16 %v4481
        %v5001 = vunpack.c.l.b16 %v4482
        %v5002 = vunpack.c.l.b16 %v4483
        %v5003 = vunpack.c.l.b16 %v4484
        %v5004 = vunpack.c.l.b16 %v4485
        %v5005 = vunpack.c.l.b16 %v4486
        %v5006 = vunpack.c.l.b16 %v4487
        %v5007 = vunpack.c.l.b16 %v4488
        %v5008 = vunpack.c.l.b16 %v4489
        %v5009 = vunpack.c.l.b16 %v4490
        %v5010 = vunpack.c.l.b16 %v4491
        %v5011 = vunpack.c.l.b16 %v4492
        %v5012 = vunpack.c.l.b16 %v4493
        %v5013 = vunpack.c.l.b16 %v4494
        %v5014 = vunpack.c.l.b16 %v4495
        %v5015 = vunpack.c.l.b16 %v4496
        %v5016 = vunpack.c.l.b16 %v4497
        %v5017 = vunpack.c.l.b16 %v4498
        %v5018 = vunpack.c.l.b16 %v4499
        %v5019 = vunpack.c.l.b16 %v4500
        %v5020 = vunpack.c.l.b16 %v4501
        %v5021 = vunpack.c.l.b16 %v4502
        %v5022 = vunpack.c.l.b16 %v4503
        %v5023 = vunpack.c.l.b16 %v4504
        %v5024 = vunpack.c.l.b16 %v4505
        %v5025 = vunpack.c.l.b16 %v4506
        %v5026 = vunpack.c.l.b16 %v4507
        %v5027 = vunpack.c.l.b16 %v4508
        %v5028 = vunpack.c.l.b16 %v4509
        %v5029 = vunpack.c.l.b16 %v4510
        %v5030 = vunpack.c.l.b16 %v4511
        %v5031 = vunpack.c.l.b16 %v4512
        %v5032 = vunpack.c.l.b16 %v4513
        %v5033 = vunpack.c.l.b16 %v4514
        %v5034 = vunpack.c.l.b16 %v4515
        %v5035 = vunpack.c.l.b16 %v4516
        %v5036 = vunpack.c.l.b16 %v4517
        %v5037 = vunpack.c.l.b16 %v4518
        %v5038 = vunpack.c.l.b16 %v4519
        %v5039 = vunpack.c.l.b16 %v4520
        %v5040 = vunpack.c.l.b16 %v4521
        %v5041 = vunpack.c.l.b16 %v4522
        %v5042 = vunpack.c.l.b16 %v4523
        %v5043 = vunpack.c.l.b16 %v4524
        %v5044 = vunpack.c.l.b16 %v4525
        %v5045 = vunpack.c.l.b16 %v4526
        %v5046 = vunpack.c.l.b16 %v4527
        %v5047 = vunpack.c.l.b16 %v4528
        %v5048 = vunpack.c.l.b16 %v4529
        %v5049 = vunpack.c.l.b16 %v4530
        %v5050 = vunpack.c.l.b16 %v4531
        %v5051 = vunpack.c.l.b16 %v4532
        %v5052 = vunpack.c.l.b16 %v4533
        %v5053 = vunpack.c.l.b16 %v4534
        %v5054 = vunpack.c.l.b16 %v4535
        %v5055 = vunpack.c.l.b16 %v4536
        %v5056 = vunpack.c.l.b16 %v4537
        %v5057 = vunpack.c.l.b16 %v4538
        %v5058 = vunpack.c.l.b16 %v4539
        %v5059 = vunpack.c.l.b16 %v4540
        %v5060 = vunpack.c.l.b16 %v4541
        %v5061 = vunpack.c.l.b16 %v4542
        %v5062 = vunpack.c.l.b16 %v4543
        %v5063 = vunpack.c.l.b16 %v4544
        %v5064 = vunpack.c.l.b16 %v4545
        %v5065 = vunpack.c.l.b16 %v4546
        %v5066 = vunpack.c.l.b16 %v4547
        %v5067 = vunpack.c.l.b16 %v4548
        %v5068 = vunpack.c.l.b16 %v4549
        %v5069 = vunpack.c.l.b16 %v4550
        %v5070 = vunpack.c.l.b16 %v4551
        %v5071 = vunpack.c.l.b16 %v4552
        %v5072 = vunpack.c.l.b16 %v4553
        %v5073 = vunpack.c.l.b16 %v4554
        %v5074 = vunpack.c.l.b16 %v4555
        %v5075 = vunpack.c.l.b16 %v4556
        %v5076 = vunpack.c.l.b16 %v4557
        %v5077 = vunpack.c.l.b16 %v4558
        %v5078 = vunpack.c.l.b16 %v4559
        %v5079 = vunpack.c.l.b16 %v4560
        %v5080 = vunpack.c.l.b16 %v4561
        %v5081 = vunpack.c.l.b16 %v4562
        %v5082 = vunpack.c.l.b16 %v4563
        %v5083 = vunpack.c.l.b16 %v4564
        %v5084 = vunpack.c.l.b16 %v4565
        %v5085 = vunpack.c.l.b16 %v4566
        %v5086 = vunpack.c.l.b16 %v4567
        %v5087 = vunpack.c.l.b16 %v4568
        %v5088 = vunpack.c.l.b16 %v4569
        %v5089 = vunpack.c.l.b16 %v4570
        %v5090 = vunpack.c.l.b16 %v4571
        %v5091 = vunpack.c.l.b16 %v4572
        %v5092 = vunpack.c.l.b16 %v4573
        %v5093 = vunpack.c.l.b16 %v4574
        %v5094 = vunpack.c.l.b16 %v4575
        %v5095 = vunpack.c.l.b16 %v4576
        %v5096 = vunpack.c.l.b16 %v4577
        %v5097 = vunpack.c.l.b16 %v4578
        %v5098 = vunpack.c.l.b16 %v4579
        %v5099 = vunpack.c.l.b16 %v4580
        %v5100 = vunpack.c.l.b16 %v4581
        %v5101 = vunpack.c.l.b16 %v4582
        %v5102 = vunpack.c.l.b16 %v4583
        %v5103 = vunpack.c.l.b16 %v4584
        %v5104 = vunpack.c.l.b16 %v4585
        %v5105 = vunpack.c.l.b16 %v4586
        %v5106 = vunpack.c.l.b16 %v4587
        %v5107 = vunpack.c.l.b16 %v4588
        %v5108 = vunpack.c.l.b16 %v4589
        %v5109 = vunpack.c.l.b16 %v4590
        %v5110 = vunpack.c.l.b16 %v4591
        %v5111 = vunpack.c.l.b16 %v4592
        %v5112 = vunpack.c.l.b16 %v4593
        %v5113 = vunpack.c.l.b16 %v4594
        %v5114 = vunpack.c.l.b16 %v4595
        %v5115 = vunpack.c.l.b16 %v4596
        %v5116 = vunpack.c.l.b16 %v4597
        %v5117 = vunpack.c.l.b16 %v4598
        %v5118 = vunpack.c.l.b16 %v4599
        %v5119 = vunpack.c.l.b16 %v4600
        %v5120 = vunpack.c.l.b16 %v4601
        %v5121 = vunpack.c.l.b16 %v4602
        %v5122 = vunpack.c.l.b16 %v4603
        %v5123 = vpack.c.b16 %v4868, %v4867
        %v5124 = vpack.c.b16 %v4870, %v4869
        %v5125 = vpack.c.b16 %v4872, %v4871
        %v5126 = vpack.c.b16 %v4874, %v4873
        %v5127 = vpack.c.b16 %v4876, %v4875
        %v5128 = vpack.c.b16 %v4878, %v4877
        %v5129 = vpack.c.b16 %v4880, %v4879
        %v5130 = vpack.c.b16 %v4882, %v4881
        %v5131 = vpack.c.b16 %v4884, %v4883
        %v5132 = vpack.c.b16 %v4886, %v4885
        %v5133 = vpack.c.b16 %v4888, %v4887
        %v5134 = vpack.c.b16 %v4890, %v4889
        %v5135 = vpack.c.b16 %v4892, %v4891
        %v5136 = vpack.c.b16 %v4894, %v4893
        %v5137 = vpack.c.b16 %v4896, %v4895
        %v5138 = vpack.c.b16 %v4898, %v4897
        %v5139 = vpack.c.b16 %v4900, %v4899
        %v5140 = vpack.c.b16 %v4902, %v4901
        %v5141 = vpack.c.b16 %v4904, %v4903
        %v5142 = vpack.c.b16 %v4906, %v4905
        %v5143 = vpack.c.b16 %v4908, %v4907
        %v5144 = vpack.c.b16 %v4910, %v4909
        %v5145 = vpack.c.b16 %v4912, %v4911
        %v5146 = vpack.c.b16 %v4914, %v4913
        %v5147 = vpack.c.b16 %v4916, %v4915
        %v5148 = vpack.c.b16 %v4918, %v4917
        %v5149 = vpack.c.b16 %v4920, %v4919
        %v5150 = vpack.c.b16 %v4922, %v4921
        %v5151 = vpack.c.b16 %v4924, %v4923
        %v5152 = vpack.c.b16 %v4926, %v4925
        %v5153 = vpack.c.b16 %v4928, %v4927
        %v5154 = vpack.c.b16 %v4930, %v4929
        %v5155 = vpack.c.b16 %v4932, %v4931
        %v5156 = vpack.c.b16 %v4934, %v4933
        %v5157 = vpack.c.b16 %v4936, %v4935
        %v5158 = vpack.c.b16 %v4938, %v4937
        %v5159 = vpack.c.b16 %v4940, %v4939
        %v5160 = vpack.c.b16 %v4942, %v4941
        %v5161 = vpack.c.b16 %v4944, %v4943
        %v5162 = vpack.c.b16 %v4946, %v4945
        %v5163 = vpack.c.b16 %v4948, %v4947
        %v5164 = vpack.c.b16 %v4950, %v4949
        %v5165 = vpack.c.b16 %v4952, %v4951
        %v5166 = vpack.c.b16 %v4954, %v4953
        %v5167 = vpack.c.b16 %v4956, %v4955
        %v5168 = vpack.c.b16 %v4958, %v4957
        %v5169 = vpack.c.b16 %v4960, %v4959
        %v5170 = vpack.c.b16 %v4962, %v4961
        %v5171 = vpack.c.b16 %v4964, %v4963
        %v5172 = vpack.c.b16 %v4966, %v4965
        %v5173 = vpack.c.b16 %v4968, %v4967
        %v5174 = vpack.c.b16 %v4970, %v4969
        %v5175 = vpack.c.b16 %v4972, %v4971
        %v5176 = vpack.c.b16 %v4974, %v4973
        %v5177 = vpack.c.b16 %v4976, %v4975
        %v5178 = vpack.c.b16 %v4978, %v4977
        %v5179 = vpack.c.b16 %v4980, %v4979
        %v5180 = vpack.c.b16 %v4982, %v4981
        %v5181 = vpack.c.b16 %v4984, %v4983
        %v5182 = vpack.c.b16 %v4986, %v4985
        %v5183 = vpack.c.b16 %v4988, %v4987
        %v5184 = vpack.c.b16 %v4990, %v4989
        %v5185 = vpack.c.b16 %v4992, %v4991
        %v5186 = vpack.c.b16 %v4994, %v4993
        %v5187 = vpack.c.b16 %v4996, %v4995
        %v5188 = vpack.c.b16 %v4998, %v4997
        %v5189 = vpack.c.b16 %v5000, %v4999
        %v5190 = vpack.c.b16 %v5002, %v5001
        %v5191 = vpack.c.b16 %v5004, %v5003
        %v5192 = vpack.c.b16 %v5006, %v5005
        %v5193 = vpack.c.b16 %v5008, %v5007
        %v5194 = vpack.c.b16 %v5010, %v5009
        %v5195 = vpack.c.b16 %v5012, %v5011
        %v5196 = vpack.c.b16 %v5014, %v5013
        %v5197 = vpack.c.b16 %v5016, %v5015
        %v5198 = vpack.c.b16 %v5018, %v5017
        %v5199 = vpack.c.b16 %v5020, %v5019
        %v5200 = vpack.c.b16 %v5022, %v5021
        %v5201 = vpack.c.b16 %v5024, %v5023
        %v5202 = vpack.c.b16 %v5026, %v5025
        %v5203 = vpack.c.b16 %v5028, %v5027
        %v5204 = vpack.c.b16 %v5030, %v5029
        %v5205 = vpack.c.b16 %v5032, %v5031
        %v5206 = vpack.c.b16 %v5034, %v5033
        %v5207 = vpack.c.b16 %v5036, %v5035
        %v5208 = vpack.c.b16 %v5038, %v5037
        %v5209 = vpack.c.b16 %v5040, %v5039
        %v5210 = vpack.c.b16 %v5042, %v5041
        %v5211 = vpack.c.b16 %v5044, %v5043
        %v5212 = vpack.c.b16 %v5046, %v5045
        %v5213 = vpack.c.b16 %v5048, %v5047
        %v5214 = vpack.c.b16 %v5050, %v5049
        %v5215 = vpack.c.b16 %v5052, %v5051
        %v5216 = vpack.c.b16 %v5054, %v5053
        %v5217 = vpack.c.b16 %v5056, %v5055
        %v5218 = vpack.c.b16 %v5058, %v5057
        %v5219 = vpack.c.b16 %v5060, %v5059
        %v5220 = vpack.c.b16 %v5062, %v5061
        %v5221 = vpack.c.b16 %v5064, %v5063
        %v5222 = vpack.c.b16 %v5066, %v5065
        %v5223 = vpack.c.b16 %v5068, %v5067
        %v5224 = vpack.c.b16 %v5070, %v5069
        %v5225 = vpack.c.b16 %v5072, %v5071
        %v5226 = vpack.c.b16 %v5074, %v5073
        %v5227 = vpack.c.b16 %v5076, %v5075
        %v5228 = vpack.c.b16 %v5078, %v5077
        %v5229 = vpack.c.b16 %v5080, %v5079
        %v5230 = vpack.c.b16 %v5082, %v5081
        %v5231 = vpack.c.b16 %v5084, %v5083
        %v5232 = vpack.c.b16 %v5086, %v5085
        %v5233 = vpack.c.b16 %v5088, %v5087
        %v5234 = vpack.c.b16 %v5090, %v5089
        %v5235 = vpack.c.b16 %v5092, %v5091
        %v5236 = vpack.c.b16 %v5094, %v5093
        %v5237 = vpack.c.b16 %v5096, %v5095
        %v5238 = vpack.c.b16 %v5098, %v5097
        %v5239 = vpack.c.b16 %v5100, %v5099
        %v5240 = vpack.c.b16 %v5102, %v5101
        %v5241 = vpack.c.b16 %v5104, %v5103
        %v5242 = vpack.c.b16 %v5106, %v5105
        %v5243 = vpack.c.b16 %v5108, %v5107
        %v5244 = vpack.c.b16 %v5110, %v5109
        %v5245 = vpack.c.b16 %v5112, %v5111
        %v5246 = vpack.c.b16 %v5114, %v5113
        %v5247 = vpack.c.b16 %v5116, %v5115
        %v5248 = vpack.c.b16 %v5118, %v5117
        %v5249 = vpack.c.b16 %v5120, %v5119
        %v5250 = vpack.c.b16 %v5122, %v5121
        %5379 = vmatprep.subr.bf16.mxu0 0
        %5380 = vmatpush1.bf16.msra.mxu0 %v5123
        %5381 = vmatprep.subr.bf16.mxu0 0
        %5382 = vmatpush1.bf16.msra.mxu0 %v5124
        %5383 = vmatprep.subr.bf16.mxu0 0
        %5384 = vmatpush1.bf16.msra.mxu0 %v5125
        %5385 = vmatprep.subr.bf16.mxu0 0
        %5386 = vmatpush1.bf16.msra.mxu0 %v5126
        %5387 = vmatprep.subr.bf16.mxu0 0
        %5388 = vmatpush1.bf16.msra.mxu0 %v5127
        %5389 = vmatprep.subr.bf16.mxu0 0
        %5390 = vmatpush1.bf16.msra.mxu0 %v5128
        %5391 = vmatprep.subr.bf16.mxu0 0
        %5392 = vmatpush1.bf16.msra.mxu0 %v5129
        %5393 = vmatprep.subr.bf16.mxu0 0
        %5394 = vmatpush1.bf16.msra.mxu0 %v5130
        %5395 = vmatprep.subr.bf16.mxu0 0
        %5396 = vmatpush1.bf16.msra.mxu0 %v5131
        %5397 = vmatprep.subr.bf16.mxu0 0
        %5398 = vmatpush1.bf16.msra.mxu0 %v5132
        %5399 = vmatprep.subr.bf16.mxu0 0
        %5400 = vmatpush1.bf16.msra.mxu0 %v5133
        %5401 = vmatprep.subr.bf16.mxu0 0
        %5402 = vmatpush1.bf16.msra.mxu0 %v5134
        %5403 = vmatprep.subr.bf16.mxu0 0
        %5404 = vmatpush1.bf16.msra.mxu0 %v5135
        %5405 = vmatprep.subr.bf16.mxu0 0
        %5406 = vmatpush1.bf16.msra.mxu0 %v5136
        %5407 = vmatprep.subr.bf16.mxu0 0
        %5408 = vmatpush1.bf16.msra.mxu0 %v5137
        %5409 = vmatprep.subr.bf16.mxu0 0
        %5410 = vmatpush1.bf16.msra.mxu0 %v5138
        %5411 = vmatprep.mubr.bf16.mxu0 %v4333
        %5412 = vmatmul.mubr.bf16.gmra.mrb[0].mxu0 %v4332
        %v5413 = vpop.f32.mrb[0].mxu0
        %v5414 = vadd.f32 %v4609, %v5413
        %v5415 = vpop.f32.mrb[0].mxu0
        %v5416 = vpop.f32.mrb[0].mxu0
        %v5417 = vpop.f32.mrb[0].mxu0
        %5418 = vdwg.mxu0
        %5419 = vmatprep.subr.bf16.mxu0 0
        %5420 = vmatpush1.bf16.msra.mxu0 %v5139
        %5421 = vmatprep.subr.bf16.mxu0 0
        %5422 = vmatpush1.bf16.msra.mxu0 %v5140
        %5423 = vmatprep.subr.bf16.mxu0 0
        %5424 = vmatpush1.bf16.msra.mxu0 %v5141
        %5425 = vmatprep.subr.bf16.mxu0 0
        %5426 = vmatpush1.bf16.msra.mxu0 %v5142
        %5427 = vmatprep.subr.bf16.mxu0 0
        %5428 = vmatpush1.bf16.msra.mxu0 %v5143
        %5429 = vmatprep.subr.bf16.mxu0 0
        %5430 = vmatpush1.bf16.msra.mxu0 %v5144
        %5431 = vmatprep.subr.bf16.mxu0 0
        %5432 = vmatpush1.bf16.msra.mxu0 %v5145
        %5433 = vmatprep.subr.bf16.mxu0 0
        %5434 = vmatpush1.bf16.msra.mxu0 %v5146
        %5435 = vmatprep.subr.bf16.mxu0 0
        %5436 = vmatpush1.bf16.msra.mxu0 %v5147
        %5437 = vmatprep.subr.bf16.mxu0 0
        %5438 = vmatpush1.bf16.msra.mxu0 %v5148
        %5439 = vmatprep.subr.bf16.mxu0 0
        %5440 = vmatpush1.bf16.msra.mxu0 %v5149
        %5441 = vmatprep.subr.bf16.mxu0 0
        %5442 = vmatpush1.bf16.msra.mxu0 %v5150
        %5443 = vmatprep.subr.bf16.mxu0 0
        %5444 = vmatpush1.bf16.msra.mxu0 %v5151
        %5445 = vmatprep.subr.bf16.mxu0 0
        %5446 = vmatpush1.bf16.msra.mxu0 %v5152
        %5447 = vmatprep.subr.bf16.mxu0 0
        %5448 = vmatpush1.bf16.msra.mxu0 %v5153
        %5449 = vmatprep.subr.bf16.mxu0 0
        %5450 = vmatpush1.bf16.msra.mxu0 %v5154
        %5451 = vmatprep.mubr.bf16.mxu0 %v4335
        %5452 = vmatmul.mubr.bf16.gmra.mrb[0].mxu0 %v4334
        %v5453 = vpop.f32.mrb[0].mxu0
        %v5454 = vadd.f32 %v5414, %v5453
        %v5455 = vpop.f32.mrb[0].mxu0
        %v5456 = vpop.f32.mrb[0].mxu0
        %v5457 = vpop.f32.mrb[0].mxu0
        %5458 = vdwg.mxu0
        %5459 = vmatprep.subr.bf16.mxu0 0
        %5460 = vmatpush1.bf16.msra.mxu0 %v5155
        %5461 = vmatprep.subr.bf16.mxu0 0
        %5462 = vmatpush1.bf16.msra.mxu0 %v5156
        %5463 = vmatprep.subr.bf16.mxu0 0
        %5464 = vmatpush1.bf16.msra.mxu0 %v5157
        %5465 = vmatprep.subr.bf16.mxu0 0
        %5466 = vmatpush1.bf16.msra.mxu0 %v5158
        %5467 = vmatprep.subr.bf16.mxu0 0
        %5468 = vmatpush1.bf16.msra.mxu0 %v5159
        %5469 = vmatprep.subr.bf16.mxu0 0
        %5470 = vmatpush1.bf16.msra.mxu0 %v5160
        %5471 = vmatprep.subr.bf16.mxu0 0
        %5472 = vmatpush1.bf16.msra.mxu0 %v5161
        %5473 = vmatprep.subr.bf16.mxu0 0
        %5474 = vmatpush1.bf16.msra.mxu0 %v5162
        %5475 = vmatprep.subr.bf16.mxu0 0
        %5476 = vmatpush1.bf16.msra.mxu0 %v5163
        %5477 = vmatprep.subr.bf16.mxu0 0
        %5478 = vmatpush1.bf16.msra.mxu0 %v5164
        %5479 = vmatprep.subr.bf16.mxu0 0
        %5480 = vmatpush1.bf16.msra.mxu0 %v5165
        %5481 = vmatprep.subr.bf16.mxu0 0
        %5482 = vmatpush1.bf16.msra.mxu0 %v5166
        %5483 = vmatprep.subr.bf16.mxu0 0
        %5484 = vmatpush1.bf16.msra.mxu0 %v5167
        %5485 = vmatprep.subr.bf16.mxu0 0
        %5486 = vmatpush1.bf16.msra.mxu0 %v5168
        %5487 = vmatprep.subr.bf16.mxu0 0
        %5488 = vmatpush1.bf16.msra.mxu0 %v5169
        %5489 = vmatprep.subr.bf16.mxu0 0
        %5490 = vmatpush1.bf16.msra.mxu0 %v5170
        %5491 = vmatprep.mubr.bf16.mxu0 %v4337
        %5492 = vmatmul.mubr.bf16.gmra.mrb[0].mxu0 %v4336
        %v5493 = vpop.f32.mrb[0].mxu0
        %v5494 = vadd.f32 %v5454, %v5493
        %v5495 = vpop.f32.mrb[0].mxu0
        %v5496 = vpop.f32.mrb[0].mxu0
        %v5497 = vpop.f32.mrb[0].mxu0
        %5498 = vdwg.mxu0
        %5499 = vmatprep.subr.bf16.mxu0 0
        %5500 = vmatpush1.bf16.msra.mxu0 %v5171
        %5501 = vmatprep.subr.bf16.mxu0 0
        %5502 = vmatpush1.bf16.msra.mxu0 %v5172
        %5503 = vmatprep.subr.bf16.mxu0 0
        %5504 = vmatpush1.bf16.msra.mxu0 %v5173
        %5505 = vmatprep.subr.bf16.mxu0 0
        %5506 = vmatpush1.bf16.msra.mxu0 %v5174
        %5507 = vmatprep.subr.bf16.mxu0 0
        %5508 = vmatpush1.bf16.msra.mxu0 %v5175
        %5509 = vmatprep.subr.bf16.mxu0 0
        %5510 = vmatpush1.bf16.msra.mxu0 %v5176
        %5511 = vmatprep.subr.bf16.mxu0 0
        %5512 = vmatpush1.bf16.msra.mxu0 %v5177
        %5513 = vmatprep.subr.bf16.mxu0 0
        %5514 = vmatpush1.bf16.msra.mxu0 %v5178
        %5515 = vmatprep.subr.bf16.mxu0 0
        %5516 = vmatpush1.bf16.msra.mxu0 %v5179
        %5517 = vmatprep.subr.bf16.mxu0 0
        %5518 = vmatpush1.bf16.msra.mxu0 %v5180
        %5519 = vmatprep.subr.bf16.mxu0 0
        %5520 = vmatpush1.bf16.msra.mxu0 %v5181
        %5521 = vmatprep.subr.bf16.mxu0 0
        %5522 = vmatpush1.bf16.msra.mxu0 %v5182
        %5523 = vmatprep.subr.bf16.mxu0 0
        %5524 = vmatpush1.bf16.msra.mxu0 %v5183
        %5525 = vmatprep.subr.bf16.mxu0 0
        %5526 = vmatpush1.bf16.msra.mxu0 %v5184
        %5527 = vmatprep.subr.bf16.mxu0 0
        %5528 = vmatpush1.bf16.msra.mxu0 %v5185
        %5529 = vmatprep.subr.bf16.mxu0 0
        %5530 = vmatpush1.bf16.msra.mxu0 %v5186
        %5531 = vmatprep.mubr.bf16.mxu0 %v4339
        %5532 = vmatmul.mubr.bf16.gmra.mrb[0].mxu0 %v4338
        %v5533 = vpop.f32.mrb[0].mxu0
        %v5534 = vadd.f32 %v5494, %v5533
        %v5535 = vpop.f32.mrb[0].mxu0
        %v5536 = vpop.f32.mrb[0].mxu0
        %v5537 = vpop.f32.mrb[0].mxu0
        %5538 = vdwg.mxu0
        %5539 = vmatprep.subr.bf16.mxu0 0
        %5540 = vmatpush1.bf16.msra.mxu0 %v5187
        %5541 = vmatprep.subr.bf16.mxu0 0
        %5542 = vmatpush1.bf16.msra.mxu0 %v5188
        %5543 = vmatprep.subr.bf16.mxu0 0
        %5544 = vmatpush1.bf16.msra.mxu0 %v5189
        %5545 = vmatprep.subr.bf16.mxu0 0
        %5546 = vmatpush1.bf16.msra.mxu0 %v5190
        %5547 = vmatprep.subr.bf16.mxu0 0
        %5548 = vmatpush1.bf16.msra.mxu0 %v5191
        %5549 = vmatprep.subr.bf16.mxu0 0
        %5550 = vmatpush1.bf16.msra.mxu0 %v5192
        %5551 = vmatprep.subr.bf16.mxu0 0
        %5552 = vmatpush1.bf16.msra.mxu0 %v5193
        %5553 = vmatprep.subr.bf16.mxu0 0
        %5554 = vmatpush1.bf16.msra.mxu0 %v5194
        %5555 = vmatprep.subr.bf16.mxu0 0
        %5556 = vmatpush1.bf16.msra.mxu0 %v5195
        %5557 = vmatprep.subr.bf16.mxu0 0
        %5558 = vmatpush1.bf16.msra.mxu0 %v5196
        %5559 = vmatprep.subr.bf16.mxu0 0
        %5560 = vmatpush1.bf16.msra.mxu0 %v5197
        %5561 = vmatprep.subr.bf16.mxu0 0
        %5562 = vmatpush1.bf16.msra.mxu0 %v5198
        %5563 = vmatprep.subr.bf16.mxu0 0
        %5564 = vmatpush1.bf16.msra.mxu0 %v5199
        %5565 = vmatprep.subr.bf16.mxu0 0
        %5566 = vmatpush1.bf16.msra.mxu0 %v5200
        %5567 = vmatprep.subr.bf16.mxu0 0
        %5568 = vmatpush1.bf16.msra.mxu0 %v5201
        %5569 = vmatprep.subr.bf16.mxu0 0
        %5570 = vmatpush1.bf16.msra.mxu0 %v5202
        %5571 = vmatprep.mubr.bf16.mxu0 %v4341
        %5572 = vmatmul.mubr.bf16.gmra.mrb[0].mxu0 %v4340
        %v5573 = vpop.f32.mrb[0].mxu0
        %v5574 = vadd.f32 %v5534, %v5573
        %v5575 = vpop.f32.mrb[0].mxu0
        %v5576 = vpop.f32.mrb[0].mxu0
        %v5577 = vpop.f32.mrb[0].mxu0
        %5578 = vdwg.mxu0
        %5579 = vmatprep.subr.bf16.mxu0 0
        %5580 = vmatpush1.bf16.msra.mxu0 %v5203
        %5581 = vmatprep.subr.bf16.mxu0 0
        %5582 = vmatpush1.bf16.msra.mxu0 %v5204
        %5583 = vmatprep.subr.bf16.mxu0 0
        %5584 = vmatpush1.bf16.msra.mxu0 %v5205
        %5585 = vmatprep.subr.bf16.mxu0 0
        %5586 = vmatpush1.bf16.msra.mxu0 %v5206
        %5587 = vmatprep.subr.bf16.mxu0 0
        %5588 = vmatpush1.bf16.msra.mxu0 %v5207
        %5589 = vmatprep.subr.bf16.mxu0 0
        %5590 = vmatpush1.bf16.msra.mxu0 %v5208
        %5591 = vmatprep.subr.bf16.mxu0 0
        %5592 = vmatpush1.bf16.msra.mxu0 %v5209
        %5593 = vmatprep.subr.bf16.mxu0 0
        %5594 = vmatpush1.bf16.msra.mxu0 %v5210
        %5595 = vmatprep.subr.bf16.mxu0 0
        %5596 = vmatpush1.bf16.msra.mxu0 %v5211
        %5597 = vmatprep.subr.bf16.mxu0 0
        %5598 = vmatpush1.bf16.msra.mxu0 %v5212
        %5599 = vmatprep.subr.bf16.mxu0 0
        %5600 = vmatpush1.bf16.msra.mxu0 %v5213
        %5601 = vmatprep.subr.bf16.mxu0 0
        %5602 = vmatpush1.bf16.msra.mxu0 %v5214
        %5603 = vmatprep.subr.bf16.mxu0 0
        %5604 = vmatpush1.bf16.msra.mxu0 %v5215
        %5605 = vmatprep.subr.bf16.mxu0 0
        %5606 = vmatpush1.bf16.msra.mxu0 %v5216
        %5607 = vmatprep.subr.bf16.mxu0 0
        %5608 = vmatpush1.bf16.msra.mxu0 %v5217
        %5609 = vmatprep.subr.bf16.mxu0 0
        %5610 = vmatpush1.bf16.msra.mxu0 %v5218
        %5611 = vmatprep.mubr.bf16.mxu0 %v4343
        %5612 = vmatmul.mubr.bf16.gmra.mrb[0].mxu0 %v4342
        %v5613 = vpop.f32.mrb[0].mxu0
        %v5614 = vadd.f32 %v5574, %v5613
        %v5615 = vpop.f32.mrb[0].mxu0
        %v5616 = vpop.f32.mrb[0].mxu0
        %v5617 = vpop.f32.mrb[0].mxu0
        %5618 = vdwg.mxu0
        %5619 = vmatprep.subr.bf16.mxu0 0
        %5620 = vmatpush1.bf16.msra.mxu0 %v5219
        %5621 = vmatprep.subr.bf16.mxu0 0
        %5622 = vmatpush1.bf16.msra.mxu0 %v5220
        %5623 = vmatprep.subr.bf16.mxu0 0
        %5624 = vmatpush1.bf16.msra.mxu0 %v5221
        %5625 = vmatprep.subr.bf16.mxu0 0
        %5626 = vmatpush1.bf16.msra.mxu0 %v5222
        %5627 = vmatprep.subr.bf16.mxu0 0
        %5628 = vmatpush1.bf16.msra.mxu0 %v5223
        %5629 = vmatprep.subr.bf16.mxu0 0
        %5630 = vmatpush1.bf16.msra.mxu0 %v5224
        %5631 = vmatprep.subr.bf16.mxu0 0
        %5632 = vmatpush1.bf16.msra.mxu0 %v5225
        %5633 = vmatprep.subr.bf16.mxu0 0
        %5634 = vmatpush1.bf16.msra.mxu0 %v5226
        %5635 = vmatprep.subr.bf16.mxu0 0
        %5636 = vmatpush1.bf16.msra.mxu0 %v5227
        %5637 = vmatprep.subr.bf16.mxu0 0
        %5638 = vmatpush1.bf16.msra.mxu0 %v5228
        %5639 = vmatprep.subr.bf16.mxu0 0
        %5640 = vmatpush1.bf16.msra.mxu0 %v5229
        %5641 = vmatprep.subr.bf16.mxu0 0
        %5642 = vmatpush1.bf16.msra.mxu0 %v5230
        %5643 = vmatprep.subr.bf16.mxu0 0
        %5644 = vmatpush1.bf16.msra.mxu0 %v5231
        %5645 = vmatprep.subr.bf16.mxu0 0
        %5646 = vmatpush1.bf16.msra.mxu0 %v5232
        %5647 = vmatprep.subr.bf16.mxu0 0
        %5648 = vmatpush1.bf16.msra.mxu0 %v5233
        %5649 = vmatprep.subr.bf16.mxu0 0
        %5650 = vmatpush1.bf16.msra.mxu0 %v5234
        %5651 = vmatprep.mubr.bf16.mxu0 %v4345
        %5652 = vmatmul.mubr.bf16.gmra.mrb[0].mxu0 %v4344
        %v5653 = vpop.f32.mrb[0].mxu0
        %v5654 = vadd.f32 %v5614, %v5653
        %v5655 = vpop.f32.mrb[0].mxu0
        %v5656 = vpop.f32.mrb[0].mxu0
        %v5657 = vpop.f32.mrb[0].mxu0
        %5658 = vdwg.mxu0
        %5659 = vmatprep.subr.bf16.mxu0 0
        %5660 = vmatpush1.bf16.msra.mxu0 %v5235
        %5661 = vmatprep.subr.bf16.mxu0 0
        %5662 = vmatpush1.bf16.msra.mxu0 %v5236
        %5663 = vmatprep.subr.bf16.mxu0 0
        %5664 = vmatpush1.bf16.msra.mxu0 %v5237
        %5665 = vmatprep.subr.bf16.mxu0 0
        %5666 = vmatpush1.bf16.msra.mxu0 %v5238
        %5667 = vmatprep.subr.bf16.mxu0 0
        %5668 = vmatpush1.bf16.msra.mxu0 %v5239
        %5669 = vmatprep.subr.bf16.mxu0 0
        %5670 = vmatpush1.bf16.msra.mxu0 %v5240
        %5671 = vmatprep.subr.bf16.mxu0 0
        %5672 = vmatpush1.bf16.msra.mxu0 %v5241
        %5673 = vmatprep.subr.bf16.mxu0 0
        %5674 = vmatpush1.bf16.msra.mxu0 %v5242
        %5675 = vmatprep.subr.bf16.mxu0 0
        %5676 = vmatpush1.bf16.msra.mxu0 %v5243
        %5677 = vmatprep.subr.bf16.mxu0 0
        %5678 = vmatpush1.bf16.msra.mxu0 %v5244
        %5679 = vmatprep.subr.bf16.mxu0 0
        %5680 = vmatpush1.bf16.msra.mxu0 %v5245
        %5681 = vmatprep.subr.bf16.mxu0 0
        %5682 = vmatpush1.bf16.msra.mxu0 %v5246
        %5683 = vmatprep.subr.bf16.mxu0 0
        %5684 = vmatpush1.bf16.msra.mxu0 %v5247
        %5685 = vmatprep.subr.bf16.mxu0 0
        %5686 = vmatpush1.bf16.msra.mxu0 %v5248
        %5687 = vmatprep.subr.bf16.mxu0 0
        %5688 = vmatpush1.bf16.msra.mxu0 %v5249
        %5689 = vmatprep.subr.bf16.mxu0 0
        %5690 = vmatpush1.bf16.msra.mxu0 %v5250
        %5691 = vmatprep.mubr.bf16.mxu0 %v4347
        %5692 = vmatmul.mubr.bf16.gmra.mrb[0].mxu0 %v4346
        %v5693 = vpop.f32.mrb[0].mxu0
        %v5694 = vadd.f32 %v5654, %v5693
        %v5695 = vpop.f32.mrb[0].mxu0
        %v5696 = vpop.f32.mrb[0].mxu0
        %v5697 = vpop.f32.mrb[0].mxu0
        %5698 = vdwg.mxu0
        %v5699 = vadd.f32 %v3515, %v5694
        %v5700 = vld [vmem:[%s709] sm:$0x1]
        %v5701 = vld [vmem:[%s712] sm:$0x1]
        %v5702 = vsel %vm1005, %v5699, 0.0
        %5703 = vadd.xlane.f32.xlu0 %v5702
        %v5704 = vpop.xlane.xlu0 %5703
        %v5705 = vmul.f32 %v5704, %v3491
        %v5706 = vsub.f32 %v5699, %v5705
        %v5707 = vmul.f32 %v5706, %v5706
        %v5708 = vsel %vm1005, %v5707, 0.0
        %5709 = vadd.xlane.f32.xlu0 %v5708
        %v5710 = vpop.xlane.xlu0 %5709
        %v5711 = vmul.f32 %v5710, %v3491
        %v5712 = vadd.f32 %v5711, 1e-05
        %v5713 = vrsqrt.pop %v5712
        %v5714 = vmul.f32 %v5706, %v5713
        %v5716 = vlaneseq
        %v5717 = vshrl.u32 %v5716, 7
        %v5718 = vsub.s32 0, %v5717
        %v5719 = vrot.slane %v5700, %v5718
        %v5721 = vmul.f32 %v5714, %v5719
        %v5723 = vlaneseq
        %v5724 = vshrl.u32 %v5723, 7
        %v5725 = vsub.s32 0, %v5724
        %v5726 = vrot.slane %v5701, %v5725
        %v5728 = vadd.f32 %v5721, %v5726
        %5729 = vst.msk [vmem:[#allocation2] sm:$0xff] %vm1005, %v5728
        // Predicated region
        $region93: #{encoder_device.1} parent=87 // pred_check
          %p5730 = pneg %p459
        $region94: #{encoder_device.1} parent=87 // pred_check_branch
          %5732 = sbr.rel (%p5730) target = $region96
        $region95: #{encoder_device.1} parent=87 // pred_region
          %s5734 = ssub.s32 128, 128
          %5735 = vsyncadd [#allocation3], %s5734
          %s5737 = sshll.u32 [#allocation2], 4
          %s5738 = int_to_ptr.vmem [resolvable:$true] %s5737
          %5740 = dma.vmem_to_hbm [thread:$0]  %s5738, 128, %s17, [#allocation3]
        $region96: #{encoder_device.1} parent=87 // pred_fallthru
          _
        // Predicated region
        $region97: #{encoder_device.1} parent=87 // pred_check
          %p5741 = pneg %p459
        $region98: #{encoder_device.1} parent=87 // pred_check_branch
          %5743 = sbr.rel (%p5741) target = $region100
        $region99: #{encoder_device.1} parent=87 // pred_region
          %5744 = dma.done [#allocation3], 128
        $region100: #{encoder_device.1} parent=87 // pred_fallthru
          _
      $region88: #{encoder_device.1} parent=5 // pred_fallthru
        _
      %p5745 = scmp.le.s32.totalorder 2, %s24
      // Predicated region
      $region101: #{encoder_device.1} parent=5 // pred_check
        %p5746 = pneg %p5745
      $region102: #{encoder_device.1} parent=5 // pred_check_branch
        %5748 = sbr.rel (%p5746) target = $region104
      $region103: #{encoder_device.1} parent=5 // pred_region
        %s5749 = ssub.s32 %s24, 2
      $region104: #{encoder_device.1} parent=5 // pred_fallthru
        _
    $region6: #{encoder_device.1} parent=1 // loop_footer
      %s28 = sadd.s32 1, %s24
    $region7: #{encoder_device.1} parent=1 // loop_footer_branch
      %23 = sbr.rel target = $region3
    $region8: #{encoder_device.1} parent=1 // loop_exit
      _
    %5750 = vsyncpa [#allocation3], 1
    %s5751 = scalar_lea.sflag [#allocation3], 1
    %5752 = vsyncpa %s5751, 1

</llo_original>
